<compile_context>
chip_gen: v7x
topology: tpu7x:2x2x1
jax: 0.10.0
libtpu: 0.0.40
codegen_flags: <defaults>
</compile_context>

<pallas_src>
import functools

import jax
import jax.numpy as jnp
from jax.experimental import pallas as pl
from jax.experimental.pallas import tpu as pltpu


# ----------------------------------------------------------------------------
# Small helpers: rounding, device introspection, compiler params, weight specs.
# ----------------------------------------------------------------------------
def _round_up(x, m):
    return ((x + m - 1) // m) * m


def _device_vmem_bytes():
    """Per-core VMEM capacity; conservative 64 MiB fallback (v7x-safe)."""
    try:
        return int(pltpu.get_tpu_info().vmem_capacity_bytes)
    except Exception:
        return 64 * 1024 * 1024


def _compiler_params(dimension_semantics, vmem_limit_bytes):
    cp_cls = getattr(pltpu, "CompilerParams", None)
    if cp_cls is None:  # very old JAX naming
        cp_cls = getattr(pltpu, "TPUCompilerParams")
    return cp_cls(dimension_semantics=dimension_semantics,
                  vmem_limit_bytes=int(vmem_limit_bytes))


def _probe_kernel(x_ref, o_ref):
    o_ref[...] = x_ref[...] + 1.0


_SINGLE_BUFFER_CACHE = None


def _single_buffer_ok():
    """Probe (once, outside jit) whether pipeline_mode=pl.Buffered(1) is supported."""
    global _SINGLE_BUFFER_CACHE
    if _SINGLE_BUFFER_CACHE is not None:
        return _SINGLE_BUFFER_CACHE
    ok = False
    if hasattr(pl, "Buffered"):
        try:
            w_spec = pl.BlockSpec((8, 128), lambda i: (0, 0),
                                  pipeline_mode=pl.Buffered(1))
            out = pl.pallas_call(
                _probe_kernel,
                out_shape=jax.ShapeDtypeStruct((16, 128), jnp.float32),
                grid_spec=pltpu.PrefetchScalarGridSpec(
                    num_scalar_prefetch=0,
                    grid=(2,),
                    in_specs=[w_spec],
                    out_specs=pl.BlockSpec((8, 128), lambda i: (i, 0)),
                ),
            )(jnp.zeros((8, 128), jnp.float32))
            jax.block_until_ready(out)
            ok = True
        except Exception:
            ok = False
    _SINGLE_BUFFER_CACHE = ok
    return ok


def _weight_spec(shape):
    """Grid-invariant operand: constant block index, single-buffered when possible."""
    index_map = lambda *_: (0,) * len(shape)
    if _single_buffer_ok():
        return pl.BlockSpec(shape, index_map, pipeline_mode=pl.Buffered(1))
    return pl.BlockSpec(shape, index_map)


def _pick_time_block(seq_len, cap):
    """Largest divisor of seq_len that is <= cap (keeps the unrolled loop bounded)."""
    for tb in range(min(seq_len, cap), 0, -1):
        if seq_len % tb == 0:
            return tb
    return 1


# ----------------------------------------------------------------------------
# Pallas kernel: fused 2-layer LSTM over one time block.
#   grid = (S // TB,), "arbitrary" (serial recurrence); h/c persist in VMEM scratch.
#   The input projections x @ W_ih are hoisted out of the serial loop as one big
#   bf16 MXU matmul per block; only h @ W_hh + VPU/EUP gate math stay per-timestep.
#   Gate column order is [i, f, o, g] (re-ordered at weight-prep time).
# ----------------------------------------------------------------------------
def _lstm2_kernel(x_ref, wih1_ref, whh1_ref, b1_ref,
                  wih2_ref, whh2_ref, b2_ref,
                  h0_ref, c0_ref,
                  y_ref, hT_ref, cT_ref,
                  h1_sc, c1_sc, h2_sc, c2_sc, y1_sc,
                  *, hidden, time_block, batch):
    H = hidden
    B = batch
    t_blk = pl.program_id(0)

    @pl.when(t_blk == 0)
    def _():
        h1_sc[...] = h0_ref[0]
        c1_sc[...] = c0_ref[0]
        h2_sc[...] = h0_ref[1]
        c2_sc[...] = c0_ref[1]

    def cell(gates, c_prev):
        # All gate math in f32 (v5e has no bf16 VPU/EUP).
        sig = jax.nn.sigmoid(gates[:, :3 * H])     # [i | f | o] — one contiguous slab
        i_g = sig[:, 0 * H:1 * H]
        f_g = sig[:, 1 * H:2 * H]
        o_g = sig[:, 2 * H:3 * H]
        g_g = jnp.tanh(gates[:, 3 * H:])
        c_new = f_g * c_prev + i_g * g_g
        h_new = o_g * jnp.tanh(c_new)
        return h_new, c_new

    # ---- layer 1: hoisted input projection (one big bf16 MXU matmul) --------
    xg1 = (jnp.dot(x_ref[...].astype(jnp.bfloat16), wih1_ref[...],
                   preferred_element_type=jnp.float32) + b1_ref[...])

    h1 = h1_sc[...]
    c1 = c1_sc[...]
    whh1 = whh1_ref[...]
    for t in range(time_block):                    # bounded unroll (TB <= 16)
        g = xg1[t * B:(t + 1) * B, :] + jnp.dot(
            h1.astype(jnp.bfloat16), whh1, preferred_element_type=jnp.float32)
        h1, c1 = cell(g, c1)
        y1_sc[t * B:(t + 1) * B, :] = h1           # layer-1 output stays in VMEM
    h1_sc[...] = h1
    c1_sc[...] = c1

    # ---- layer 2 -------------------------------------------------------------
    # TODO(synk): inter-layer dropout is identity (eval-mode semantics only).
    xg2 = (jnp.dot(y1_sc[...].astype(jnp.bfloat16), wih2_ref[...],
                   preferred_element_type=jnp.float32) + b2_ref[...])

    h2 = h2_sc[...]
    c2 = c2_sc[...]
    whh2 = whh2_ref[...]
    for t in range(time_block):
        g = xg2[t * B:(t + 1) * B, :] + jnp.dot(
            h2.astype(jnp.bfloat16), whh2, preferred_element_type=jnp.float32)
        h2, c2 = cell(g, c2)
        y_ref[t * B:(t + 1) * B, :] = h2
    h2_sc[...] = h2
    c2_sc[...] = c2

    @pl.when(t_blk == pl.num_programs(0) - 1)
    def _():
        hT_ref[0] = h1
        hT_ref[1] = h2
        cT_ref[0] = c1
        cT_ref[1] = c2


def lstm2_forward(emb2d, lstm_params, h0, c0, *, batch_pad, time_block, vmem_limit):
    """emb2d: (S*B_pad, E_pad) f32 (time-major rows); h0/c0: (2, B_pad, H_pad) f32.
    Returns y2d (S*B_pad, H_pad), hT (2, B_pad, H_pad), cT (2, B_pad, H_pad)."""
    SB, E_pad = emb2d.shape
    B_pad = batch_pad
    TB = time_block
    S = SB // B_pad
    rows = TB * B_pad
    H_pad = lstm_params[0]["w_hh_t"].shape[0]
    p1, p2 = lstm_params

    kernel = functools.partial(_lstm2_kernel, hidden=H_pad, time_block=TB,
                               batch=B_pad)
    y2d, hT, cT = pl.pallas_call(
        kernel,
        out_shape=(jax.ShapeDtypeStruct((SB, H_pad), jnp.float32),
                   jax.ShapeDtypeStruct((2, B_pad, H_pad), jnp.float32),
                   jax.ShapeDtypeStruct((2, B_pad, H_pad), jnp.float32)),
        grid_spec=pltpu.PrefetchScalarGridSpec(
            num_scalar_prefetch=0,
            grid=(S // TB,),
            in_specs=[
                pl.BlockSpec((rows, E_pad), lambda t: (t, 0)),
                _weight_spec((E_pad, 4 * H_pad)),        # single-buffered constants
                _weight_spec((H_pad, 4 * H_pad)),
                _weight_spec((1, 4 * H_pad)),
                _weight_spec((H_pad, 4 * H_pad)),
                _weight_spec((H_pad, 4 * H_pad)),
                _weight_spec((1, 4 * H_pad)),
                _weight_spec((2, B_pad, H_pad)),
                _weight_spec((2, B_pad, H_pad)),
            ],
            out_specs=(
                pl.BlockSpec((rows, H_pad), lambda t: (t, 0)),
                pl.BlockSpec((2, B_pad, H_pad), lambda t: (0, 0, 0)),
                pl.BlockSpec((2, B_pad, H_pad), lambda t: (0, 0, 0)),
            ),
            scratch_shapes=[pltpu.VMEM((B_pad, H_pad), jnp.float32)] * 4
                          + [pltpu.VMEM((rows, H_pad), jnp.float32)],
        ),
        compiler_params=_compiler_params(("arbitrary",), vmem_limit),
    )(emb2d, p1["w_ih_t"], p1["w_hh_t"], p1["b"],
      p2["w_ih_t"], p2["w_hh_t"], p2["b"], h0, c0)
    return y2d, hT, cT


# ----------------------------------------------------------------------------
# Pallas kernels: fused Linear + temperature + LogSoftmax.
#   Pass 1: vocab-tiled online logsumexp (only (rows, 1) LSE leaves the kernel).
#   Pass 2: recompute each logits tile and write the normalized log-probs directly
#           (no f32 (rows, V) logits round trip through HBM).
# ----------------------------------------------------------------------------
def _fc_lse_kernel(h_ref, w_ref, b_ref, lse_ref, m_sc, l_sc, *, temperature):
    v = pl.program_id(1)

    @pl.when(v == 0)
    def _():
        m_sc[...] = jnp.full_like(m_sc, -jnp.inf)
        l_sc[...] = jnp.zeros_like(l_sc)

    logits = (jnp.dot(h_ref[...].astype(jnp.bfloat16), w_ref[...],
                      preferred_element_type=jnp.float32) + b_ref[...])
    # Matches the reference module exactly: logSoftmax(fc_output * temperature).
    logits = logits * jnp.float32(temperature)

    m_prev = m_sc[...]
    m_new = jnp.maximum(m_prev, jnp.max(logits, axis=-1, keepdims=True))
    l_sc[...] = (l_sc[...] * jnp.exp(m_prev - m_new)
                 + jnp.sum(jnp.exp(logits - m_new), axis=-1, keepdims=True))
    m_sc[...] = m_new

    @pl.when(v == pl.num_programs(1) - 1)
    def _():
        lse_ref[...] = m_sc[...] + jnp.log(l_sc[...])


def _fc_out_kernel(h_ref, w_ref, b_ref, lse_ref, out_ref, *, temperature):
    logits = (jnp.dot(h_ref[...].astype(jnp.bfloat16), w_ref[...],
                      preferred_element_type=jnp.float32) + b_ref[...])
    out_ref[...] = logits * jnp.float32(temperature) - lse_ref[...]


def fc_logsoftmax(h2d, w_fc_t, b_fc, temperature, *, tile_v, vmem_limit,
                  row_tile_cap=512):
    """h2d: (rows, H_pad) f32; w_fc_t: (H_pad, V_pad) bf16; b_fc: (1, V_pad) f32.
    Returns (rows, V_pad) f32 log-probabilities."""
    rows, H_pad = h2d.shape
    V_pad = w_fc_t.shape[1]
    TV = tile_v

    R = min(row_tile_cap, rows)                 # rows is a multiple of 8
    rows_pad = _round_up(rows, R)
    if rows_pad != rows:
        h2d = jnp.pad(h2d, ((0, rows_pad - rows), (0, 0)))
    grid = (rows_pad // R, V_pad // TV)

    lse = pl.pallas_call(
        functools.partial(_fc_lse_kernel, temperature=temperature),
        out_shape=jax.ShapeDtypeStruct((rows_pad, 1), jnp.float32),
        grid_spec=pltpu.PrefetchScalarGridSpec(
            num_scalar_prefetch=0,
            grid=grid,
            in_specs=[
                pl.BlockSpec((R, H_pad), lambda s, v: (s, 0)),
                pl.BlockSpec((H_pad, TV), lambda s, v: (0, v)),
                pl.BlockSpec((1, TV), lambda s, v: (0, v)),
            ],
            out_specs=pl.BlockSpec((R, 1), lambda s, v: (s, 0)),
            scratch_shapes=[pltpu.VMEM((R, 1), jnp.float32),
                            pltpu.VMEM((R, 1), jnp.float32)],
        ),
        compiler_params=_compiler_params(("parallel", "arbitrary"), vmem_limit),
    )(h2d, w_fc_t, b_fc)

    log_probs = pl.pallas_call(
        functools.partial(_fc_out_kernel, temperature=temperature),
        out_shape=jax.ShapeDtypeStruct((rows_pad, V_pad), jnp.float32),
        grid_spec=pltpu.PrefetchScalarGridSpec(
            num_scalar_prefetch=0,
            grid=grid,
            in_specs=[
                pl.BlockSpec((R, H_pad), lambda s, v: (s, 0)),
                pl.BlockSpec((H_pad, TV), lambda s, v: (0, v)),
                pl.BlockSpec((1, TV), lambda s, v: (0, v)),
                pl.BlockSpec((R, 1), lambda s, v: (s, 0)),
            ],
            out_specs=pl.BlockSpec((R, TV), lambda s, v: (s, v)),
        ),
        compiler_params=_compiler_params(("parallel", "parallel"), vmem_limit),
    )(h2d, w_fc_t, b_fc, lse)

    if rows_pad != rows:
        log_probs = log_probs[:rows]
    return log_probs


# ----------------------------------------------------------------------------
# Parameter construction (PyTorch-like shapes) and one-time kernel-ready prep.
# ----------------------------------------------------------------------------
def init_params(key, vocab, emb, hidden, num_layers=2):
    params = {}
    k_emb, key = jax.random.split(key)
    params["embedding"] = jax.random.normal(k_emb, (vocab, emb), jnp.float32)

    bound = 1.0 / float(hidden) ** 0.5
    layers = []
    for layer in range(num_layers):
        in_dim = emb if layer == 0 else hidden
        k1, k2, k3, k4, key = jax.random.split(key, 5)
        layers.append(dict(
            w_ih=jax.random.uniform(k1, (4 * hidden, in_dim), jnp.float32, -bound, bound),
            w_hh=jax.random.uniform(k2, (4 * hidden, hidden), jnp.float32, -bound, bound),
            b_ih=jax.random.uniform(k3, (4 * hidden,), jnp.float32, -bound, bound),
            b_hh=jax.random.uniform(k4, (4 * hidden,), jnp.float32, -bound, bound),
        ))
    params["lstm"] = layers

    k5, k6, key = jax.random.split(key, 3)
    params["fc_w"] = jax.random.uniform(k5, (vocab, hidden), jnp.float32, -bound, bound)
    params["fc_b"] = jax.random.uniform(k6, (vocab,), jnp.float32, -bound, bound)
    return params


def prepare_params(params, vocab_tile_cap=None):
    """One-time (outside-jit) prep: gate re-ordering to [i,f,o,g], lane/sublane
    padding, pre-transposed bf16 matmul weights, pre-added f32 biases.
    Returns (prepped_arrays, meta) where meta holds static python ints."""
    vmem_cap = _device_vmem_bytes()
    _single_buffer_ok()                       # run the probe outside jit, memoize
    if vocab_tile_cap is None:
        vocab_tile_cap = 4096 if vmem_cap >= 96 * 1024 * 1024 else 2048

    emb_w = params["embedding"]
    V, E = emb_w.shape
    H = params["lstm"][0]["w_hh"].shape[1]
    E_pad = _round_up(E, 128)
    H_pad = _round_up(H, 128)
    TV = min(vocab_tile_cap, _round_up(V, 128))
    V_pad = _round_up(V, TV)

    prepped = {"embedding": jnp.pad(emb_w.astype(jnp.float32),
                                    ((0, 0), (0, E_pad - E)))}

    def prep_layer(p, in_dim, in_pad):
        def reorder_pad(w_t):                 # (in, 4H) -> (in_pad, 4*H_pad), i,f,o,g
            blocks = [w_t[:, 0 * H:1 * H], w_t[:, 1 * H:2 * H],
                      w_t[:, 3 * H:4 * H], w_t[:, 2 * H:3 * H]]
            blocks = [jnp.pad(b, ((0, in_pad - in_dim), (0, H_pad - H)))
                      for b in blocks]
            return jnp.concatenate(blocks, axis=1)
        w_ih_t = reorder_pad(jnp.transpose(p["w_ih"])).astype(jnp.bfloat16)
        w_hh_t = reorder_pad(jnp.transpose(p["w_hh"])).astype(jnp.bfloat16)
        b = p["b_ih"] + p["b_hh"]
        bblocks = [b[0 * H:1 * H], b[1 * H:2 * H], b[3 * H:4 * H], b[2 * H:3 * H]]
        bblocks = [jnp.pad(x, (0, H_pad - H)) for x in bblocks]
        bias = jnp.concatenate(bblocks).reshape(1, 4 * H_pad).astype(jnp.float32)
        return dict(w_ih_t=w_ih_t, w_hh_t=w_hh_t, b=bias)

    layers = params["lstm"]
    prepped["lstm"] = [prep_layer(layers[0], E, E_pad),
                       prep_layer(layers[1], H, H_pad)]

    fc_w_t = jnp.transpose(params["fc_w"])                       # (H, V)
    prepped["fc_w_t"] = jnp.pad(fc_w_t, ((0, H_pad - H),
                                         (0, V_pad - V))).astype(jnp.bfloat16)
    # Padded vocab columns get a huge negative bias so exp() contributions vanish.
    prepped["fc_b"] = jnp.pad(params["fc_b"].astype(jnp.float32), (0, V_pad - V),
                              constant_values=-1e30).reshape(1, V_pad)

    meta = dict(E=E, H=H, V=V, E_pad=E_pad, H_pad=H_pad, V_pad=V_pad, TV=TV,
                vmem_cap=vmem_cap)
    return prepped, meta


# ----------------------------------------------------------------------------
# Forward pass (matches TextGenerationModel.forward, eval-mode dropout).
# ----------------------------------------------------------------------------
def text_generation_forward(prepped, x_idx, h=None, *, meta, temperature=1.0):
    """x_idx: (seq, batch) int32.  Returns (log_probs (S, B, V), (h_n, c_n))."""
    H, H_pad = meta["H"], meta["H_pad"]
    V, V_pad, TV = meta["V"], meta["V_pad"], meta["TV"]
    vmem_cap = meta["vmem_cap"]

    # Generation-aware budgets: leave headroom on v7x (64 MiB), use more on v5e/v6e.
    vmem_limit = int(min(max(vmem_cap - 16 * 1024 * 1024, 32 * 1024 * 1024),
                         96 * 1024 * 1024))
    tb_cap = 8 if vmem_cap <= 64 * 1024 * 1024 else 16
    row_tile_cap = 256 if vmem_cap <= 64 * 1024 * 1024 else 512

    S, B = x_idx.shape
    B_pad = _round_up(max(B, 8), 8)
    x_idx = x_idx.astype(jnp.int32)
    if B_pad != B:
        x_idx = jnp.pad(x_idx, ((0, 0), (0, B_pad - B)))

    # Embedding lookup (plain-JAX glue).
    # TODO(synk): could be fused into the LSTM kernel via scalar-prefetched DMA gather.
    emb = jnp.take(prepped["embedding"], x_idx, axis=0)          # (S, B_pad, E_pad)
    emb2d = emb.reshape(S * B_pad, emb.shape[-1])                # free, row-major

    if h is None:
        h0 = jnp.zeros((2, B_pad, H_pad), jnp.float32)
        c0 = jnp.zeros((2, B_pad, H_pad), jnp.float32)
    else:
        h_in, c_in = h
        h0 = jnp.zeros((2, B_pad, H_pad), jnp.float32).at[:, :B, :H].set(h_in)
        c0 = jnp.zeros((2, B_pad, H_pad), jnp.float32).at[:, :B, :H].set(c_in)

    TB = _pick_time_block(S, tb_cap)
    y2d, hT, cT = lstm2_forward(emb2d, prepped["lstm"], h0, c0,
                                batch_pad=B_pad, time_block=TB,
                                vmem_limit=vmem_limit)

    # TODO(synk): dropout is identity here (eval-mode semantics only).
    log_probs = fc_logsoftmax(y2d, prepped["fc_w_t"], prepped["fc_b"],
                              float(temperature), tile_v=TV,
                              vmem_limit=vmem_limit, row_tile_cap=row_tile_cap)
    log_probs = log_probs.reshape(S, B_pad, V_pad)[:, :B, :V]
    h_n = hT[:, :B, :H]
    c_n = cT[:, :B, :H]
    return log_probs, (h_n, c_n)


# ----------------------------------------------------------------------------
# Pure-JAX f32 reference (PyTorch LSTM semantics, gate order i,f,g,o) for checking.
# ----------------------------------------------------------------------------
def reference_forward(params, x_idx, temperature=1.0):
    emb = params["embedding"][x_idx]                             # (S, B, E)
    B = emb.shape[1]
    H = params["lstm"][0]["w_hh"].shape[1]

    def run_layer(x, p):
        w_ih, w_hh = p["w_ih"], p["w_hh"]
        b = p["b_ih"] + p["b_hh"]

        def step(carry, x_t):
            h_p, c_p = carry
            g = x_t @ w_ih.T + h_p @ w_hh.T + b
            i = jax.nn.sigmoid(g[:, :H])
            f = jax.nn.sigmoid(g[:, H:2 * H])
            gg = jnp.tanh(g[:, 2 * H:3 * H])
            o = jax.nn.sigmoid(g[:, 3 * H:])
            c_n = f * c_p + i * gg
            h_n = o * jnp.tanh(c_n)
            return (h_n, c_n), h_n

        init = (jnp.zeros((B, H), jnp.float32), jnp.zeros((B, H), jnp.float32))
        (hT, cT), ys = jax.lax.scan(step, init, x)
        return ys, hT, cT

    y1, h1, c1 = run_layer(emb, params["lstm"][0])
    y2, h2, c2 = run_layer(y1, params["lstm"][1])
    logits = y2 @ params["fc_w"].T + params["fc_b"]
    lp = jax.nn.log_softmax(logits * temperature, axis=-1)
    return lp, (jnp.stack([h1, h2]), jnp.stack([c1, c2]))


if __name__ == "__main__":
    batch = 2
    seq = 8
    vocab = 32
    emb_dim = 32
    hidden = 32
    num_layers = 2

    key = jax.random.PRNGKey(0)
    k_params, k_x = jax.random.split(key)
    params = init_params(k_params, vocab, emb_dim, hidden, num_layers)
    prepped, meta = prepare_params(params)            # one-time, outside jit
    x = jax.random.randint(k_x, (seq, batch), 0, vocab, dtype=jnp.int32)

    fwd = jax.jit(functools.partial(text_generation_forward, meta=meta,
                                    temperature=1.0))
    log_probs, (h_n, c_n) = fwd(prepped, x)
    jax.block_until_ready((log_probs, h_n, c_n))

    assert log_probs.shape == (seq, batch, vocab)
    assert h_n.shape == (num_layers, batch, hidden)
    assert c_n.shape == (num_layers, batch, hidden)
    # log-softmax rows should exponentiate-sum to ~1 and be finite
    assert jnp.allclose(jnp.sum(jnp.exp(log_probs), axis=-1), 1.0, atol=1e-3)
    assert bool(jnp.all(jnp.isfinite(log_probs)))

    # numerical check against a pure-JAX f32 reference (bf16 weights => loose tol)
    ref_lp, (ref_h, ref_c) = reference_forward(params, x, temperature=1.0)
    assert float(jnp.max(jnp.abs(log_probs - ref_lp))) < 5e-2
    assert float(jnp.max(jnp.abs(h_n - ref_h))) < 5e-2
    assert float(jnp.max(jnp.abs(c_n - ref_c))) < 5e-2

    print("KERNEL_OK")
</pallas_src>

<mosaic_0001>
module attributes {stable_mosaic.version = 11 : i64} {
  func.func @_probe_kernel(%arg0: i32, %arg1: memref<8x128xf32, #tpu.memory_space<vmem>>, %arg2: memref<8x128xf32, #tpu.memory_space<vmem>>) attributes {dimension_semantics = [#tpu.dimension_semantics<arbitrary>], iteration_bounds = array<i64: 2>, scalar_prefetch = 0 : i64, scratch_operands = 0 : i64, tpu.core_type = #tpu.core_type<tc>, window_params = [{pipeline_mode = #tpu.pipeline_mode<synchronous>, transform_indices = @transform_0, window_bounds = array<i64: 8, 128>}, {transform_indices = @transform_1, window_bounds = array<i64: 8, 128>}]} {
    %c0 = arith.constant 0 : index
    %c0_0 = arith.constant 0 : index
    %0 = vector.load %arg1[%c0, %c0_0] : memref<8x128xf32, #tpu.memory_space<vmem>>, vector<8x128xf32>
    %cst = arith.constant 1.000000e+00 : f32
    %1 = vector.broadcast %cst : f32 to vector<8x128xf32>
    %2 = arith.addf %0, %1 : vector<8x128xf32>
    %c0_1 = arith.constant 0 : index
    %c0_2 = arith.constant 0 : index
    %3 = vector.load %arg2[%c0_1, %c0_2] : memref<8x128xf32, #tpu.memory_space<vmem>>, vector<8x128xf32>
    tpu.vector_store %arg2[%c0_1, %c0_2], %2 {strides = array<i32>} : memref<8x128xf32, #tpu.memory_space<vmem>>, vector<8x128xf32>,
    return
  }
  func.func @transform_0(%arg0: i32) -> (i32, i32) {
    %c0_i32 = arith.constant 0 : i32
    %c0_i32_0 = arith.constant 0 : i32
    %c0_i32_1 = arith.constant 0 : i32
    return %c0_i32, %c0_i32_0 : i32, i32
  }
  func.func @transform_1(%arg0: i32) -> (i32, i32) {
    %c0_i32 = arith.constant 0 : i32
    %c0_i32_0 = arith.constant 0 : i32
    return %arg0, %c0_i32 : i32, i32
  }
}

module attributes {stable_mosaic.version = 11 : i64} {
  func.func @_fc_lse_kernel(%arg0: i32, %arg1: i32, %arg2: memref<64x128xf32, #tpu.memory_space<vmem>>, %arg3: memref<128x128xbf16, #tpu.memory_space<vmem>>, %arg4: memref<1x128xf32, #tpu.memory_space<vmem>>, %arg5: memref<64x1xf32, #tpu.memory_space<vmem>>, %arg6: memref<64x1xf32, #tpu.memory_space<vmem>>, %arg7: memref<64x1xf32, #tpu.memory_space<vmem>>) attributes {dimension_semantics = [#tpu.dimension_semantics<parallel>, #tpu.dimension_semantics<arbitrary>], iteration_bounds = array<i64: 1, 1>, scalar_prefetch = 0 : i64, scratch_operands = 2 : i64, tpu.core_type = #tpu.core_type<tc>, window_params = [{transform_indices = @transform_0, window_bounds = array<i64: 64, 128>}, {transform_indices = @transform_1, window_bounds = array<i64: 128, 128>}, {transform_indices = @transform_2, window_bounds = array<i64: 1, 128>}, {transform_indices = @transform_3, window_bounds = array<i64: 64, 1>}]} {
    %c0_i32 = arith.constant 0 : i32
    %0 = arith.cmpi eq, %arg1, %c0_i32 : i32
    %1 = arith.extui %0 : i1 to i32
    %c0_i32_0 = arith.constant 0 : i32
    %2 = arith.cmpi ne, %1, %c0_i32_0 : i32
    scf.if %2 {
      %cst_19 = arith.constant 0xFF800000 : f32
      %31 = vector.broadcast %cst_19 : f32 to vector<64x1xf32>
      %c0_20 = arith.constant 0 : index
      %c0_21 = arith.constant 0 : index
      %32 = vector.load %arg6[%c0_20, %c0_21] : memref<64x1xf32, #tpu.memory_space<vmem>>, vector<64x1xf32>
      tpu.vector_store %arg6[%c0_20, %c0_21], %31 {strides = array<i32>} : memref<64x1xf32, #tpu.memory_space<vmem>>, vector<64x1xf32>,
      %cst_22 = arith.constant 0.000000e+00 : f32
      %33 = vector.broadcast %cst_22 : f32 to vector<64x1xf32>
      %c0_23 = arith.constant 0 : index
      %c0_24 = arith.constant 0 : index
      %34 = vector.load %arg7[%c0_23, %c0_24] : memref<64x1xf32, #tpu.memory_space<vmem>>, vector<64x1xf32>
      tpu.vector_store %arg7[%c0_23, %c0_24], %33 {strides = array<i32>} : memref<64x1xf32, #tpu.memory_space<vmem>>, vector<64x1xf32>,
    } else {
    }
    %c0 = arith.constant 0 : index
    %c0_1 = arith.constant 0 : index
    %3 = vector.load %arg2[%c0, %c0_1] : memref<64x128xf32, #tpu.memory_space<vmem>>, vector<64x128xf32>
    %4 = arith.truncf %3 : vector<64x128xf32> to vector<64x128xbf16>
    %c0_2 = arith.constant 0 : index
    %c0_3 = arith.constant 0 : index
    %5 = vector.load %arg3[%c0_2, %c0_3] : memref<128x128xbf16, #tpu.memory_space<vmem>>, vector<128x128xbf16>
    %cst = arith.constant dense<0.000000e+00> : vector<64x128xf32>
    %6 = tpu.matmul %4, %5, %cst {dimension_numbers = #tpu.dot_dimension_numbers<[1], [0], [0], [1], [0, 0, 1, 1], [], []>} : vector<64x128xbf16>, vector<128x128xbf16>, vector<64x128xf32> -> vector<64x128xf32>
    %c0_4 = arith.constant 0 : index
    %c0_5 = arith.constant 0 : index
    %7 = vector.load %arg4[%c0_4, %c0_5] : memref<1x128xf32, #tpu.memory_space<vmem>>, vector<1x128xf32>
    %8 = vector.broadcast %7 : vector<1x128xf32> to vector<64x128xf32>
    %9 = arith.addf %6, %8 : vector<64x128xf32>
    %cst_6 = arith.constant 1.000000e+00 : f32
    %10 = vector.broadcast %cst_6 : f32 to vector<64x128xf32>
    %11 = arith.mulf %9, %10 : vector<64x128xf32>
    %c0_7 = arith.constant 0 : index
    %c0_8 = arith.constant 0 : index
    %12 = vector.load %arg6[%c0_7, %c0_8] : memref<64x1xf32, #tpu.memory_space<vmem>>, vector<64x1xf32>
    %cst_9 = arith.constant dense<0xFF800000> : vector<64xf32>
    %13 = vector.multi_reduction <maximumf>, %11, %cst_9 [1] : vector<64x128xf32> to vector<64xf32>
    %14 = vector.shape_cast %13 : vector<64xf32> to vector<64x1xf32>
    %15 = arith.maximumf %12, %14 : vector<64x1xf32>
    %c0_10 = arith.constant 0 : index
    %c0_11 = arith.constant 0 : index
    %16 = vector.load %arg7[%c0_10, %c0_11] : memref<64x1xf32, #tpu.memory_space<vmem>>, vector<64x1xf32>
    %17 = arith.subf %12, %15 : vector<64x1xf32>
    %18 = math.exp %17 : vector<64x1xf32>
    %19 = arith.mulf %16, %18 : vector<64x1xf32>
    %20 = vector.broadcast %15 : vector<64x1xf32> to vector<64x128xf32>
    %21 = arith.subf %11, %20 : vector<64x128xf32>
    %22 = math.exp %21 : vector<64x128xf32>
    %cst_12 = arith.constant dense<0.000000e+00> : vector<64xf32>
    %23 = vector.multi_reduction <add>, %22, %cst_12 [1] : vector<64x128xf32> to vector<64xf32>
    %24 = vector.shape_cast %23 : vector<64xf32> to vector<64x1xf32>
    %25 = arith.addf %19, %24 : vector<64x1xf32>
    %c0_13 = arith.constant 0 : index
    %c0_14 = arith.constant 0 : index
    %26 = vector.load %arg7[%c0_13, %c0_14] : memref<64x1xf32, #tpu.memory_space<vmem>>, vector<64x1xf32>
    tpu.vector_store %arg7[%c0_13, %c0_14], %25 {strides = array<i32>} : memref<64x1xf32, #tpu.memory_space<vmem>>, vector<64x1xf32>,
    %c0_15 = arith.constant 0 : index
    %c0_16 = arith.constant 0 : index
    %27 = vector.load %arg6[%c0_15, %c0_16] : memref<64x1xf32, #tpu.memory_space<vmem>>, vector<64x1xf32>
    tpu.vector_store %arg6[%c0_15, %c0_16], %15 {strides = array<i32>} : memref<64x1xf32, #tpu.memory_space<vmem>>, vector<64x1xf32>,
    %c0_i32_17 = arith.constant 0 : i32
    %28 = arith.cmpi eq, %arg1, %c0_i32_17 : i32
    %29 = arith.extui %28 : i1 to i32
    %c0_i32_18 = arith.constant 0 : i32
    %30 = arith.cmpi ne, %29, %c0_i32_18 : i32
    scf.if %30 {
      %c0_19 = arith.constant 0 : index
      %c0_20 = arith.constant 0 : index
      %31 = vector.load %arg6[%c0_19, %c0_20] : memref<64x1xf32, #tpu.memory_space<vmem>>, vector<64x1xf32>
      %c0_21 = arith.constant 0 : index
      %c0_22 = arith.constant 0 : index
      %32 = vector.load %arg7[%c0_21, %c0_22] : memref<64x1xf32, #tpu.memory_space<vmem>>, vector<64x1xf32>
      %33 = math.log %32 : vector<64x1xf32>
      %34 = arith.addf %31, %33 : vector<64x1xf32>
      %c0_23 = arith.constant 0 : index
      %c0_24 = arith.constant 0 : index
      %35 = vector.load %arg5[%c0_23, %c0_24] : memref<64x1xf32, #tpu.memory_space<vmem>>, vector<64x1xf32>
      tpu.vector_store %arg5[%c0_23, %c0_24], %34 {strides = array<i32>} : memref<64x1xf32, #tpu.memory_space<vmem>>, vector<64x1xf32>,
    } else {
    }
    return
  }
  func.func @transform_0(%arg0: i32, %arg1: i32) -> (i32, i32) {
    %c0_i32 = arith.constant 0 : i32
    %c0_i32_0 = arith.constant 0 : i32
    return %arg0, %c0_i32 : i32, i32
  }
  func.func @transform_1(%arg0: i32, %arg1: i32) -> (i32, i32) {
    %c0_i32 = arith.constant 0 : i32
    %c0_i32_0 = arith.constant 0 : i32
    return %c0_i32, %arg1 : i32, i32
  }
  func.func @transform_2(%arg0: i32, %arg1: i32) -> (i32, i32) {
    %c0_i32 = arith.constant 0 : i32
    %c0_i32_0 = arith.constant 0 : i32
    return %c0_i32, %arg1 : i32, i32
  }
  func.func @transform_3(%arg0: i32, %arg1: i32) -> (i32, i32) {
    %c0_i32 = arith.constant 0 : i32
    %c0_i32_0 = arith.constant 0 : i32
    return %arg0, %c0_i32 : i32, i32
  }
}

module attributes {stable_mosaic.version = 11 : i64} {
  func.func @_lstm2_kernel(%arg0: i32, %arg1: memref<64x128xf32, #tpu.memory_space<vmem>>, %arg2: memref<128x512xbf16, #tpu.memory_space<vmem>>, %arg3: memref<128x512xbf16, #tpu.memory_space<vmem>>, %arg4: memref<1x512xf32, #tpu.memory_space<vmem>>, %arg5: memref<128x512xbf16, #tpu.memory_space<vmem>>, %arg6: memref<128x512xbf16, #tpu.memory_space<vmem>>, %arg7: memref<1x512xf32, #tpu.memory_space<vmem>>, %arg8: memref<2x8x128xf32, #tpu.memory_space<vmem>>, %arg9: memref<2x8x128xf32, #tpu.memory_space<vmem>>, %arg10: memref<64x128xf32, #tpu.memory_space<vmem>>, %arg11: memref<2x8x128xf32, #tpu.memory_space<vmem>>, %arg12: memref<2x8x128xf32, #tpu.memory_space<vmem>>, %arg13: memref<8x128xf32, #tpu.memory_space<vmem>>, %arg14: memref<8x128xf32, #tpu.memory_space<vmem>>, %arg15: memref<8x128xf32, #tpu.memory_space<vmem>>, %arg16: memref<8x128xf32, #tpu.memory_space<vmem>>, %arg17: memref<64x128xf32, #tpu.memory_space<vmem>>) attributes {dimension_semantics = [#tpu.dimension_semantics<arbitrary>], iteration_bounds = array<i64: 1>, scalar_prefetch = 0 : i64, scratch_operands = 5 : i64, tpu.core_type = #tpu.core_type<tc>, window_params = [{transform_indices = @transform_0, window_bounds = array<i64: 64, 128>}, {pipeline_mode = #tpu.pipeline_mode<synchronous>, transform_indices = @transform_1, window_bounds = array<i64: 128, 512>}, {pipeline_mode = #tpu.pipeline_mode<synchronous>, transform_indices = @transform_2, window_bounds = array<i64: 128, 512>}, {pipeline_mode = #tpu.pipeline_mode<synchronous>, transform_indices = @transform_3, window_bounds = array<i64: 1, 512>}, {pipeline_mode = #tpu.pipeline_mode<synchronous>, transform_indices = @transform_4, window_bounds = array<i64: 128, 512>}, {pipeline_mode = #tpu.pipeline_mode<synchronous>, transform_indices = @transform_5, window_bounds = array<i64: 128, 512>}, {pipeline_mode = #tpu.pipeline_mode<synchronous>, transform_indices = @transform_6, window_bounds = array<i64: 1, 512>}, {pipeline_mode = #tpu.pipeline_mode<synchronous>, transform_indices = @transform_7, window_bounds = array<i64: 2, 8, 128>}, {pipeline_mode = #tpu.pipeline_mode<synchronous>, transform_indices = @transform_8, window_bounds = array<i64: 2, 8, 128>}, {transform_indices = @transform_9, window_bounds = array<i64: 64, 128>}, {pipeline_mode = #tpu.pipeline_mode<synchronous>, transform_indices = @transform_10, window_bounds = array<i64: 2, 8, 128>}, {pipeline_mode = #tpu.pipeline_mode<synchronous>, transform_indices = @transform_11, window_bounds = array<i64: 2, 8, 128>}]} {
    %c0_i32 = arith.constant 0 : i32
    %0 = arith.cmpi eq, %arg0, %c0_i32 : i32
    %1 = arith.extui %0 : i1 to i32
    %c0_i32_0 = arith.constant 0 : i32
    %2 = arith.cmpi ne, %1, %c0_i32_0 : i32
    scf.if %2 {
      %c0_92 = arith.constant 0 : index
      %c0_93 = arith.constant 0 : index
      %c0_94 = arith.constant 0 : index
      %366 = vector.load %arg8[%c0_92, %c0_93, %c0_94] : memref<2x8x128xf32, #tpu.memory_space<vmem>>, vector<1x8x128xf32>
      %367 = vector.shape_cast %366 : vector<1x8x128xf32> to vector<8x128xf32>
      %c0_95 = arith.constant 0 : index
      %c0_96 = arith.constant 0 : index
      %368 = vector.load %arg13[%c0_95, %c0_96] : memref<8x128xf32, #tpu.memory_space<vmem>>, vector<8x128xf32>
      tpu.vector_store %arg13[%c0_95, %c0_96], %367 {strides = array<i32>} : memref<8x128xf32, #tpu.memory_space<vmem>>, vector<8x128xf32>,
      %c0_97 = arith.constant 0 : index
      %c0_98 = arith.constant 0 : index
      %c0_99 = arith.constant 0 : index
      %369 = vector.load %arg9[%c0_97, %c0_98, %c0_99] : memref<2x8x128xf32, #tpu.memory_space<vmem>>, vector<1x8x128xf32>
      %370 = vector.shape_cast %369 : vector<1x8x128xf32> to vector<8x128xf32>
      %c0_100 = arith.constant 0 : index
      %c0_101 = arith.constant 0 : index
      %371 = vector.load %arg14[%c0_100, %c0_101] : memref<8x128xf32, #tpu.memory_space<vmem>>, vector<8x128xf32>
      tpu.vector_store %arg14[%c0_100, %c0_101], %370 {strides = array<i32>} : memref<8x128xf32, #tpu.memory_space<vmem>>, vector<8x128xf32>,
      %c1 = arith.constant 1 : index
      %c0_102 = arith.constant 0 : index
      %c0_103 = arith.constant 0 : index
      %372 = vector.load %arg8[%c1, %c0_102, %c0_103] : memref<2x8x128xf32, #tpu.memory_space<vmem>>, vector<1x8x128xf32>
      %373 = vector.shape_cast %372 : vector<1x8x128xf32> to vector<8x128xf32>
      %c0_104 = arith.constant 0 : index
      %c0_105 = arith.constant 0 : index
      %374 = vector.load %arg15[%c0_104, %c0_105] : memref<8x128xf32, #tpu.memory_space<vmem>>, vector<8x128xf32>
      tpu.vector_store %arg15[%c0_104, %c0_105], %373 {strides = array<i32>} : memref<8x128xf32, #tpu.memory_space<vmem>>, vector<8x128xf32>,
      %c1_106 = arith.constant 1 : index
      %c0_107 = arith.constant 0 : index
      %c0_108 = arith.constant 0 : index
      %375 = vector.load %arg9[%c1_106, %c0_107, %c0_108] : memref<2x8x128xf32, #tpu.memory_space<vmem>>, vector<1x8x128xf32>
      %376 = vector.shape_cast %375 : vector<1x8x128xf32> to vector<8x128xf32>
      %c0_109 = arith.constant 0 : index
      %c0_110 = arith.constant 0 : index
      %377 = vector.load %arg16[%c0_109, %c0_110] : memref<8x128xf32, #tpu.memory_space<vmem>>, vector<8x128xf32>
      tpu.vector_store %arg16[%c0_109, %c0_110], %376 {strides = array<i32>} : memref<8x128xf32, #tpu.memory_space<vmem>>, vector<8x128xf32>,
    } else {
    }
    %c0 = arith.constant 0 : index
    %c0_1 = arith.constant 0 : index
    %3 = vector.load %arg1[%c0, %c0_1] : memref<64x128xf32, #tpu.memory_space<vmem>>, vector<64x128xf32>
    %4 = arith.truncf %3 : vector<64x128xf32> to vector<64x128xbf16>
    %c0_2 = arith.constant 0 : index
    %c0_3 = arith.constant 0 : index
    %5 = vector.load %arg2[%c0_2, %c0_3] : memref<128x512xbf16, #tpu.memory_space<vmem>>, vector<128x512xbf16>
    %cst = arith.constant dense<0.000000e+00> : vector<64x512xf32>
    %6 = tpu.matmul %4, %5, %cst {dimension_numbers = #tpu.dot_dimension_numbers<[1], [0], [0], [1], [0, 0, 1, 1], [], []>} : vector<64x128xbf16>, vector<128x512xbf16>, vector<64x512xf32> -> vector<64x512xf32>
    %c0_4 = arith.constant 0 : index
    %c0_5 = arith.constant 0 : index
    %7 = vector.load %arg4[%c0_4, %c0_5] : memref<1x512xf32, #tpu.memory_space<vmem>>, vector<1x512xf32>
    %8 = vector.broadcast %7 : vector<1x512xf32> to vector<64x512xf32>
    %9 = arith.addf %6, %8 : vector<64x512xf32>
    %c0_6 = arith.constant 0 : index
    %c0_7 = arith.constant 0 : index
    %10 = vector.load %arg13[%c0_6, %c0_7] : memref<8x128xf32, #tpu.memory_space<vmem>>, vector<8x128xf32>
    %c0_8 = arith.constant 0 : index
    %c0_9 = arith.constant 0 : index
    %11 = vector.load %arg14[%c0_8, %c0_9] : memref<8x128xf32, #tpu.memory_space<vmem>>, vector<8x128xf32>
    %c0_10 = arith.constant 0 : index
    %c0_11 = arith.constant 0 : index
    %12 = vector.load %arg3[%c0_10, %c0_11] : memref<128x512xbf16, #tpu.memory_space<vmem>>, vector<128x512xbf16>
    %13 = vector.extract_strided_slice %9 {offsets = [0, 0], sizes = [8, 512], strides = [1, 1]} : vector<64x512xf32> to vector<8x512xf32>
    %14 = arith.truncf %10 : vector<8x128xf32> to vector<8x128xbf16>
    %cst_12 = arith.constant dense<0.000000e+00> : vector<8x512xf32>
    %15 = tpu.matmul %14, %12, %cst_12 {dimension_numbers = #tpu.dot_dimension_numbers<[1], [0], [0], [1], [0, 0, 1, 1], [], []>} : vector<8x128xbf16>, vector<128x512xbf16>, vector<8x512xf32> -> vector<8x512xf32>
    %16 = arith.addf %13, %15 : vector<8x512xf32>
    %17 = vector.extract_strided_slice %16 {offsets = [0, 0], sizes = [8, 384], strides = [1, 1]} : vector<8x512xf32> to vector<8x384xf32>
    %18 = arith.negf %17 : vector<8x384xf32>
    %19 = math.exp %18 : vector<8x384xf32>
    %cst_13 = arith.constant 1.000000e+00 : f32
    %20 = vector.broadcast %cst_13 : f32 to vector<8x384xf32>
    %21 = arith.addf %20, %19 : vector<8x384xf32>
    %22 = arith.divf %20, %21 : vector<8x384xf32>
    %23 = vector.extract_strided_slice %22 {offsets = [0, 0], sizes = [8, 128], strides = [1, 1]} : vector<8x384xf32> to vector<8x128xf32>
    %24 = vector.extract_strided_slice %22 {offsets = [0, 128], sizes = [8, 128], strides = [1, 1]} : vector<8x384xf32> to vector<8x128xf32>
    %25 = vector.extract_strided_slice %22 {offsets = [0, 256], sizes = [8, 128], strides = [1, 1]} : vector<8x384xf32> to vector<8x128xf32>
    %26 = vector.extract_strided_slice %16 {offsets = [0, 384], sizes = [8, 128], strides = [1, 1]} : vector<8x512xf32> to vector<8x128xf32>
    %27 = math.tanh %26 : vector<8x128xf32>
    %28 = arith.mulf %24, %11 : vector<8x128xf32>
    %29 = arith.mulf %23, %27 : vector<8x128xf32>
    %30 = arith.addf %28, %29 : vector<8x128xf32>
    %31 = math.tanh %30 : vector<8x128xf32>
    %32 = arith.mulf %25, %31 : vector<8x128xf32>
    %c0_14 = arith.constant 0 : index
    %c0_15 = arith.constant 0 : index
    %33 = vector.load %arg17[%c0_14, %c0_15] : memref<64x128xf32, #tpu.memory_space<vmem>>, vector<8x128xf32>
    tpu.vector_store %arg17[%c0_14, %c0_15], %32 {strides = array<i32>} : memref<64x128xf32, #tpu.memory_space<vmem>>, vector<8x128xf32>,
    %34 = vector.extract_strided_slice %9 {offsets = [8, 0], sizes = [8, 512], strides = [1, 1]} : vector<64x512xf32> to vector<8x512xf32>
    %35 = arith.truncf %32 : vector<8x128xf32> to vector<8x128xbf16>
    %cst_16 = arith.constant dense<0.000000e+00> : vector<8x512xf32>
    %36 = tpu.matmul %35, %12, %cst_16 {dimension_numbers = #tpu.dot_dimension_numbers<[1], [0], [0], [1], [0, 0, 1, 1], [], []>} : vector<8x128xbf16>, vector<128x512xbf16>, vector<8x512xf32> -> vector<8x512xf32>
    %37 = arith.addf %34, %36 : vector<8x512xf32>
    %38 = vector.extract_strided_slice %37 {offsets = [0, 0], sizes = [8, 384], strides = [1, 1]} : vector<8x512xf32> to vector<8x384xf32>
    %39 = arith.negf %38 : vector<8x384xf32>
    %40 = math.exp %39 : vector<8x384xf32>
    %cst_17 = arith.constant 1.000000e+00 : f32
    %41 = vector.broadcast %cst_17 : f32 to vector<8x384xf32>
    %42 = arith.addf %41, %40 : vector<8x384xf32>
    %43 = arith.divf %41, %42 : vector<8x384xf32>
    %44 = vector.extract_strided_slice %43 {offsets = [0, 0], sizes = [8, 128], strides = [1, 1]} : vector<8x384xf32> to vector<8x128xf32>
    %45 = vector.extract_strided_slice %43 {offsets = [0, 128], sizes = [8, 128], strides = [1, 1]} : vector<8x384xf32> to vector<8x128xf32>
    %46 = vector.extract_strided_slice %43 {offsets = [0, 256], sizes = [8, 128], strides = [1, 1]} : vector<8x384xf32> to vector<8x128xf32>
    %47 = vector.extract_strided_slice %37 {offsets = [0, 384], sizes = [8, 128], strides = [1, 1]} : vector<8x512xf32> to vector<8x128xf32>
    %48 = math.tanh %47 : vector<8x128xf32>
    %49 = arith.mulf %45, %30 : vector<8x128xf32>
    %50 = arith.mulf %44, %48 : vector<8x128xf32>
    %51 = arith.addf %49, %50 : vector<8x128xf32>
    %52 = math.tanh %51 : vector<8x128xf32>
    %53 = arith.mulf %46, %52 : vector<8x128xf32>
    %c8 = arith.constant 8 : index
    %c0_18 = arith.constant 0 : index
    %54 = vector.load %arg17[%c8, %c0_18] : memref<64x128xf32, #tpu.memory_space<vmem>>, vector<8x128xf32>
    tpu.vector_store %arg17[%c8, %c0_18], %53 {strides = array<i32>} : memref<64x128xf32, #tpu.memory_space<vmem>>, vector<8x128xf32>,
    %55 = vector.extract_strided_slice %9 {offsets = [16, 0], sizes = [8, 512], strides = [1, 1]} : vector<64x512xf32> to vector<8x512xf32>
    %56 = arith.truncf %53 : vector<8x128xf32> to vector<8x128xbf16>
    %cst_19 = arith.constant dense<0.000000e+00> : vector<8x512xf32>
    %57 = tpu.matmul %56, %12, %cst_19 {dimension_numbers = #tpu.dot_dimension_numbers<[1], [0], [0], [1], [0, 0, 1, 1], [], []>} : vector<8x128xbf16>, vector<128x512xbf16>, vector<8x512xf32> -> vector<8x512xf32>
    %58 = arith.addf %55, %57 : vector<8x512xf32>
    %59 = vector.extract_strided_slice %58 {offsets = [0, 0], sizes = [8, 384], strides = [1, 1]} : vector<8x512xf32> to vector<8x384xf32>
    %60 = arith.negf %59 : vector<8x384xf32>
    %61 = math.exp %60 : vector<8x384xf32>
    %cst_20 = arith.constant 1.000000e+00 : f32
    %62 = vector.broadcast %cst_20 : f32 to vector<8x384xf32>
    %63 = arith.addf %62, %61 : vector<8x384xf32>
    %64 = arith.divf %62, %63 : vector<8x384xf32>
    %65 = vector.extract_strided_slice %64 {offsets = [0, 0], sizes = [8, 128], strides = [1, 1]} : vector<8x384xf32> to vector<8x128xf32>
    %66 = vector.extract_strided_slice %64 {offsets = [0, 128], sizes = [8, 128], strides = [1, 1]} : vector<8x384xf32> to vector<8x128xf32>
    %67 = vector.extract_strided_slice %64 {offsets = [0, 256], sizes = [8, 128], strides = [1, 1]} : vector<8x384xf32> to vector<8x128xf32>
    %68 = vector.extract_strided_slice %58 {offsets = [0, 384], sizes = [8, 128], strides = [1, 1]} : vector<8x512xf32> to vector<8x128xf32>
    %69 = math.tanh %68 : vector<8x128xf32>
    %70 = arith.mulf %66, %51 : vector<8x128xf32>
    %71 = arith.mulf %65, %69 : vector<8x128xf32>
    %72 = arith.addf %70, %71 : vector<8x128xf32>
    %73 = math.tanh %72 : vector<8x128xf32>
    %74 = arith.mulf %67, %73 : vector<8x128xf32>
    %c16 = arith.constant 16 : index
    %c0_21 = arith.constant 0 : index
    %75 = vector.load %arg17[%c16, %c0_21] : memref<64x128xf32, #tpu.memory_space<vmem>>, vector<8x128xf32>
    tpu.vector_store %arg17[%c16, %c0_21], %74 {strides = array<i32>} : memref<64x128xf32, #tpu.memory_space<vmem>>, vector<8x128xf32>,
    %76 = vector.extract_strided_slice %9 {offsets = [24, 0], sizes = [8, 512], strides = [1, 1]} : vector<64x512xf32> to vector<8x512xf32>
    %77 = arith.truncf %74 : vector<8x128xf32> to vector<8x128xbf16>
    %cst_22 = arith.constant dense<0.000000e+00> : vector<8x512xf32>
    %78 = tpu.matmul %77, %12, %cst_22 {dimension_numbers = #tpu.dot_dimension_numbers<[1], [0], [0], [1], [0, 0, 1, 1], [], []>} : vector<8x128xbf16>, vector<128x512xbf16>, vector<8x512xf32> -> vector<8x512xf32>
    %79 = arith.addf %76, %78 : vector<8x512xf32>
    %80 = vector.extract_strided_slice %79 {offsets = [0, 0], sizes = [8, 384], strides = [1, 1]} : vector<8x512xf32> to vector<8x384xf32>
    %81 = arith.negf %80 : vector<8x384xf32>
    %82 = math.exp %81 : vector<8x384xf32>
    %cst_23 = arith.constant 1.000000e+00 : f32
    %83 = vector.broadcast %cst_23 : f32 to vector<8x384xf32>
    %84 = arith.addf %83, %82 : vector<8x384xf32>
    %85 = arith.divf %83, %84 : vector<8x384xf32>
    %86 = vector.extract_strided_slice %85 {offsets = [0, 0], sizes = [8, 128], strides = [1, 1]} : vector<8x384xf32> to vector<8x128xf32>
    %87 = vector.extract_strided_slice %85 {offsets = [0, 128], sizes = [8, 128], strides = [1, 1]} : vector<8x384xf32> to vector<8x128xf32>
    %88 = vector.extract_strided_slice %85 {offsets = [0, 256], sizes = [8, 128], strides = [1, 1]} : vector<8x384xf32> to vector<8x128xf32>
    %89 = vector.extract_strided_slice %79 {offsets = [0, 384], sizes = [8, 128], strides = [1, 1]} : vector<8x512xf32> to vector<8x128xf32>
    %90 = math.tanh %89 : vector<8x128xf32>
    %91 = arith.mulf %87, %72 : vector<8x128xf32>
    %92 = arith.mulf %86, %90 : vector<8x128xf32>
    %93 = arith.addf %91, %92 : vector<8x128xf32>
    %94 = math.tanh %93 : vector<8x128xf32>
    %95 = arith.mulf %88, %94 : vector<8x128xf32>
    %c24 = arith.constant 24 : index
    %c0_24 = arith.constant 0 : index
    %96 = vector.load %arg17[%c24, %c0_24] : memref<64x128xf32, #tpu.memory_space<vmem>>, vector<8x128xf32>
    tpu.vector_store %arg17[%c24, %c0_24], %95 {strides = array<i32>} : memref<64x128xf32, #tpu.memory_space<vmem>>, vector<8x128xf32>,
    %97 = vector.extract_strided_slice %9 {offsets = [32, 0], sizes = [8, 512], strides = [1, 1]} : vector<64x512xf32> to vector<8x512xf32>
    %98 = arith.truncf %95 : vector<8x128xf32> to vector<8x128xbf16>
    %cst_25 = arith.constant dense<0.000000e+00> : vector<8x512xf32>
    %99 = tpu.matmul %98, %12, %cst_25 {dimension_numbers = #tpu.dot_dimension_numbers<[1], [0], [0], [1], [0, 0, 1, 1], [], []>} : vector<8x128xbf16>, vector<128x512xbf16>, vector<8x512xf32> -> vector<8x512xf32>
    %100 = arith.addf %97, %99 : vector<8x512xf32>
    %101 = vector.extract_strided_slice %100 {offsets = [0, 0], sizes = [8, 384], strides = [1, 1]} : vector<8x512xf32> to vector<8x384xf32>
    %102 = arith.negf %101 : vector<8x384xf32>
    %103 = math.exp %102 : vector<8x384xf32>
    %cst_26 = arith.constant 1.000000e+00 : f32
    %104 = vector.broadcast %cst_26 : f32 to vector<8x384xf32>
    %105 = arith.addf %104, %103 : vector<8x384xf32>
    %106 = arith.divf %104, %105 : vector<8x384xf32>
    %107 = vector.extract_strided_slice %106 {offsets = [0, 0], sizes = [8, 128], strides = [1, 1]} : vector<8x384xf32> to vector<8x128xf32>
    %108 = vector.extract_strided_slice %106 {offsets = [0, 128], sizes = [8, 128], strides = [1, 1]} : vector<8x384xf32> to vector<8x128xf32>
    %109 = vector.extract_strided_slice %106 {offsets = [0, 256], sizes = [8, 128], strides = [1, 1]} : vector<8x384xf32> to vector<8x128xf32>
    %110 = vector.extract_strided_slice %100 {offsets = [0, 384], sizes = [8, 128], strides = [1, 1]} : vector<8x512xf32> to vector<8x128xf32>
    %111 = math.tanh %110 : vector<8x128xf32>
    %112 = arith.mulf %108, %93 : vector<8x128xf32>
    %113 = arith.mulf %107, %111 : vector<8x128xf32>
    %114 = arith.addf %112, %113 : vector<8x128xf32>
    %115 = math.tanh %114 : vector<8x128xf32>
    %116 = arith.mulf %109, %115 : vector<8x128xf32>
    %c32 = arith.constant 32 : index
    %c0_27 = arith.constant 0 : index
    %117 = vector.load %arg17[%c32, %c0_27] : memref<64x128xf32, #tpu.memory_space<vmem>>, vector<8x128xf32>
    tpu.vector_store %arg17[%c32, %c0_27], %116 {strides = array<i32>} : memref<64x128xf32, #tpu.memory_space<vmem>>, vector<8x128xf32>,
    %118 = vector.extract_strided_slice %9 {offsets = [40, 0], sizes = [8, 512], strides = [1, 1]} : vector<64x512xf32> to vector<8x512xf32>
    %119 = arith.truncf %116 : vector<8x128xf32> to vector<8x128xbf16>
    %cst_28 = arith.constant dense<0.000000e+00> : vector<8x512xf32>
    %120 = tpu.matmul %119, %12, %cst_28 {dimension_numbers = #tpu.dot_dimension_numbers<[1], [0], [0], [1], [0, 0, 1, 1], [], []>} : vector<8x128xbf16>, vector<128x512xbf16>, vector<8x512xf32> -> vector<8x512xf32>
    %121 = arith.addf %118, %120 : vector<8x512xf32>
    %122 = vector.extract_strided_slice %121 {offsets = [0, 0], sizes = [8, 384], strides = [1, 1]} : vector<8x512xf32> to vector<8x384xf32>
    %123 = arith.negf %122 : vector<8x384xf32>
    %124 = math.exp %123 : vector<8x384xf32>
    %cst_29 = arith.constant 1.000000e+00 : f32
    %125 = vector.broadcast %cst_29 : f32 to vector<8x384xf32>
    %126 = arith.addf %125, %124 : vector<8x384xf32>
    %127 = arith.divf %125, %126 : vector<8x384xf32>
    %128 = vector.extract_strided_slice %127 {offsets = [0, 0], sizes = [8, 128], strides = [1, 1]} : vector<8x384xf32> to vector<8x128xf32>
    %129 = vector.extract_strided_slice %127 {offsets = [0, 128], sizes = [8, 128], strides = [1, 1]} : vector<8x384xf32> to vector<8x128xf32>
    %130 = vector.extract_strided_slice %127 {offsets = [0, 256], sizes = [8, 128], strides = [1, 1]} : vector<8x384xf32> to vector<8x128xf32>
    %131 = vector.extract_strided_slice %121 {offsets = [0, 384], sizes = [8, 128], strides = [1, 1]} : vector<8x512xf32> to vector<8x128xf32>
    %132 = math.tanh %131 : vector<8x128xf32>
    %133 = arith.mulf %129, %114 : vector<8x128xf32>
    %134 = arith.mulf %128, %132 : vector<8x128xf32>
    %135 = arith.addf %133, %134 : vector<8x128xf32>
    %136 = math.tanh %135 : vector<8x128xf32>
    %137 = arith.mulf %130, %136 : vector<8x128xf32>
    %c40 = arith.constant 40 : index
    %c0_30 = arith.constant 0 : index
    %138 = vector.load %arg17[%c40, %c0_30] : memref<64x128xf32, #tpu.memory_space<vmem>>, vector<8x128xf32>
    tpu.vector_store %arg17[%c40, %c0_30], %137 {strides = array<i32>} : memref<64x128xf32, #tpu.memory_space<vmem>>, vector<8x128xf32>,
    %139 = vector.extract_strided_slice %9 {offsets = [48, 0], sizes = [8, 512], strides = [1, 1]} : vector<64x512xf32> to vector<8x512xf32>
    %140 = arith.truncf %137 : vector<8x128xf32> to vector<8x128xbf16>
    %cst_31 = arith.constant dense<0.000000e+00> : vector<8x512xf32>
    %141 = tpu.matmul %140, %12, %cst_31 {dimension_numbers = #tpu.dot_dimension_numbers<[1], [0], [0], [1], [0, 0, 1, 1], [], []>} : vector<8x128xbf16>, vector<128x512xbf16>, vector<8x512xf32> -> vector<8x512xf32>
    %142 = arith.addf %139, %141 : vector<8x512xf32>
    %143 = vector.extract_strided_slice %142 {offsets = [0, 0], sizes = [8, 384], strides = [1, 1]} : vector<8x512xf32> to vector<8x384xf32>
    %144 = arith.negf %143 : vector<8x384xf32>
    %145 = math.exp %144 : vector<8x384xf32>
    %cst_32 = arith.constant 1.000000e+00 : f32
    %146 = vector.broadcast %cst_32 : f32 to vector<8x384xf32>
    %147 = arith.addf %146, %145 : vector<8x384xf32>
    %148 = arith.divf %146, %147 : vector<8x384xf32>
    %149 = vector.extract_strided_slice %148 {offsets = [0, 0], sizes = [8, 128], strides = [1, 1]} : vector<8x384xf32> to vector<8x128xf32>
    %150 = vector.extract_strided_slice %148 {offsets = [0, 128], sizes = [8, 128], strides = [1, 1]} : vector<8x384xf32> to vector<8x128xf32>
    %151 = vector.extract_strided_slice %148 {offsets = [0, 256], sizes = [8, 128], strides = [1, 1]} : vector<8x384xf32> to vector<8x128xf32>
    %152 = vector.extract_strided_slice %142 {offsets = [0, 384], sizes = [8, 128], strides = [1, 1]} : vector<8x512xf32> to vector<8x128xf32>
    %153 = math.tanh %152 : vector<8x128xf32>
    %154 = arith.mulf %150, %135 : vector<8x128xf32>
    %155 = arith.mulf %149, %153 : vector<8x128xf32>
    %156 = arith.addf %154, %155 : vector<8x128xf32>
    %157 = math.tanh %156 : vector<8x128xf32>
    %158 = arith.mulf %151, %157 : vector<8x128xf32>
    %c48 = arith.constant 48 : index
    %c0_33 = arith.constant 0 : index
    %159 = vector.load %arg17[%c48, %c0_33] : memref<64x128xf32, #tpu.memory_space<vmem>>, vector<8x128xf32>
    tpu.vector_store %arg17[%c48, %c0_33], %158 {strides = array<i32>} : memref<64x128xf32, #tpu.memory_space<vmem>>, vector<8x128xf32>,
    %160 = vector.extract_strided_slice %9 {offsets = [56, 0], sizes = [8, 512], strides = [1, 1]} : vector<64x512xf32> to vector<8x512xf32>
    %161 = arith.truncf %158 : vector<8x128xf32> to vector<8x128xbf16>
    %cst_34 = arith.constant dense<0.000000e+00> : vector<8x512xf32>
    %162 = tpu.matmul %161, %12, %cst_34 {dimension_numbers = #tpu.dot_dimension_numbers<[1], [0], [0], [1], [0, 0, 1, 1], [], []>} : vector<8x128xbf16>, vector<128x512xbf16>, vector<8x512xf32> -> vector<8x512xf32>
    %163 = arith.addf %160, %162 : vector<8x512xf32>
    %164 = vector.extract_strided_slice %163 {offsets = [0, 0], sizes = [8, 384], strides = [1, 1]} : vector<8x512xf32> to vector<8x384xf32>
    %165 = arith.negf %164 : vector<8x384xf32>
    %166 = math.exp %165 : vector<8x384xf32>
    %cst_35 = arith.constant 1.000000e+00 : f32
    %167 = vector.broadcast %cst_35 : f32 to vector<8x384xf32>
    %168 = arith.addf %167, %166 : vector<8x384xf32>
    %169 = arith.divf %167, %168 : vector<8x384xf32>
    %170 = vector.extract_strided_slice %169 {offsets = [0, 0], sizes = [8, 128], strides = [1, 1]} : vector<8x384xf32> to vector<8x128xf32>
    %171 = vector.extract_strided_slice %169 {offsets = [0, 128], sizes = [8, 128], strides = [1, 1]} : vector<8x384xf32> to vector<8x128xf32>
    %172 = vector.extract_strided_slice %169 {offsets = [0, 256], sizes = [8, 128], strides = [1, 1]} : vector<8x384xf32> to vector<8x128xf32>
    %173 = vector.extract_strided_slice %163 {offsets = [0, 384], sizes = [8, 128], strides = [1, 1]} : vector<8x512xf32> to vector<8x128xf32>
    %174 = math.tanh %173 : vector<8x128xf32>
    %175 = arith.mulf %171, %156 : vector<8x128xf32>
    %176 = arith.mulf %170, %174 : vector<8x128xf32>
    %177 = arith.addf %175, %176 : vector<8x128xf32>
    %178 = math.tanh %177 : vector<8x128xf32>
    %179 = arith.mulf %172, %178 : vector<8x128xf32>
    %c56 = arith.constant 56 : index
    %c0_36 = arith.constant 0 : index
    %180 = vector.load %arg17[%c56, %c0_36] : memref<64x128xf32, #tpu.memory_space<vmem>>, vector<8x128xf32>
    tpu.vector_store %arg17[%c56, %c0_36], %179 {strides = array<i32>} : memref<64x128xf32, #tpu.memory_space<vmem>>, vector<8x128xf32>,
    %c0_37 = arith.constant 0 : index
    %c0_38 = arith.constant 0 : index
    %181 = vector.load %arg13[%c0_37, %c0_38] : memref<8x128xf32, #tpu.memory_space<vmem>>, vector<8x128xf32>
    tpu.vector_store %arg13[%c0_37, %c0_38], %179 {strides = array<i32>} : memref<8x128xf32, #tpu.memory_space<vmem>>, vector<8x128xf32>,
    %c0_39 = arith.constant 0 : index
    %c0_40 = arith.constant 0 : index
    %182 = vector.load %arg14[%c0_39, %c0_40] : memref<8x128xf32, #tpu.memory_space<vmem>>, vector<8x128xf32>
    tpu.vector_store %arg14[%c0_39, %c0_40], %177 {strides = array<i32>} : memref<8x128xf32, #tpu.memory_space<vmem>>, vector<8x128xf32>,
    %c0_41 = arith.constant 0 : index
    %c0_42 = arith.constant 0 : index
    %183 = vector.load %arg17[%c0_41, %c0_42] : memref<64x128xf32, #tpu.memory_space<vmem>>, vector<64x128xf32>
    %184 = arith.truncf %183 : vector<64x128xf32> to vector<64x128xbf16>
    %c0_43 = arith.constant 0 : index
    %c0_44 = arith.constant 0 : index
    %185 = vector.load %arg5[%c0_43, %c0_44] : memref<128x512xbf16, #tpu.memory_space<vmem>>, vector<128x512xbf16>
    %cst_45 = arith.constant dense<0.000000e+00> : vector<64x512xf32>
    %186 = tpu.matmul %184, %185, %cst_45 {dimension_numbers = #tpu.dot_dimension_numbers<[1], [0], [0], [1], [0, 0, 1, 1], [], []>} : vector<64x128xbf16>, vector<128x512xbf16>, vector<64x512xf32> -> vector<64x512xf32>
    %c0_46 = arith.constant 0 : index
    %c0_47 = arith.constant 0 : index
    %187 = vector.load %arg7[%c0_46, %c0_47] : memref<1x512xf32, #tpu.memory_space<vmem>>, vector<1x512xf32>
    %188 = vector.broadcast %187 : vector<1x512xf32> to vector<64x512xf32>
    %189 = arith.addf %186, %188 : vector<64x512xf32>
    %c0_48 = arith.constant 0 : index
    %c0_49 = arith.constant 0 : index
    %190 = vector.load %arg15[%c0_48, %c0_49] : memref<8x128xf32, #tpu.memory_space<vmem>>, vector<8x128xf32>
    %c0_50 = arith.constant 0 : index
    %c0_51 = arith.constant 0 : index
    %191 = vector.load %arg16[%c0_50, %c0_51] : memref<8x128xf32, #tpu.memory_space<vmem>>, vector<8x128xf32>
    %c0_52 = arith.constant 0 : index
    %c0_53 = arith.constant 0 : index
    %192 = vector.load %arg6[%c0_52, %c0_53] : memref<128x512xbf16, #tpu.memory_space<vmem>>, vector<128x512xbf16>
    %193 = vector.extract_strided_slice %189 {offsets = [0, 0], sizes = [8, 512], strides = [1, 1]} : vector<64x512xf32> to vector<8x512xf32>
    %194 = arith.truncf %190 : vector<8x128xf32> to vector<8x128xbf16>
    %cst_54 = arith.constant dense<0.000000e+00> : vector<8x512xf32>
    %195 = tpu.matmul %194, %192, %cst_54 {dimension_numbers = #tpu.dot_dimension_numbers<[1], [0], [0], [1], [0, 0, 1, 1], [], []>} : vector<8x128xbf16>, vector<128x512xbf16>, vector<8x512xf32> -> vector<8x512xf32>
    %196 = arith.addf %193, %195 : vector<8x512xf32>
    %197 = vector.extract_strided_slice %196 {offsets = [0, 0], sizes = [8, 384], strides = [1, 1]} : vector<8x512xf32> to vector<8x384xf32>
    %198 = arith.negf %197 : vector<8x384xf32>
    %199 = math.exp %198 : vector<8x384xf32>
    %cst_55 = arith.constant 1.000000e+00 : f32
    %200 = vector.broadcast %cst_55 : f32 to vector<8x384xf32>
    %201 = arith.addf %200, %199 : vector<8x384xf32>
    %202 = arith.divf %200, %201 : vector<8x384xf32>
    %203 = vector.extract_strided_slice %202 {offsets = [0, 0], sizes = [8, 128], strides = [1, 1]} : vector<8x384xf32> to vector<8x128xf32>
    %204 = vector.extract_strided_slice %202 {offsets = [0, 128], sizes = [8, 128], strides = [1, 1]} : vector<8x384xf32> to vector<8x128xf32>
    %205 = vector.extract_strided_slice %202 {offsets = [0, 256], sizes = [8, 128], strides = [1, 1]} : vector<8x384xf32> to vector<8x128xf32>
    %206 = vector.extract_strided_slice %196 {offsets = [0, 384], sizes = [8, 128], strides = [1, 1]} : vector<8x512xf32> to vector<8x128xf32>
    %207 = math.tanh %206 : vector<8x128xf32>
    %208 = arith.mulf %204, %191 : vector<8x128xf32>
    %209 = arith.mulf %203, %207 : vector<8x128xf32>
    %210 = arith.addf %208, %209 : vector<8x128xf32>
    %211 = math.tanh %210 : vector<8x128xf32>
    %212 = arith.mulf %205, %211 : vector<8x128xf32>
    %c0_56 = arith.constant 0 : index
    %c0_57 = arith.constant 0 : index
    %213 = vector.load %arg10[%c0_56, %c0_57] : memref<64x128xf32, #tpu.memory_space<vmem>>, vector<8x128xf32>
    tpu.vector_store %arg10[%c0_56, %c0_57], %212 {strides = array<i32>} : memref<64x128xf32, #tpu.memory_space<vmem>>, vector<8x128xf32>,
    %214 = vector.extract_strided_slice %189 {offsets = [8, 0], sizes = [8, 512], strides = [1, 1]} : vector<64x512xf32> to vector<8x512xf32>
    %215 = arith.truncf %212 : vector<8x128xf32> to vector<8x128xbf16>
    %cst_58 = arith.constant dense<0.000000e+00> : vector<8x512xf32>
    %216 = tpu.matmul %215, %192, %cst_58 {dimension_numbers = #tpu.dot_dimension_numbers<[1], [0], [0], [1], [0, 0, 1, 1], [], []>} : vector<8x128xbf16>, vector<128x512xbf16>, vector<8x512xf32> -> vector<8x512xf32>
    %217 = arith.addf %214, %216 : vector<8x512xf32>
    %218 = vector.extract_strided_slice %217 {offsets = [0, 0], sizes = [8, 384], strides = [1, 1]} : vector<8x512xf32> to vector<8x384xf32>
    %219 = arith.negf %218 : vector<8x384xf32>
    %220 = math.exp %219 : vector<8x384xf32>
    %cst_59 = arith.constant 1.000000e+00 : f32
    %221 = vector.broadcast %cst_59 : f32 to vector<8x384xf32>
    %222 = arith.addf %221, %220 : vector<8x384xf32>
    %223 = arith.divf %221, %222 : vector<8x384xf32>
    %224 = vector.extract_strided_slice %223 {offsets = [0, 0], sizes = [8, 128], strides = [1, 1]} : vector<8x384xf32> to vector<8x128xf32>
    %225 = vector.extract_strided_slice %223 {offsets = [0, 128], sizes = [8, 128], strides = [1, 1]} : vector<8x384xf32> to vector<8x128xf32>
    %226 = vector.extract_strided_slice %223 {offsets = [0, 256], sizes = [8, 128], strides = [1, 1]} : vector<8x384xf32> to vector<8x128xf32>
    %227 = vector.extract_strided_slice %217 {offsets = [0, 384], sizes = [8, 128], strides = [1, 1]} : vector<8x512xf32> to vector<8x128xf32>
    %228 = math.tanh %227 : vector<8x128xf32>
    %229 = arith.mulf %225, %210 : vector<8x128xf32>
    %230 = arith.mulf %224, %228 : vector<8x128xf32>
    %231 = arith.addf %229, %230 : vector<8x128xf32>
    %232 = math.tanh %231 : vector<8x128xf32>
    %233 = arith.mulf %226, %232 : vector<8x128xf32>
    %c8_60 = arith.constant 8 : index
    %c0_61 = arith.constant 0 : index
    %234 = vector.load %arg10[%c8_60, %c0_61] : memref<64x128xf32, #tpu.memory_space<vmem>>, vector<8x128xf32>
    tpu.vector_store %arg10[%c8_60, %c0_61], %233 {strides = array<i32>} : memref<64x128xf32, #tpu.memory_space<vmem>>, vector<8x128xf32>,
    %235 = vector.extract_strided_slice %189 {offsets = [16, 0], sizes = [8, 512], strides = [1, 1]} : vector<64x512xf32> to vector<8x512xf32>
    %236 = arith.truncf %233 : vector<8x128xf32> to vector<8x128xbf16>
    %cst_62 = arith.constant dense<0.000000e+00> : vector<8x512xf32>
    %237 = tpu.matmul %236, %192, %cst_62 {dimension_numbers = #tpu.dot_dimension_numbers<[1], [0], [0], [1], [0, 0, 1, 1], [], []>} : vector<8x128xbf16>, vector<128x512xbf16>, vector<8x512xf32> -> vector<8x512xf32>
    %238 = arith.addf %235, %237 : vector<8x512xf32>
    %239 = vector.extract_strided_slice %238 {offsets = [0, 0], sizes = [8, 384], strides = [1, 1]} : vector<8x512xf32> to vector<8x384xf32>
    %240 = arith.negf %239 : vector<8x384xf32>
    %241 = math.exp %240 : vector<8x384xf32>
    %cst_63 = arith.constant 1.000000e+00 : f32
    %242 = vector.broadcast %cst_63 : f32 to vector<8x384xf32>
    %243 = arith.addf %242, %241 : vector<8x384xf32>
    %244 = arith.divf %242, %243 : vector<8x384xf32>
    %245 = vector.extract_strided_slice %244 {offsets = [0, 0], sizes = [8, 128], strides = [1, 1]} : vector<8x384xf32> to vector<8x128xf32>
    %246 = vector.extract_strided_slice %244 {offsets = [0, 128], sizes = [8, 128], strides = [1, 1]} : vector<8x384xf32> to vector<8x128xf32>
    %247 = vector.extract_strided_slice %244 {offsets = [0, 256], sizes = [8, 128], strides = [1, 1]} : vector<8x384xf32> to vector<8x128xf32>
    %248 = vector.extract_strided_slice %238 {offsets = [0, 384], sizes = [8, 128], strides = [1, 1]} : vector<8x512xf32> to vector<8x128xf32>
    %249 = math.tanh %248 : vector<8x128xf32>
    %250 = arith.mulf %246, %231 : vector<8x128xf32>
    %251 = arith.mulf %245, %249 : vector<8x128xf32>
    %252 = arith.addf %250, %251 : vector<8x128xf32>
    %253 = math.tanh %252 : vector<8x128xf32>
    %254 = arith.mulf %247, %253 : vector<8x128xf32>
    %c16_64 = arith.constant 16 : index
    %c0_65 = arith.constant 0 : index
    %255 = vector.load %arg10[%c16_64, %c0_65] : memref<64x128xf32, #tpu.memory_space<vmem>>, vector<8x128xf32>
    tpu.vector_store %arg10[%c16_64, %c0_65], %254 {strides = array<i32>} : memref<64x128xf32, #tpu.memory_space<vmem>>, vector<8x128xf32>,
    %256 = vector.extract_strided_slice %189 {offsets = [24, 0], sizes = [8, 512], strides = [1, 1]} : vector<64x512xf32> to vector<8x512xf32>
    %257 = arith.truncf %254 : vector<8x128xf32> to vector<8x128xbf16>
    %cst_66 = arith.constant dense<0.000000e+00> : vector<8x512xf32>
    %258 = tpu.matmul %257, %192, %cst_66 {dimension_numbers = #tpu.dot_dimension_numbers<[1], [0], [0], [1], [0, 0, 1, 1], [], []>} : vector<8x128xbf16>, vector<128x512xbf16>, vector<8x512xf32> -> vector<8x512xf32>
    %259 = arith.addf %256, %258 : vector<8x512xf32>
    %260 = vector.extract_strided_slice %259 {offsets = [0, 0], sizes = [8, 384], strides = [1, 1]} : vector<8x512xf32> to vector<8x384xf32>
    %261 = arith.negf %260 : vector<8x384xf32>
    %262 = math.exp %261 : vector<8x384xf32>
    %cst_67 = arith.constant 1.000000e+00 : f32
    %263 = vector.broadcast %cst_67 : f32 to vector<8x384xf32>
    %264 = arith.addf %263, %262 : vector<8x384xf32>
    %265 = arith.divf %263, %264 : vector<8x384xf32>
    %266 = vector.extract_strided_slice %265 {offsets = [0, 0], sizes = [8, 128], strides = [1, 1]} : vector<8x384xf32> to vector<8x128xf32>
    %267 = vector.extract_strided_slice %265 {offsets = [0, 128], sizes = [8, 128], strides = [1, 1]} : vector<8x384xf32> to vector<8x128xf32>
    %268 = vector.extract_strided_slice %265 {offsets = [0, 256], sizes = [8, 128], strides = [1, 1]} : vector<8x384xf32> to vector<8x128xf32>
    %269 = vector.extract_strided_slice %259 {offsets = [0, 384], sizes = [8, 128], strides = [1, 1]} : vector<8x512xf32> to vector<8x128xf32>
    %270 = math.tanh %269 : vector<8x128xf32>
    %271 = arith.mulf %267, %252 : vector<8x128xf32>
    %272 = arith.mulf %266, %270 : vector<8x128xf32>
    %273 = arith.addf %271, %272 : vector<8x128xf32>
    %274 = math.tanh %273 : vector<8x128xf32>
    %275 = arith.mulf %268, %274 : vector<8x128xf32>
    %c24_68 = arith.constant 24 : index
    %c0_69 = arith.constant 0 : index
    %276 = vector.load %arg10[%c24_68, %c0_69] : memref<64x128xf32, #tpu.memory_space<vmem>>, vector<8x128xf32>
    tpu.vector_store %arg10[%c24_68, %c0_69], %275 {strides = array<i32>} : memref<64x128xf32, #tpu.memory_space<vmem>>, vector<8x128xf32>,
    %277 = vector.extract_strided_slice %189 {offsets = [32, 0], sizes = [8, 512], strides = [1, 1]} : vector<64x512xf32> to vector<8x512xf32>
    %278 = arith.truncf %275 : vector<8x128xf32> to vector<8x128xbf16>
    %cst_70 = arith.constant dense<0.000000e+00> : vector<8x512xf32>
    %279 = tpu.matmul %278, %192, %cst_70 {dimension_numbers = #tpu.dot_dimension_numbers<[1], [0], [0], [1], [0, 0, 1, 1], [], []>} : vector<8x128xbf16>, vector<128x512xbf16>, vector<8x512xf32> -> vector<8x512xf32>
    %280 = arith.addf %277, %279 : vector<8x512xf32>
    %281 = vector.extract_strided_slice %280 {offsets = [0, 0], sizes = [8, 384], strides = [1, 1]} : vector<8x512xf32> to vector<8x384xf32>
    %282 = arith.negf %281 : vector<8x384xf32>
    %283 = math.exp %282 : vector<8x384xf32>
    %cst_71 = arith.constant 1.000000e+00 : f32
    %284 = vector.broadcast %cst_71 : f32 to vector<8x384xf32>
    %285 = arith.addf %284, %283 : vector<8x384xf32>
    %286 = arith.divf %284, %285 : vector<8x384xf32>
    %287 = vector.extract_strided_slice %286 {offsets = [0, 0], sizes = [8, 128], strides = [1, 1]} : vector<8x384xf32> to vector<8x128xf32>
    %288 = vector.extract_strided_slice %286 {offsets = [0, 128], sizes = [8, 128], strides = [1, 1]} : vector<8x384xf32> to vector<8x128xf32>
    %289 = vector.extract_strided_slice %286 {offsets = [0, 256], sizes = [8, 128], strides = [1, 1]} : vector<8x384xf32> to vector<8x128xf32>
    %290 = vector.extract_strided_slice %280 {offsets = [0, 384], sizes = [8, 128], strides = [1, 1]} : vector<8x512xf32> to vector<8x128xf32>
    %291 = math.tanh %290 : vector<8x128xf32>
    %292 = arith.mulf %288, %273 : vector<8x128xf32>
    %293 = arith.mulf %287, %291 : vector<8x128xf32>
    %294 = arith.addf %292, %293 : vector<8x128xf32>
    %295 = math.tanh %294 : vector<8x128xf32>
    %296 = arith.mulf %289, %295 : vector<8x128xf32>
    %c32_72 = arith.constant 32 : index
    %c0_73 = arith.constant 0 : index
    %297 = vector.load %arg10[%c32_72, %c0_73] : memref<64x128xf32, #tpu.memory_space<vmem>>, vector<8x128xf32>
    tpu.vector_store %arg10[%c32_72, %c0_73], %296 {strides = array<i32>} : memref<64x128xf32, #tpu.memory_space<vmem>>, vector<8x128xf32>,
    %298 = vector.extract_strided_slice %189 {offsets = [40, 0], sizes = [8, 512], strides = [1, 1]} : vector<64x512xf32> to vector<8x512xf32>
    %299 = arith.truncf %296 : vector<8x128xf32> to vector<8x128xbf16>
    %cst_74 = arith.constant dense<0.000000e+00> : vector<8x512xf32>
    %300 = tpu.matmul %299, %192, %cst_74 {dimension_numbers = #tpu.dot_dimension_numbers<[1], [0], [0], [1], [0, 0, 1, 1], [], []>} : vector<8x128xbf16>, vector<128x512xbf16>, vector<8x512xf32> -> vector<8x512xf32>
    %301 = arith.addf %298, %300 : vector<8x512xf32>
    %302 = vector.extract_strided_slice %301 {offsets = [0, 0], sizes = [8, 384], strides = [1, 1]} : vector<8x512xf32> to vector<8x384xf32>
    %303 = arith.negf %302 : vector<8x384xf32>
    %304 = math.exp %303 : vector<8x384xf32>
    %cst_75 = arith.constant 1.000000e+00 : f32
    %305 = vector.broadcast %cst_75 : f32 to vector<8x384xf32>
    %306 = arith.addf %305, %304 : vector<8x384xf32>
    %307 = arith.divf %305, %306 : vector<8x384xf32>
    %308 = vector.extract_strided_slice %307 {offsets = [0, 0], sizes = [8, 128], strides = [1, 1]} : vector<8x384xf32> to vector<8x128xf32>
    %309 = vector.extract_strided_slice %307 {offsets = [0, 128], sizes = [8, 128], strides = [1, 1]} : vector<8x384xf32> to vector<8x128xf32>
    %310 = vector.extract_strided_slice %307 {offsets = [0, 256], sizes = [8, 128], strides = [1, 1]} : vector<8x384xf32> to vector<8x128xf32>
    %311 = vector.extract_strided_slice %301 {offsets = [0, 384], sizes = [8, 128], strides = [1, 1]} : vector<8x512xf32> to vector<8x128xf32>
    %312 = math.tanh %311 : vector<8x128xf32>
    %313 = arith.mulf %309, %294 : vector<8x128xf32>
    %314 = arith.mulf %308, %312 : vector<8x128xf32>
    %315 = arith.addf %313, %314 : vector<8x128xf32>
    %316 = math.tanh %315 : vector<8x128xf32>
    %317 = arith.mulf %310, %316 : vector<8x128xf32>
    %c40_76 = arith.constant 40 : index
    %c0_77 = arith.constant 0 : index
    %318 = vector.load %arg10[%c40_76, %c0_77] : memref<64x128xf32, #tpu.memory_space<vmem>>, vector<8x128xf32>
    tpu.vector_store %arg10[%c40_76, %c0_77], %317 {strides = array<i32>} : memref<64x128xf32, #tpu.memory_space<vmem>>, vector<8x128xf32>,
    %319 = vector.extract_strided_slice %189 {offsets = [48, 0], sizes = [8, 512], strides = [1, 1]} : vector<64x512xf32> to vector<8x512xf32>
    %320 = arith.truncf %317 : vector<8x128xf32> to vector<8x128xbf16>
    %cst_78 = arith.constant dense<0.000000e+00> : vector<8x512xf32>
    %321 = tpu.matmul %320, %192, %cst_78 {dimension_numbers = #tpu.dot_dimension_numbers<[1], [0], [0], [1], [0, 0, 1, 1], [], []>} : vector<8x128xbf16>, vector<128x512xbf16>, vector<8x512xf32> -> vector<8x512xf32>
    %322 = arith.addf %319, %321 : vector<8x512xf32>
    %323 = vector.extract_strided_slice %322 {offsets = [0, 0], sizes = [8, 384], strides = [1, 1]} : vector<8x512xf32> to vector<8x384xf32>
    %324 = arith.negf %323 : vector<8x384xf32>
    %325 = math.exp %324 : vector<8x384xf32>
    %cst_79 = arith.constant 1.000000e+00 : f32
    %326 = vector.broadcast %cst_79 : f32 to vector<8x384xf32>
    %327 = arith.addf %326, %325 : vector<8x384xf32>
    %328 = arith.divf %326, %327 : vector<8x384xf32>
    %329 = vector.extract_strided_slice %328 {offsets = [0, 0], sizes = [8, 128], strides = [1, 1]} : vector<8x384xf32> to vector<8x128xf32>
    %330 = vector.extract_strided_slice %328 {offsets = [0, 128], sizes = [8, 128], strides = [1, 1]} : vector<8x384xf32> to vector<8x128xf32>
    %331 = vector.extract_strided_slice %328 {offsets = [0, 256], sizes = [8, 128], strides = [1, 1]} : vector<8x384xf32> to vector<8x128xf32>
    %332 = vector.extract_strided_slice %322 {offsets = [0, 384], sizes = [8, 128], strides = [1, 1]} : vector<8x512xf32> to vector<8x128xf32>
    %333 = math.tanh %332 : vector<8x128xf32>
    %334 = arith.mulf %330, %315 : vector<8x128xf32>
    %335 = arith.mulf %329, %333 : vector<8x128xf32>
    %336 = arith.addf %334, %335 : vector<8x128xf32>
    %337 = math.tanh %336 : vector<8x128xf32>
    %338 = arith.mulf %331, %337 : vector<8x128xf32>
    %c48_80 = arith.constant 48 : index
    %c0_81 = arith.constant 0 : index
    %339 = vector.load %arg10[%c48_80, %c0_81] : memref<64x128xf32, #tpu.memory_space<vmem>>, vector<8x128xf32>
    tpu.vector_store %arg10[%c48_80, %c0_81], %338 {strides = array<i32>} : memref<64x128xf32, #tpu.memory_space<vmem>>, vector<8x128xf32>,
    %340 = vector.extract_strided_slice %189 {offsets = [56, 0], sizes = [8, 512], strides = [1, 1]} : vector<64x512xf32> to vector<8x512xf32>
    %341 = arith.truncf %338 : vector<8x128xf32> to vector<8x128xbf16>
    %cst_82 = arith.constant dense<0.000000e+00> : vector<8x512xf32>
    %342 = tpu.matmul %341, %192, %cst_82 {dimension_numbers = #tpu.dot_dimension_numbers<[1], [0], [0], [1], [0, 0, 1, 1], [], []>} : vector<8x128xbf16>, vector<128x512xbf16>, vector<8x512xf32> -> vector<8x512xf32>
    %343 = arith.addf %340, %342 : vector<8x512xf32>
    %344 = vector.extract_strided_slice %343 {offsets = [0, 0], sizes = [8, 384], strides = [1, 1]} : vector<8x512xf32> to vector<8x384xf32>
    %345 = arith.negf %344 : vector<8x384xf32>
    %346 = math.exp %345 : vector<8x384xf32>
    %cst_83 = arith.constant 1.000000e+00 : f32
    %347 = vector.broadcast %cst_83 : f32 to vector<8x384xf32>
    %348 = arith.addf %347, %346 : vector<8x384xf32>
    %349 = arith.divf %347, %348 : vector<8x384xf32>
    %350 = vector.extract_strided_slice %349 {offsets = [0, 0], sizes = [8, 128], strides = [1, 1]} : vector<8x384xf32> to vector<8x128xf32>
    %351 = vector.extract_strided_slice %349 {offsets = [0, 128], sizes = [8, 128], strides = [1, 1]} : vector<8x384xf32> to vector<8x128xf32>
    %352 = vector.extract_strided_slice %349 {offsets = [0, 256], sizes = [8, 128], strides = [1, 1]} : vector<8x384xf32> to vector<8x128xf32>
    %353 = vector.extract_strided_slice %343 {offsets = [0, 384], sizes = [8, 128], strides = [1, 1]} : vector<8x512xf32> to vector<8x128xf32>
    %354 = math.tanh %353 : vector<8x128xf32>
    %355 = arith.mulf %351, %336 : vector<8x128xf32>
    %356 = arith.mulf %350, %354 : vector<8x128xf32>
    %357 = arith.addf %355, %356 : vector<8x128xf32>
    %358 = math.tanh %357 : vector<8x128xf32>
    %359 = arith.mulf %352, %358 : vector<8x128xf32>
    %c56_84 = arith.constant 56 : index
    %c0_85 = arith.constant 0 : index
    %360 = vector.load %arg10[%c56_84, %c0_85] : memref<64x128xf32, #tpu.memory_space<vmem>>, vector<8x128xf32>
    tpu.vector_store %arg10[%c56_84, %c0_85], %359 {strides = array<i32>} : memref<64x128xf32, #tpu.memory_space<vmem>>, vector<8x128xf32>,
    %c0_86 = arith.constant 0 : index
    %c0_87 = arith.constant 0 : index
    %361 = vector.load %arg15[%c0_86, %c0_87] : memref<8x128xf32, #tpu.memory_space<vmem>>, vector<8x128xf32>
    tpu.vector_store %arg15[%c0_86, %c0_87], %359 {strides = array<i32>} : memref<8x128xf32, #tpu.memory_space<vmem>>, vector<8x128xf32>,
    %c0_88 = arith.constant 0 : index
    %c0_89 = arith.constant 0 : index
    %362 = vector.load %arg16[%c0_88, %c0_89] : memref<8x128xf32, #tpu.memory_space<vmem>>, vector<8x128xf32>
    tpu.vector_store %arg16[%c0_88, %c0_89], %357 {strides = array<i32>} : memref<8x128xf32, #tpu.memory_space<vmem>>, vector<8x128xf32>,
    %c0_i32_90 = arith.constant 0 : i32
    %363 = arith.cmpi eq, %arg0, %c0_i32_90 : i32
    %364 = arith.extui %363 : i1 to i32
    %c0_i32_91 = arith.constant 0 : i32
    %365 = arith.cmpi ne, %364, %c0_i32_91 : i32
    scf.if %365 {
      %c0_92 = arith.constant 0 : index
      %c0_93 = arith.constant 0 : index
      %c0_94 = arith.constant 0 : index
      %366 = vector.load %arg11[%c0_92, %c0_93, %c0_94] : memref<2x8x128xf32, #tpu.memory_space<vmem>>, vector<1x8x128xf32>
      %367 = vector.shape_cast %366 : vector<1x8x128xf32> to vector<8x128xf32>
      %368 = vector.shape_cast %179 : vector<8x128xf32> to vector<1x8x128xf32>
      tpu.vector_store %arg11[%c0_92, %c0_93, %c0_94], %368 {strides = array<i32>} : memref<2x8x128xf32, #tpu.memory_space<vmem>>, vector<1x8x128xf32>,
      %c1 = arith.constant 1 : index
      %c0_95 = arith.constant 0 : index
      %c0_96 = arith.constant 0 : index
      %369 = vector.load %arg11[%c1, %c0_95, %c0_96] : memref<2x8x128xf32, #tpu.memory_space<vmem>>, vector<1x8x128xf32>
      %370 = vector.shape_cast %369 : vector<1x8x128xf32> to vector<8x128xf32>
      %371 = vector.shape_cast %359 : vector<8x128xf32> to vector<1x8x128xf32>
      tpu.vector_store %arg11[%c1, %c0_95, %c0_96], %371 {strides = array<i32>} : memref<2x8x128xf32, #tpu.memory_space<vmem>>, vector<1x8x128xf32>,
      %c0_97 = arith.constant 0 : index
      %c0_98 = arith.constant 0 : index
      %c0_99 = arith.constant 0 : index
      %372 = vector.load %arg12[%c0_97, %c0_98, %c0_99] : memref<2x8x128xf32, #tpu.memory_space<vmem>>, vector<1x8x128xf32>
      %373 = vector.shape_cast %372 : vector<1x8x128xf32> to vector<8x128xf32>
      %374 = vector.shape_cast %177 : vector<8x128xf32> to vector<1x8x128xf32>
      tpu.vector_store %arg12[%c0_97, %c0_98, %c0_99], %374 {strides = array<i32>} : memref<2x8x128xf32, #tpu.memory_space<vmem>>, vector<1x8x128xf32>,
      %c1_100 = arith.constant 1 : index
      %c0_101 = arith.constant 0 : index
      %c0_102 = arith.constant 0 : index
      %375 = vector.load %arg12[%c1_100, %c0_101, %c0_102] : memref<2x8x128xf32, #tpu.memory_space<vmem>>, vector<1x8x128xf32>
      %376 = vector.shape_cast %375 : vector<1x8x128xf32> to vector<8x128xf32>
      %377 = vector.shape_cast %357 : vector<8x128xf32> to vector<1x8x128xf32>
      tpu.vector_store %arg12[%c1_100, %c0_101, %c0_102], %377 {strides = array<i32>} : memref<2x8x128xf32, #tpu.memory_space<vmem>>, vector<1x8x128xf32>,
    } else {
    }
    return
  }
  func.func @transform_0(%arg0: i32) -> (i32, i32) {
    %c0_i32 = arith.constant 0 : i32
    %c0_i32_0 = arith.constant 0 : i32
    return %arg0, %c0_i32 : i32, i32
  }
  func.func @transform_1(%arg0: i32) -> (i32, i32) {
    %c0_i32 = arith.constant 0 : i32
    %c0_i32_0 = arith.constant 0 : i32
    %c0_i32_1 = arith.constant 0 : i32
    return %c0_i32, %c0_i32_0 : i32, i32
  }
  func.func @transform_2(%arg0: i32) -> (i32, i32) {
    %c0_i32 = arith.constant 0 : i32
    %c0_i32_0 = arith.constant 0 : i32
    %c0_i32_1 = arith.constant 0 : i32
    return %c0_i32, %c0_i32_0 : i32, i32
  }
  func.func @transform_3(%arg0: i32) -> (i32, i32) {
    %c0_i32 = arith.constant 0 : i32
    %c0_i32_0 = arith.constant 0 : i32
    %c0_i32_1 = arith.constant 0 : i32
    return %c0_i32, %c0_i32_0 : i32, i32
  }
  func.func @transform_4(%arg0: i32) -> (i32, i32) {
    %c0_i32 = arith.constant 0 : i32
    %c0_i32_0 = arith.constant 0 : i32
    %c0_i32_1 = arith.constant 0 : i32
    return %c0_i32, %c0_i32_0 : i32, i32
  }
  func.func @transform_5(%arg0: i32) -> (i32, i32) {
    %c0_i32 = arith.constant 0 : i32
    %c0_i32_0 = arith.constant 0 : i32
    %c0_i32_1 = arith.constant 0 : i32
    return %c0_i32, %c0_i32_0 : i32, i32
  }
  func.func @transform_6(%arg0: i32) -> (i32, i32) {
    %c0_i32 = arith.constant 0 : i32
    %c0_i32_0 = arith.constant 0 : i32
    %c0_i32_1 = arith.constant 0 : i32
    return %c0_i32, %c0_i32_0 : i32, i32
  }
  func.func @transform_7(%arg0: i32) -> (i32, i32, i32) {
    %c0_i32 = arith.constant 0 : i32
    %c0_i32_0 = arith.constant 0 : i32
    %c0_i32_1 = arith.constant 0 : i32
    %c0_i32_2 = arith.constant 0 : i32
    return %c0_i32, %c0_i32_0, %c0_i32_1 : i32, i32, i32
  }
  func.func @transform_8(%arg0: i32) -> (i32, i32, i32) {
    %c0_i32 = arith.constant 0 : i32
    %c0_i32_0 = arith.constant 0 : i32
    %c0_i32_1 = arith.constant 0 : i32
    %c0_i32_2 = arith.constant 0 : i32
    return %c0_i32, %c0_i32_0, %c0_i32_1 : i32, i32, i32
  }
  func.func @transform_9(%arg0: i32) -> (i32, i32) {
    %c0_i32 = arith.constant 0 : i32
    %c0_i32_0 = arith.constant 0 : i32
    return %arg0, %c0_i32 : i32, i32
  }
  func.func @transform_10(%arg0: i32) -> (i32, i32, i32) {
    %c0_i32 = arith.constant 0 : i32
    %c0_i32_0 = arith.constant 0 : i32
    %c0_i32_1 = arith.constant 0 : i32
    %c0_i32_2 = arith.constant 0 : i32
    return %c0_i32, %c0_i32_0, %c0_i32_1 : i32, i32, i32
  }
  func.func @transform_11(%arg0: i32) -> (i32, i32, i32) {
    %c0_i32 = arith.constant 0 : i32
    %c0_i32_0 = arith.constant 0 : i32
    %c0_i32_1 = arith.constant 0 : i32
    %c0_i32_2 = arith.constant 0 : i32
    return %c0_i32, %c0_i32_0, %c0_i32_1 : i32, i32, i32
  }
}

module attributes {stable_mosaic.version = 11 : i64} {
  func.func @_fc_out_kernel(%arg0: i32, %arg1: i32, %arg2: memref<64x128xf32, #tpu.memory_space<vmem>>, %arg3: memref<128x128xbf16, #tpu.memory_space<vmem>>, %arg4: memref<1x128xf32, #tpu.memory_space<vmem>>, %arg5: memref<64x1xf32, #tpu.memory_space<vmem>>, %arg6: memref<64x128xf32, #tpu.memory_space<vmem>>) attributes {dimension_semantics = [#tpu.dimension_semantics<parallel>, #tpu.dimension_semantics<parallel>], iteration_bounds = array<i64: 1, 1>, scalar_prefetch = 0 : i64, scratch_operands = 0 : i64, tpu.core_type = #tpu.core_type<tc>, window_params = [{transform_indices = @transform_0, window_bounds = array<i64: 64, 128>}, {transform_indices = @transform_1, window_bounds = array<i64: 128, 128>}, {transform_indices = @transform_2, window_bounds = array<i64: 1, 128>}, {transform_indices = @transform_3, window_bounds = array<i64: 64, 1>}, {transform_indices = @transform_4, window_bounds = array<i64: 64, 128>}]} {
    %c0 = arith.constant 0 : index
    %c0_0 = arith.constant 0 : index
    %0 = vector.load %arg2[%c0, %c0_0] : memref<64x128xf32, #tpu.memory_space<vmem>>, vector<64x128xf32>
    %1 = arith.truncf %0 : vector<64x128xf32> to vector<64x128xbf16>
    %c0_1 = arith.constant 0 : index
    %c0_2 = arith.constant 0 : index
    %2 = vector.load %arg3[%c0_1, %c0_2] : memref<128x128xbf16, #tpu.memory_space<vmem>>, vector<128x128xbf16>
    %cst = arith.constant dense<0.000000e+00> : vector<64x128xf32>
    %3 = tpu.matmul %1, %2, %cst {dimension_numbers = #tpu.dot_dimension_numbers<[1], [0], [0], [1], [0, 0, 1, 1], [], []>} : vector<64x128xbf16>, vector<128x128xbf16>, vector<64x128xf32> -> vector<64x128xf32>
    %c0_3 = arith.constant 0 : index
    %c0_4 = arith.constant 0 : index
    %4 = vector.load %arg4[%c0_3, %c0_4] : memref<1x128xf32, #tpu.memory_space<vmem>>, vector<1x128xf32>
    %5 = vector.broadcast %4 : vector<1x128xf32> to vector<64x128xf32>
    %6 = arith.addf %3, %5 : vector<64x128xf32>
    %cst_5 = arith.constant 1.000000e+00 : f32
    %7 = vector.broadcast %cst_5 : f32 to vector<64x128xf32>
    %8 = arith.mulf %6, %7 : vector<64x128xf32>
    %c0_6 = arith.constant 0 : index
    %c0_7 = arith.constant 0 : index
    %9 = vector.load %arg5[%c0_6, %c0_7] : memref<64x1xf32, #tpu.memory_space<vmem>>, vector<64x1xf32>
    %10 = vector.broadcast %9 : vector<64x1xf32> to vector<64x128xf32>
    %11 = arith.subf %8, %10 : vector<64x128xf32>
    %c0_8 = arith.constant 0 : index
    %c0_9 = arith.constant 0 : index
    %12 = vector.load %arg6[%c0_8, %c0_9] : memref<64x128xf32, #tpu.memory_space<vmem>>, vector<64x128xf32>
    tpu.vector_store %arg6[%c0_8, %c0_9], %11 {strides = array<i32>} : memref<64x128xf32, #tpu.memory_space<vmem>>, vector<64x128xf32>,
    return
  }
  func.func @transform_0(%arg0: i32, %arg1: i32) -> (i32, i32) {
    %c0_i32 = arith.constant 0 : i32
    %c0_i32_0 = arith.constant 0 : i32
    return %arg0, %c0_i32 : i32, i32
  }
  func.func @transform_1(%arg0: i32, %arg1: i32) -> (i32, i32) {
    %c0_i32 = arith.constant 0 : i32
    %c0_i32_0 = arith.constant 0 : i32
    return %c0_i32, %arg1 : i32, i32
  }
  func.func @transform_2(%arg0: i32, %arg1: i32) -> (i32, i32) {
    %c0_i32 = arith.constant 0 : i32
    %c0_i32_0 = arith.constant 0 : i32
    return %c0_i32, %arg1 : i32, i32
  }
  func.func @transform_3(%arg0: i32, %arg1: i32) -> (i32, i32) {
    %c0_i32 = arith.constant 0 : i32
    %c0_i32_0 = arith.constant 0 : i32
    return %arg0, %c0_i32 : i32, i32
  }
  func.func @transform_4(%arg0: i32, %arg1: i32) -> (i32, i32) {
    %c0_i32 = arith.constant 0 : i32
    return %arg0, %arg1 : i32, i32
  }
}

</mosaic_0001>

<llo_original>
// kernel: tpu_custom_call.1
$region0: #{tpu_custom_call.1}
  #allocation0 [shape = 'u32[]', space=smem, size = 0x4, offset = 0x4, fixed_abs, tag = 'smem constant byte address 0x4 - core index']
  #allocation1 [shape = 'u32[144,128]{1,0:T(1,128)}', space=vmem, size = 0x12000, scoped, tag = 'internal scratch']
  %s0 = inlined_call_operand.hbm [shape: f32[8,128], index: 0, kind: input, shape index: {}]
  %s1 = inlined_call_operand.hbm [shape: f32[16,128], index: 1, kind: output, shape index: {}]
  %s2 = sld [smem:[#allocation0]]
  $region41: #{tpu_custom_call.1} parent=0
    _
  %s4 = ssub.s32 1, %s2
  %s5 = scalar_select 0, %s4, %s2
  $region1: #{tpu_custom_call.1} parent=0
    #allocation2 [shape = 'u8[4096]{0}', space=vmem, size = 0x1000, scoped, tag = 'input window, operand 0, single buffered']
    #allocation3 [shape = 's32[2]{0}', space=sflag, size = 0x8, scoped, tag = 'scoped memory for tpu_custom_call.1']
    #allocation4 [shape = 's32[2]{0}', space=sflag, size = 0x8, scoped, tag = 'scoped memory for tpu_custom_call.1']
    #allocation5 [shape = 'u8[8192]{0}', space=vmem, size = 0x2000, scoped, tag = 'output window, operand 0']
    %6 = vsyncpa [#allocation3], 0
    %7 = vsyncpa [#allocation4], 0
    %s8 = scalar_lea.sflag [#allocation4], 1
    %9 = vsyncpa %s8, 0
    loop: start=0, step=1, limit=4
    $region2: #{tpu_custom_call.1} parent=1 // loop_pre_header
      _
    $region3: #{tpu_custom_call.1} parent=1 // loop_header
      %s11 = sphi 0, %s15
      %p12 = scmp.ge.s32.totalorder %s11, 4
      %s19 = sphi 0, %s19
      %s21 = sphi 0, %s19
      %s22 = sphi 0, %s21
      %s36 = sphi 0, %s22
      %s42 = sphi 0, %s44
      %s45 = sphi 0, %s42
      %s46 = sphi 0, %s45
      %s62 = sphi 0, %s46
    $region4: #{tpu_custom_call.1} parent=1 // loop_header_branch
      %14 = sbr.rel (%p12) target = $region8
    $region5: #{tpu_custom_call.1} parent=1 // loop_body
      %s16 = ssub.s32 %s11, 1
      %s17 = ssub.s32 %s11, 2
      %s18 = sadd.s32 %s11, 1
      %s20 = sadd.s32 %s19, 1
      %p23 = scmp.eq.s32.totalorder %s11, 1
      %p24 = scmp.ne.s32.totalorder %s19, %s21
      %p25 = scmp.eq.s32.totalorder %s11, 0
      %p26 = por %p24, %p25
      %p27 = scmp.ne.s32.totalorder %s19, %s21
      %p28 = scmp.eq.s32.totalorder %s16, 1
      %p29 = por %p27, %p28
      %p30 = scmp.ne.s32.totalorder %s21, %s22
      %p31 = scmp.eq.s32.totalorder %s16, 0
      %p32 = por %p30, %p31
      %p33 = scmp.ne.s32.totalorder %s21, %s22
      %p34 = scmp.eq.s32.totalorder %s17, 1
      %p35 = por %p33, %p34
      %p37 = scmp.ne.s32.totalorder %s22, %s36
      %p38 = scmp.eq.s32.totalorder %s17, 0
      %p39 = por %p37, %p38
      %s40 = ssub.s32 %s11, %s18
      %p41 = scmp.eq.s32.totalorder %s40, 0
      %s43 = sadd.s32 %s42, 1
      %s44 = scalar_select %p41, %s42, %s43
      %p47 = pneg %p41
      %p48 = scmp.eq.s32.totalorder %s11, 1
      %p49 = por %p47, %p48
      %p50 = scmp.ne.s32.totalorder %s42, %s45
      %p51 = scmp.eq.s32.totalorder %s11, 0
      %p52 = por %p50, %p51
      %p53 = scmp.ne.s32.totalorder %s42, %s45
      %p54 = scmp.eq.s32.totalorder %s16, 1
      %p55 = por %p53, %p54
      %p56 = scmp.ne.s32.totalorder %s45, %s46
      %p57 = scmp.eq.s32.totalorder %s16, 0
      %p58 = por %p56, %p57
      %p59 = scmp.ne.s32.totalorder %s45, %s46
      %p60 = scmp.eq.s32.totalorder %s17, 1
      %p61 = por %p59, %p60
      %p63 = scmp.ne.s32.totalorder %s46, %s62
      %p64 = scmp.eq.s32.totalorder %s17, 0
      %p65 = por %p63, %p64
      %p66 = scmp.le.s32.totalorder 1, %s11
      %p67 = scmp.lt.s32.totalorder %s11, 3
      %p68 = pnand %p66, %p67
      %p69 = pneg %p68
      // Predicated region
      $region9: #{tpu_custom_call.1} parent=5 // pred_check
        _
      $region10: #{tpu_custom_call.1} parent=5 // pred_check_branch
        %71 = sbr.rel (%p68) target = $region12
      $region11: #{tpu_custom_call.1} parent=5 // pred_region
        %s72 = ssub.s32 %s11, 1
        // Predicated region
        $region13: #{tpu_custom_call.1} parent=11 // pred_check
          %p73 = pneg %p32
        $region14: #{tpu_custom_call.1} parent=11 // pred_check_branch
          %75 = sbr.rel (%p73) target = $region16
        $region15: #{tpu_custom_call.1} parent=11 // pred_region
          %s77 = ssub.s32 128, 128
          %78 = vsyncadd [#allocation3], %s77
          %s80 = sshll.u32 [#allocation2], 4
          %s81 = int_to_ptr.vmem [resolvable:$true] %s80
          %83 = dma.hbm_to_vmem [thread:$0]  %s0, 128, %s81, [#allocation3]
        $region16: #{tpu_custom_call.1} parent=11 // pred_fallthru
          _
      $region12: #{tpu_custom_call.1} parent=5 // pred_fallthru
        _
      %p84 = scmp.lt.s32.totalorder %s11, 2
      // Predicated region
      $region17: #{tpu_custom_call.1} parent=5 // pred_check
        %p85 = pneg %p84
      $region18: #{tpu_custom_call.1} parent=5 // pred_check_branch
        %87 = sbr.rel (%p85) target = $region20
      $region19: #{tpu_custom_call.1} parent=5 // pred_region
        _
      $region20: #{tpu_custom_call.1} parent=5 // pred_fallthru
        _
      %p88 = scmp.le.s32.totalorder 1, %s11
      %p89 = scmp.lt.s32.totalorder %s11, 3
      %p90 = pnand %p88, %p89
      %p91 = pneg %p90
      // Predicated region
      $region21: #{tpu_custom_call.1} parent=5 // pred_check
        _
      $region22: #{tpu_custom_call.1} parent=5 // pred_check_branch
        %93 = sbr.rel (%p90) target = $region24
      $region23: #{tpu_custom_call.1} parent=5 // pred_region
        %s94 = ssub.s32 %s11, 1
        // Predicated region
        $region25: #{tpu_custom_call.1} parent=23 // pred_check
          %p95 = pneg %p32
        $region26: #{tpu_custom_call.1} parent=23 // pred_check_branch
          %97 = sbr.rel (%p95) target = $region28
        $region27: #{tpu_custom_call.1} parent=23 // pred_region
          %98 = dma.done [#allocation3], 128
        $region28: #{tpu_custom_call.1} parent=23 // pred_fallthru
          _
        %p99 = pneg %p32
        %p100 = pneg %p29
        %p101 = pneg %p58
        %p102 = pneg %p55
        %s103 = sand.u32 %s45, 1
        %s104 = scalar_lea.sflag [#allocation4], %s103
        %s105 = sand.u32 %s45, 1
        %s106 = smul.addr %s105, 8
        %s107 = scalar_lea.vmem [#allocation5], %s106
        %v108 = vld [vmem:[#allocation2] sm:$0xff]
        %v109 = vadd.f32 %v108, 1.0
        %110 = vst [vmem:[%s107] sm:$0xff] %v109
        %s111 = sand.u32 %s45, 1
        %s112 = scalar_lea.sflag [#allocation4], %s111
        %s113 = sand.u32 %s45, 1
        %s114 = smul.addr %s113, 8
        %s115 = scalar_lea.vmem [#allocation5], %s114
        // Predicated region
        $region29: #{tpu_custom_call.1} parent=23 // pred_check
          %p116 = pneg %p55
        $region30: #{tpu_custom_call.1} parent=23 // pred_check_branch
          %118 = sbr.rel (%p116) target = $region32
        $region31: #{tpu_custom_call.1} parent=23 // pred_region
          %s120 = ssub.s32 128, 128
          %121 = vsyncadd %s112, %s120
          %s122 = smul.addr %s16, 128
          %s123 = scalar_lea.hbm %s1, %s122
          %s125 = sshll.u32 %s115, 4
          %s126 = int_to_ptr.vmem [resolvable:$true] %s125
          %128 = dma.vmem_to_hbm [thread:$0]  %s126, 128, %s123, %s112
        $region32: #{tpu_custom_call.1} parent=23 // pred_fallthru
          _
      $region24: #{tpu_custom_call.1} parent=5 // pred_fallthru
        _
      %p129 = scmp.le.s32.totalorder 2, %s11
      // Predicated region
      $region33: #{tpu_custom_call.1} parent=5 // pred_check
        %p130 = pneg %p129
      $region34: #{tpu_custom_call.1} parent=5 // pred_check_branch
        %132 = sbr.rel (%p130) target = $region36
      $region35: #{tpu_custom_call.1} parent=5 // pred_region
        %s133 = ssub.s32 %s11, 2
        // Predicated region
        $region37: #{tpu_custom_call.1} parent=35 // pred_check
          %p134 = pneg %p61
        $region38: #{tpu_custom_call.1} parent=35 // pred_check_branch
          %136 = sbr.rel (%p134) target = $region40
        $region39: #{tpu_custom_call.1} parent=35 // pred_region
          %s137 = sand.u32 %s46, 1
          %s138 = scalar_lea.sflag [#allocation4], %s137
          %s139 = sand.u32 %s46, 1
          %s140 = smul.addr %s139, 8
          %s141 = scalar_lea.vmem [#allocation5], %s140
          %142 = dma.done %s138, 128
        $region40: #{tpu_custom_call.1} parent=35 // pred_fallthru
          _
      $region36: #{tpu_custom_call.1} parent=5 // pred_fallthru
        _
    $region6: #{tpu_custom_call.1} parent=1 // loop_footer
      %s15 = sadd.s32 1, %s11
    $region7: #{tpu_custom_call.1} parent=1 // loop_footer_branch
      %10 = sbr.rel target = $region3
    $region8: #{tpu_custom_call.1} parent=1 // loop_exit
      _
    %143 = vsyncpa [#allocation3], 1
    %s144 = scalar_lea.sflag [#allocation3], 1
    %145 = vsyncpa %s144, 1
    %146 = vsyncpa [#allocation4], 1
    %s147 = scalar_lea.sflag [#allocation4], 1
    %148 = vsyncpa %s147, 1

// kernel: text_generation_forward.5
$region0: #{text_generation_forward.5}
  #allocation0 [shape = 'u32[]', space=smem, size = 0x4, offset = 0x4, fixed_abs, tag = 'smem constant byte address 0x4 - core index']
  #allocation1 [shape = 'u32[144,128]{1,0:T(1,128)}', space=vmem, size = 0x12000, scoped, tag = 'internal scratch']
  %s0 = inlined_call_operand.vmem [shape: f32[64,128], index: 0, kind: input, shape index: {}]
  %s1 = inlined_call_operand.vmem [shape: bf16[128,128], index: 1, kind: input, shape index: {}]
  %s2 = inlined_call_operand.vmem [shape: f32[1,128], index: 2, kind: input, shape index: {}]
  %s3 = inlined_call_operand.vmem [shape: f32[64,1], index: 3, kind: input, shape index: {}]
  %s4 = inlined_call_operand.vmem [shape: f32[64,128], index: 4, kind: output, shape index: {}]
  %s5 = sld [smem:[#allocation0]]
  $region26: #{text_generation_forward.5} parent=0
    _
  %s7 = ssub.s32 1, %s5
  %s8 = scalar_select 0, %s7, %s5
  // Predicated region
  $region2: #{text_generation_forward.5} parent=0 // pred_check
    _
  $region3: #{text_generation_forward.5} parent=0 // pred_check_branch
    %10 = sbr.rel (0) target = $region5
  $region4: #{text_generation_forward.5} parent=0 // pred_region
    _
  $region5: #{text_generation_forward.5} parent=0 // pred_fallthru
    _
  // Predicated region
  $region6: #{text_generation_forward.5} parent=0 // pred_check
    _
  $region7: #{text_generation_forward.5} parent=0 // pred_check_branch
    %12 = sbr.rel (0) target = $region9
  $region8: #{text_generation_forward.5} parent=0 // pred_region
    _
  $region9: #{text_generation_forward.5} parent=0 // pred_fallthru
    _
  // Predicated region
  $region10: #{text_generation_forward.5} parent=0 // pred_check
    _
  $region11: #{text_generation_forward.5} parent=0 // pred_check_branch
    %14 = sbr.rel (0) target = $region13
  $region12: #{text_generation_forward.5} parent=0 // pred_region
    _
  $region13: #{text_generation_forward.5} parent=0 // pred_fallthru
    _
  // Predicated region
  $region14: #{text_generation_forward.5} parent=0 // pred_check
    _
  $region15: #{text_generation_forward.5} parent=0 // pred_check_branch
    %16 = sbr.rel (0) target = $region17
  $region16: #{text_generation_forward.5} parent=0 // pred_region
    _
  $region17: #{text_generation_forward.5} parent=0 // pred_fallthru
    _
  %v18 = vld [vmem:[%s0] sm:$0xff]
  %v19 = vld [vmem:[%s0 + $0x8] sm:$0xff]
  %v20 = vld [vmem:[%s0 + $0x10] sm:$0xff]
  %v21 = vld [vmem:[%s0 + $0x18] sm:$0xff]
  %v22 = vld [vmem:[%s0 + $0x20] sm:$0xff]
  %v23 = vld [vmem:[%s0 + $0x28] sm:$0xff]
  %v24 = vld [vmem:[%s0 + $0x30] sm:$0xff]
  %v25 = vld [vmem:[%s0 + $0x38] sm:$0xff]
  %v26 = vpack.c.bf16 %v19, %v18
  %v27 = vpack.c.bf16 %v21, %v20
  %v28 = vpack.c.bf16 %v23, %v22
  %v29 = vpack.c.bf16 %v25, %v24
  %v30 = vld [vmem:[%s1] sm:$0xf]
  %v31 = vld [vmem:[%s1 + $0x4] sm:$0xf]
  %v32 = vld [vmem:[%s1 + $0x8] sm:$0xf]
  %v33 = vld [vmem:[%s1 + $0xc] sm:$0xf]
  %v34 = vld [vmem:[%s1 + $0x10] sm:$0xf]
  %v35 = vld [vmem:[%s1 + $0x14] sm:$0xf]
  %v36 = vld [vmem:[%s1 + $0x18] sm:$0xf]
  %v37 = vld [vmem:[%s1 + $0x1c] sm:$0xf]
  %v38 = vld [vmem:[%s1 + $0x20] sm:$0xf]
  %v39 = vld [vmem:[%s1 + $0x24] sm:$0xf]
  %v40 = vld [vmem:[%s1 + $0x28] sm:$0xf]
  %v41 = vld [vmem:[%s1 + $0x2c] sm:$0xf]
  %v42 = vld [vmem:[%s1 + $0x30] sm:$0xf]
  %v43 = vld [vmem:[%s1 + $0x34] sm:$0xf]
  %v44 = vld [vmem:[%s1 + $0x38] sm:$0xf]
  %v45 = vld [vmem:[%s1 + $0x3c] sm:$0xf]
  %v46 = vld [vmem:[%s2] sm:$0x1]
  %v48 = vlaneseq
  %v49 = vshrl.u32 %v48, 7
  %v50 = vsub.s32 0, %v49
  %v51 = vrot.slane %v46, %v50
  %v69 = vunpack.c.l.b16 %v30
  %v70 = vunpack.c.l.b16 %v31
  %v71 = vunpack.c.l.b16 %v32
  %v72 = vunpack.c.l.b16 %v33
  %v73 = vunpack.c.l.b16 %v34
  %v74 = vunpack.c.l.b16 %v35
  %v75 = vunpack.c.l.b16 %v36
  %v76 = vunpack.c.l.b16 %v37
  %v77 = vunpack.c.l.b16 %v38
  %v78 = vunpack.c.l.b16 %v39
  %v79 = vunpack.c.l.b16 %v40
  %v80 = vunpack.c.l.b16 %v41
  %v81 = vunpack.c.l.b16 %v42
  %v82 = vunpack.c.l.b16 %v43
  %v83 = vunpack.c.l.b16 %v44
  %v84 = vunpack.c.l.b16 %v45
  %v85 = vpack.c.b16 %v70, %v69
  %v86 = vpack.c.b16 %v72, %v71
  %v87 = vpack.c.b16 %v74, %v73
  %v88 = vpack.c.b16 %v76, %v75
  %v89 = vpack.c.b16 %v78, %v77
  %v90 = vpack.c.b16 %v80, %v79
  %v91 = vpack.c.b16 %v82, %v81
  %v92 = vpack.c.b16 %v84, %v83
  %101 = vmatprep.subr.bf16.mxu0 0
  %102 = vmatpush1.bf16.msra.mxu0 %v85
  %103 = vmatprep.subr.bf16.mxu0 0
  %104 = vmatpush1.bf16.msra.mxu0 %v86
  %105 = vmatprep.subr.bf16.mxu0 0
  %106 = vmatpush1.bf16.msra.mxu0 %v87
  %107 = vmatprep.subr.bf16.mxu0 0
  %108 = vmatpush1.bf16.msra.mxu0 %v88
  %109 = vmatprep.subr.bf16.mxu0 0
  %110 = vmatpush1.bf16.msra.mxu0 %v89
  %111 = vmatprep.subr.bf16.mxu0 0
  %112 = vmatpush1.bf16.msra.mxu0 %v90
  %113 = vmatprep.subr.bf16.mxu0 0
  %114 = vmatpush1.bf16.msra.mxu0 %v91
  %115 = vmatprep.subr.bf16.mxu0 0
  %116 = vmatpush1.bf16.msra.mxu0 %v92
  %117 = vmatprep.subr.bf16.mxu0 0
  %118 = vmatpush1.bf16.msra.mxu0 0
  %119 = vmatprep.subr.bf16.mxu0 0
  %120 = vmatpush1.bf16.msra.mxu0 0
  %121 = vmatprep.subr.bf16.mxu0 0
  %122 = vmatpush1.bf16.msra.mxu0 0
  %123 = vmatprep.subr.bf16.mxu0 0
  %124 = vmatpush1.bf16.msra.mxu0 0
  %125 = vmatprep.subr.bf16.mxu0 0
  %126 = vmatpush1.bf16.msra.mxu0 0
  %127 = vmatprep.subr.bf16.mxu0 0
  %128 = vmatpush1.bf16.msra.mxu0 0
  %129 = vmatprep.subr.bf16.mxu0 0
  %130 = vmatpush1.bf16.msra.mxu0 0
  %131 = vmatprep.subr.bf16.mxu0 0
  %132 = vmatpush1.bf16.msra.mxu0 0
  %133 = vmatprep.mubr.bf16.mxu0 0
  %134 = vmatmul.mubr.bf16.gmra.mrb[0].mxu0 %v26
  %v135 = vpop.f32.mrb[0].mxu0
  %v136 = vadd.f32 %v51, %v135
  %v137 = vpop.f32.mrb[0].mxu0
  %v138 = vpop.f32.mrb[0].mxu0
  %v139 = vadd.f32 %v51, %v138
  %v140 = vpop.f32.mrb[0].mxu0
  %141 = vmatprep.mubr.bf16.mxu0 0
  %142 = vmatmul.mubr.bf16.gmra.mrb[0].mxu0 %v27
  %v143 = vpop.f32.mrb[0].mxu0
  %v144 = vadd.f32 %v51, %v143
  %v145 = vpop.f32.mrb[0].mxu0
  %v146 = vpop.f32.mrb[0].mxu0
  %v147 = vadd.f32 %v51, %v146
  %v148 = vpop.f32.mrb[0].mxu0
  %149 = vmatprep.mubr.bf16.mxu0 0
  %150 = vmatmul.mubr.bf16.gmra.mrb[0].mxu0 %v28
  %v151 = vpop.f32.mrb[0].mxu0
  %v152 = vadd.f32 %v51, %v151
  %v153 = vpop.f32.mrb[0].mxu0
  %v154 = vpop.f32.mrb[0].mxu0
  %v155 = vadd.f32 %v51, %v154
  %v156 = vpop.f32.mrb[0].mxu0
  %157 = vmatprep.mubr.bf16.mxu0 0
  %158 = vmatmul.mubr.bf16.gmra.mrb[0].mxu0 %v29
  %v159 = vpop.f32.mrb[0].mxu0
  %v160 = vadd.f32 %v51, %v159
  %v161 = vpop.f32.mrb[0].mxu0
  %v162 = vpop.f32.mrb[0].mxu0
  %v163 = vadd.f32 %v51, %v162
  %v164 = vpop.f32.mrb[0].mxu0
  %165 = vdwg.mxu0
  %v166 = vld [vmem:[%s3] sm:$0xff]
  %v167 = vld [vmem:[%s3 + $0x8] sm:$0xff]
  %v168 = vld [vmem:[%s3 + $0x10] sm:$0xff]
  %v169 = vld [vmem:[%s3 + $0x18] sm:$0xff]
  %v170 = vld [vmem:[%s3 + $0x20] sm:$0xff]
  %v171 = vld [vmem:[%s3 + $0x28] sm:$0xff]
  %v172 = vld [vmem:[%s3 + $0x30] sm:$0xff]
  %v173 = vld [vmem:[%s3 + $0x38] sm:$0xff]
  %175 = vset.pattern.permute.xlu0 0
  %176 = vperm.xlu0 %175, %v166
  %v177 = vpop.permute.xlu0 %176
  %180 = vset.pattern.permute.xlu0 0
  %181 = vperm.xlu0 %180, %v167
  %v182 = vpop.permute.xlu0 %181
  %185 = vset.pattern.permute.xlu0 0
  %186 = vperm.xlu0 %185, %v168
  %v187 = vpop.permute.xlu0 %186
  %190 = vset.pattern.permute.xlu0 0
  %191 = vperm.xlu0 %190, %v169
  %v192 = vpop.permute.xlu0 %191
  %195 = vset.pattern.permute.xlu0 0
  %196 = vperm.xlu0 %195, %v170
  %v197 = vpop.permute.xlu0 %196
  %200 = vset.pattern.permute.xlu0 0
  %201 = vperm.xlu0 %200, %v171
  %v202 = vpop.permute.xlu0 %201
  %205 = vset.pattern.permute.xlu0 0
  %206 = vperm.xlu0 %205, %v172
  %v207 = vpop.permute.xlu0 %206
  %210 = vset.pattern.permute.xlu0 0
  %211 = vperm.xlu0 %210, %v173
  %v212 = vpop.permute.xlu0 %211
  %v214 = vsub.f32 %v136, %v177
  %v215 = vsub.f32 %v139, %v182
  %v216 = vsub.f32 %v144, %v187
  %v217 = vsub.f32 %v147, %v192
  %v218 = vsub.f32 %v152, %v197
  %v219 = vsub.f32 %v155, %v202
  %v220 = vsub.f32 %v160, %v207
  %v221 = vsub.f32 %v163, %v212
  %222 = vst [vmem:[%s4] sm:$0xff] %v214
  %223 = vst [vmem:[%s4 + $0x8] sm:$0xff] %v215
  %224 = vst [vmem:[%s4 + $0x10] sm:$0xff] %v216
  %225 = vst [vmem:[%s4 + $0x18] sm:$0xff] %v217
  %226 = vst [vmem:[%s4 + $0x20] sm:$0xff] %v218
  %227 = vst [vmem:[%s4 + $0x28] sm:$0xff] %v219
  %228 = vst [vmem:[%s4 + $0x30] sm:$0xff] %v220
  %229 = vst [vmem:[%s4 + $0x38] sm:$0xff] %v221
  // Predicated region
  $region18: #{text_generation_forward.5} parent=0 // pred_check
    _
  $region19: #{text_generation_forward.5} parent=0 // pred_check_branch
    %231 = sbr.rel (0) target = $region21
  $region20: #{text_generation_forward.5} parent=0 // pred_region
    _
  $region21: #{text_generation_forward.5} parent=0 // pred_fallthru
    _
  // Predicated region
  $region22: #{text_generation_forward.5} parent=0 // pred_check
    _
  $region23: #{text_generation_forward.5} parent=0 // pred_check_branch
    %233 = sbr.rel (0) target = $region25
  $region24: #{text_generation_forward.5} parent=0 // pred_region
    _
  $region25: #{text_generation_forward.5} parent=0 // pred_fallthru
    _

// kernel: text_generation_forward.4
$region0: #{text_generation_forward.4}
  #allocation0 [shape = 'u32[]', space=smem, size = 0x4, offset = 0x4, fixed_abs, tag = 'smem constant byte address 0x4 - core index']
  #allocation1 [shape = 'u32[144,128]{1,0:T(1,128)}', space=vmem, size = 0x12000, scoped, tag = 'internal scratch']
  #allocation2 [shape = 'f32[64,1]{1,0:T(8,128)}', space=vmem, size = 0x8000, scoped, tag = 'scratch operand']
  #allocation3 [shape = 'f32[64,1]{1,0:T(8,128)}', space=vmem, size = 0x8000, scoped, tag = 'scratch operand']
  %s0 = inlined_call_operand.vmem [shape: f32[64,128], index: 0, kind: input, shape index: {}]
  %s1 = inlined_call_operand.vmem [shape: bf16[128,128], index: 1, kind: input, shape index: {}]
  %s2 = inlined_call_operand.vmem [shape: f32[1,128], index: 2, kind: input, shape index: {}]
  %s3 = inlined_call_operand.vmem [shape: f32[64,1], index: 3, kind: output, shape index: {}]
  %s4 = sld [smem:[#allocation0]]
  $region30: #{text_generation_forward.4} parent=0
    _
  %s6 = ssub.s32 1, %s4
  %s7 = scalar_select 0, %s6, %s4
  // Predicated region
  $region2: #{text_generation_forward.4} parent=0 // pred_check
    _
  $region3: #{text_generation_forward.4} parent=0 // pred_check_branch
    %9 = sbr.rel (0) target = $region5
  $region4: #{text_generation_forward.4} parent=0 // pred_region
    _
  $region5: #{text_generation_forward.4} parent=0 // pred_fallthru
    _
  // Predicated region
  $region6: #{text_generation_forward.4} parent=0 // pred_check
    _
  $region7: #{text_generation_forward.4} parent=0 // pred_check_branch
    %11 = sbr.rel (0) target = $region9
  $region8: #{text_generation_forward.4} parent=0 // pred_region
    _
  $region9: #{text_generation_forward.4} parent=0 // pred_fallthru
    _
  // Predicated region
  $region10: #{text_generation_forward.4} parent=0 // pred_check
    _
  $region11: #{text_generation_forward.4} parent=0 // pred_check_branch
    %13 = sbr.rel (0) target = $region13
  $region12: #{text_generation_forward.4} parent=0 // pred_region
    _
  $region13: #{text_generation_forward.4} parent=0 // pred_fallthru
    _
  %p15 = scmp.eq.s32.totalorder 0, 0
  // Predicated region
  $region14: #{text_generation_forward.4} parent=0 // pred_check
    %p16 = pneg %p15
  $region15: #{text_generation_forward.4} parent=0 // pred_check_branch
    %18 = sbr.rel (%p16) target = $region17
  $region16: #{text_generation_forward.4} parent=0 // pred_region
    %vm19 = vcmask 7168
    %20 = vst.msk [vmem:[#allocation2] sm:$0xff] %vm19, -inf
    %21 = vst.msk [vmem:[#allocation2 + $0x8] sm:$0xff] %vm19, -inf
    %22 = vst.msk [vmem:[#allocation2 + $0x10] sm:$0xff] %vm19, -inf
    %23 = vst.msk [vmem:[#allocation2 + $0x18] sm:$0xff] %vm19, -inf
    %24 = vst.msk [vmem:[#allocation2 + $0x20] sm:$0xff] %vm19, -inf
    %25 = vst.msk [vmem:[#allocation2 + $0x28] sm:$0xff] %vm19, -inf
    %26 = vst.msk [vmem:[#allocation2 + $0x30] sm:$0xff] %vm19, -inf
    %27 = vst.msk [vmem:[#allocation2 + $0x38] sm:$0xff] %vm19, -inf
    %28 = vst.msk [vmem:[#allocation3] sm:$0xff] %vm19, 0.0
    %29 = vst.msk [vmem:[#allocation3 + $0x8] sm:$0xff] %vm19, 0.0
    %30 = vst.msk [vmem:[#allocation3 + $0x10] sm:$0xff] %vm19, 0.0
    %31 = vst.msk [vmem:[#allocation3 + $0x18] sm:$0xff] %vm19, 0.0
    %32 = vst.msk [vmem:[#allocation3 + $0x20] sm:$0xff] %vm19, 0.0
    %33 = vst.msk [vmem:[#allocation3 + $0x28] sm:$0xff] %vm19, 0.0
    %34 = vst.msk [vmem:[#allocation3 + $0x30] sm:$0xff] %vm19, 0.0
    %35 = vst.msk [vmem:[#allocation3 + $0x38] sm:$0xff] %vm19, 0.0
  $region17: #{text_generation_forward.4} parent=0 // pred_fallthru
    _
  %v36 = vld [vmem:[%s0] sm:$0xff]
  %v37 = vld [vmem:[%s0 + $0x8] sm:$0xff]
  %v38 = vld [vmem:[%s0 + $0x10] sm:$0xff]
  %v39 = vld [vmem:[%s0 + $0x18] sm:$0xff]
  %v40 = vld [vmem:[%s0 + $0x20] sm:$0xff]
  %v41 = vld [vmem:[%s0 + $0x28] sm:$0xff]
  %v42 = vld [vmem:[%s0 + $0x30] sm:$0xff]
  %v43 = vld [vmem:[%s0 + $0x38] sm:$0xff]
  %v44 = vpack.c.bf16 %v37, %v36
  %v45 = vpack.c.bf16 %v39, %v38
  %v46 = vpack.c.bf16 %v41, %v40
  %v47 = vpack.c.bf16 %v43, %v42
  %v48 = vld [vmem:[%s1] sm:$0xf]
  %v49 = vld [vmem:[%s1 + $0x4] sm:$0xf]
  %v50 = vld [vmem:[%s1 + $0x8] sm:$0xf]
  %v51 = vld [vmem:[%s1 + $0xc] sm:$0xf]
  %v52 = vld [vmem:[%s1 + $0x10] sm:$0xf]
  %v53 = vld [vmem:[%s1 + $0x14] sm:$0xf]
  %v54 = vld [vmem:[%s1 + $0x18] sm:$0xf]
  %v55 = vld [vmem:[%s1 + $0x1c] sm:$0xf]
  %v56 = vld [vmem:[%s1 + $0x20] sm:$0xf]
  %v57 = vld [vmem:[%s1 + $0x24] sm:$0xf]
  %v58 = vld [vmem:[%s1 + $0x28] sm:$0xf]
  %v59 = vld [vmem:[%s1 + $0x2c] sm:$0xf]
  %v60 = vld [vmem:[%s1 + $0x30] sm:$0xf]
  %v61 = vld [vmem:[%s1 + $0x34] sm:$0xf]
  %v62 = vld [vmem:[%s1 + $0x38] sm:$0xf]
  %v63 = vld [vmem:[%s1 + $0x3c] sm:$0xf]
  %v64 = vld [vmem:[%s2] sm:$0x1]
  %v66 = vlaneseq
  %v67 = vshrl.u32 %v66, 7
  %v68 = vsub.s32 0, %v67
  %v69 = vrot.slane %v64, %v68
  %v87 = vunpack.c.l.b16 %v48
  %v88 = vunpack.c.l.b16 %v49
  %v89 = vunpack.c.l.b16 %v50
  %v90 = vunpack.c.l.b16 %v51
  %v91 = vunpack.c.l.b16 %v52
  %v92 = vunpack.c.l.b16 %v53
  %v93 = vunpack.c.l.b16 %v54
  %v94 = vunpack.c.l.b16 %v55
  %v95 = vunpack.c.l.b16 %v56
  %v96 = vunpack.c.l.b16 %v57
  %v97 = vunpack.c.l.b16 %v58
  %v98 = vunpack.c.l.b16 %v59
  %v99 = vunpack.c.l.b16 %v60
  %v100 = vunpack.c.l.b16 %v61
  %v101 = vunpack.c.l.b16 %v62
  %v102 = vunpack.c.l.b16 %v63
  %v103 = vpack.c.b16 %v88, %v87
  %v104 = vpack.c.b16 %v90, %v89
  %v105 = vpack.c.b16 %v92, %v91
  %v106 = vpack.c.b16 %v94, %v93
  %v107 = vpack.c.b16 %v96, %v95
  %v108 = vpack.c.b16 %v98, %v97
  %v109 = vpack.c.b16 %v100, %v99
  %v110 = vpack.c.b16 %v102, %v101
  %119 = vmatprep.subr.bf16.mxu0 0
  %120 = vmatpush1.bf16.msra.mxu0 %v103
  %121 = vmatprep.subr.bf16.mxu0 0
  %122 = vmatpush1.bf16.msra.mxu0 %v104
  %123 = vmatprep.subr.bf16.mxu0 0
  %124 = vmatpush1.bf16.msra.mxu0 %v105
  %125 = vmatprep.subr.bf16.mxu0 0
  %126 = vmatpush1.bf16.msra.mxu0 %v106
  %127 = vmatprep.subr.bf16.mxu0 0
  %128 = vmatpush1.bf16.msra.mxu0 %v107
  %129 = vmatprep.subr.bf16.mxu0 0
  %130 = vmatpush1.bf16.msra.mxu0 %v108
  %131 = vmatprep.subr.bf16.mxu0 0
  %132 = vmatpush1.bf16.msra.mxu0 %v109
  %133 = vmatprep.subr.bf16.mxu0 0
  %134 = vmatpush1.bf16.msra.mxu0 %v110
  %135 = vmatprep.subr.bf16.mxu0 0
  %136 = vmatpush1.bf16.msra.mxu0 0
  %137 = vmatprep.subr.bf16.mxu0 0
  %138 = vmatpush1.bf16.msra.mxu0 0
  %139 = vmatprep.subr.bf16.mxu0 0
  %140 = vmatpush1.bf16.msra.mxu0 0
  %141 = vmatprep.subr.bf16.mxu0 0
  %142 = vmatpush1.bf16.msra.mxu0 0
  %143 = vmatprep.subr.bf16.mxu0 0
  %144 = vmatpush1.bf16.msra.mxu0 0
  %145 = vmatprep.subr.bf16.mxu0 0
  %146 = vmatpush1.bf16.msra.mxu0 0
  %147 = vmatprep.subr.bf16.mxu0 0
  %148 = vmatpush1.bf16.msra.mxu0 0
  %149 = vmatprep.subr.bf16.mxu0 0
  %150 = vmatpush1.bf16.msra.mxu0 0
  %151 = vmatprep.mubr.bf16.mxu0 0
  %152 = vmatmul.mubr.bf16.gmra.mrb[0].mxu0 %v44
  %v153 = vpop.f32.mrb[0].mxu0
  %v154 = vadd.f32 %v69, %v153
  %v155 = vpop.f32.mrb[0].mxu0
  %v156 = vpop.f32.mrb[0].mxu0
  %v157 = vadd.f32 %v69, %v156
  %v158 = vpop.f32.mrb[0].mxu0
  %159 = vmatprep.mubr.bf16.mxu0 0
  %160 = vmatmul.mubr.bf16.gmra.mrb[0].mxu0 %v45
  %v161 = vpop.f32.mrb[0].mxu0
  %v162 = vadd.f32 %v69, %v161
  %v163 = vpop.f32.mrb[0].mxu0
  %v164 = vpop.f32.mrb[0].mxu0
  %v165 = vadd.f32 %v69, %v164
  %v166 = vpop.f32.mrb[0].mxu0
  %167 = vmatprep.mubr.bf16.mxu0 0
  %168 = vmatmul.mubr.bf16.gmra.mrb[0].mxu0 %v46
  %v169 = vpop.f32.mrb[0].mxu0
  %v170 = vadd.f32 %v69, %v169
  %v171 = vpop.f32.mrb[0].mxu0
  %v172 = vpop.f32.mrb[0].mxu0
  %v173 = vadd.f32 %v69, %v172
  %v174 = vpop.f32.mrb[0].mxu0
  %175 = vmatprep.mubr.bf16.mxu0 0
  %176 = vmatmul.mubr.bf16.gmra.mrb[0].mxu0 %v47
  %v177 = vpop.f32.mrb[0].mxu0
  %v178 = vadd.f32 %v69, %v177
  %v179 = vpop.f32.mrb[0].mxu0
  %v180 = vpop.f32.mrb[0].mxu0
  %v181 = vadd.f32 %v69, %v180
  %v182 = vpop.f32.mrb[0].mxu0
  %183 = vdwg.mxu0
  %v184 = vld [vmem:[#allocation2] sm:$0xff]
  %v185 = vld [vmem:[#allocation2 + $0x8] sm:$0xff]
  %v186 = vld [vmem:[#allocation2 + $0x10] sm:$0xff]
  %v187 = vld [vmem:[#allocation2 + $0x18] sm:$0xff]
  %v188 = vld [vmem:[#allocation2 + $0x20] sm:$0xff]
  %v189 = vld [vmem:[#allocation2 + $0x28] sm:$0xff]
  %v190 = vld [vmem:[#allocation2 + $0x30] sm:$0xff]
  %v191 = vld [vmem:[#allocation2 + $0x38] sm:$0xff]
  %192 = vmax.xlane.f32.xlu0 %v154
  %v193 = vpop.xlane.xlu0 %192
  %194 = vmax.xlane.f32.xlu0 %v157
  %v195 = vpop.xlane.xlu0 %194
  %196 = vmax.xlane.f32.xlu0 %v162
  %v197 = vpop.xlane.xlu0 %196
  %198 = vmax.xlane.f32.xlu0 %v165
  %v199 = vpop.xlane.xlu0 %198
  %200 = vmax.xlane.f32.xlu0 %v170
  %v201 = vpop.xlane.xlu0 %200
  %202 = vmax.xlane.f32.xlu0 %v173
  %v203 = vpop.xlane.xlu0 %202
  %204 = vmax.xlane.f32.xlu0 %v178
  %v205 = vpop.xlane.xlu0 %204
  %206 = vmax.xlane.f32.xlu0 %v181
  %v207 = vpop.xlane.xlu0 %206
  %v208 = vmax.f32 %v184, %v193
  %v209 = vmax.f32 %v185, %v195
  %v210 = vmax.f32 %v186, %v197
  %v211 = vmax.f32 %v187, %v199
  %v212 = vmax.f32 %v188, %v201
  %v213 = vmax.f32 %v189, %v203
  %v214 = vmax.f32 %v190, %v205
  %v215 = vmax.f32 %v191, %v207
  %v216 = vld [vmem:[#allocation3] sm:$0xff]
  %v217 = vld [vmem:[#allocation3 + $0x8] sm:$0xff]
  %v218 = vld [vmem:[#allocation3 + $0x10] sm:$0xff]
  %v219 = vld [vmem:[#allocation3 + $0x18] sm:$0xff]
  %v220 = vld [vmem:[#allocation3 + $0x20] sm:$0xff]
  %v221 = vld [vmem:[#allocation3 + $0x28] sm:$0xff]
  %v222 = vld [vmem:[#allocation3 + $0x30] sm:$0xff]
  %v223 = vld [vmem:[#allocation3 + $0x38] sm:$0xff]
  %v224 = vsub.f32 %v184, %v208
  %v225 = vsub.f32 %v185, %v209
  %v226 = vsub.f32 %v186, %v210
  %v227 = vsub.f32 %v187, %v211
  %v228 = vsub.f32 %v188, %v212
  %v229 = vsub.f32 %v189, %v213
  %v230 = vsub.f32 %v190, %v214
  %v231 = vsub.f32 %v191, %v215
  %v232 = vmul.f32 %v224, 1.442695
  %v233 = vpow.pop %v232
  %v234 = vmul.f32 %v225, 1.442695
  %v235 = vpow.pop %v234
  %v236 = vmul.f32 %v226, 1.442695
  %v237 = vpow.pop %v236
  %v238 = vmul.f32 %v227, 1.442695
  %v239 = vpow.pop %v238
  %v240 = vmul.f32 %v228, 1.442695
  %v241 = vpow.pop %v240
  %v242 = vmul.f32 %v229, 1.442695
  %v243 = vpow.pop %v242
  %v244 = vmul.f32 %v230, 1.442695
  %v245 = vpow.pop %v244
  %v246 = vmul.f32 %v231, 1.442695
  %v247 = vpow.pop %v246
  %v248 = vmul.f32 %v216, %v233
  %v249 = vmul.f32 %v217, %v235
  %v250 = vmul.f32 %v218, %v237
  %v251 = vmul.f32 %v219, %v239
  %v252 = vmul.f32 %v220, %v241
  %v253 = vmul.f32 %v221, %v243
  %v254 = vmul.f32 %v222, %v245
  %v255 = vmul.f32 %v223, %v247
  %257 = vset.pattern.permute.xlu0 0
  %258 = vperm.xlu0 %257, %v208
  %v259 = vpop.permute.xlu0 %258
  %262 = vset.pattern.permute.xlu0 0
  %263 = vperm.xlu0 %262, %v209
  %v264 = vpop.permute.xlu0 %263
  %267 = vset.pattern.permute.xlu0 0
  %268 = vperm.xlu0 %267, %v210
  %v269 = vpop.permute.xlu0 %268
  %272 = vset.pattern.permute.xlu0 0
  %273 = vperm.xlu0 %272, %v211
  %v274 = vpop.permute.xlu0 %273
  %277 = vset.pattern.permute.xlu0 0
  %278 = vperm.xlu0 %277, %v212
  %v279 = vpop.permute.xlu0 %278
  %282 = vset.pattern.permute.xlu0 0
  %283 = vperm.xlu0 %282, %v213
  %v284 = vpop.permute.xlu0 %283
  %287 = vset.pattern.permute.xlu0 0
  %288 = vperm.xlu0 %287, %v214
  %v289 = vpop.permute.xlu0 %288
  %292 = vset.pattern.permute.xlu0 0
  %293 = vperm.xlu0 %292, %v215
  %v294 = vpop.permute.xlu0 %293
  %v296 = vsub.f32 %v154, %v259
  %v297 = vsub.f32 %v157, %v264
  %v298 = vsub.f32 %v162, %v269
  %v299 = vsub.f32 %v165, %v274
  %v300 = vsub.f32 %v170, %v279
  %v301 = vsub.f32 %v173, %v284
  %v302 = vsub.f32 %v178, %v289
  %v303 = vsub.f32 %v181, %v294
  %v304 = vmul.f32 %v296, 1.442695
  %v305 = vpow.pop %v304
  %v306 = vmul.f32 %v297, 1.442695
  %v307 = vpow.pop %v306
  %v308 = vmul.f32 %v298, 1.442695
  %v309 = vpow.pop %v308
  %v310 = vmul.f32 %v299, 1.442695
  %v311 = vpow.pop %v310
  %v312 = vmul.f32 %v300, 1.442695
  %v313 = vpow.pop %v312
  %v314 = vmul.f32 %v301, 1.442695
  %v315 = vpow.pop %v314
  %v316 = vmul.f32 %v302, 1.442695
  %v317 = vpow.pop %v316
  %v318 = vmul.f32 %v303, 1.442695
  %v319 = vpow.pop %v318
  %320 = vadd.xlane.f32.xlu0 %v305
  %v321 = vpop.xlane.xlu0 %320
  %322 = vadd.xlane.f32.xlu0 %v307
  %v323 = vpop.xlane.xlu0 %322
  %324 = vadd.xlane.f32.xlu0 %v309
  %v325 = vpop.xlane.xlu0 %324
  %326 = vadd.xlane.f32.xlu0 %v311
  %v327 = vpop.xlane.xlu0 %326
  %328 = vadd.xlane.f32.xlu0 %v313
  %v329 = vpop.xlane.xlu0 %328
  %330 = vadd.xlane.f32.xlu0 %v315
  %v331 = vpop.xlane.xlu0 %330
  %332 = vadd.xlane.f32.xlu0 %v317
  %v333 = vpop.xlane.xlu0 %332
  %334 = vadd.xlane.f32.xlu0 %v319
  %v335 = vpop.xlane.xlu0 %334
  %v336 = vadd.f32 %v248, %v321
  %v337 = vadd.f32 %v249, %v323
  %v338 = vadd.f32 %v250, %v325
  %v339 = vadd.f32 %v251, %v327
  %v340 = vadd.f32 %v252, %v329
  %v341 = vadd.f32 %v253, %v331
  %v342 = vadd.f32 %v254, %v333
  %v343 = vadd.f32 %v255, %v335
  %vm344 = vcmask 7168
  %345 = vst.msk [vmem:[#allocation3] sm:$0xff] %vm344, %v336
  %346 = vst.msk [vmem:[#allocation3 + $0x8] sm:$0xff] %vm344, %v337
  %347 = vst.msk [vmem:[#allocation3 + $0x10] sm:$0xff] %vm344, %v338
  %348 = vst.msk [vmem:[#allocation3 + $0x18] sm:$0xff] %vm344, %v339
  %349 = vst.msk [vmem:[#allocation3 + $0x20] sm:$0xff] %vm344, %v340
  %350 = vst.msk [vmem:[#allocation3 + $0x28] sm:$0xff] %vm344, %v341
  %351 = vst.msk [vmem:[#allocation3 + $0x30] sm:$0xff] %vm344, %v342
  %352 = vst.msk [vmem:[#allocation3 + $0x38] sm:$0xff] %vm344, %v343
  %353 = vst.msk [vmem:[#allocation2] sm:$0xff] %vm344, %v208
  %354 = vst.msk [vmem:[#allocation2 + $0x8] sm:$0xff] %vm344, %v209
  %355 = vst.msk [vmem:[#allocation2 + $0x10] sm:$0xff] %vm344, %v210
  %356 = vst.msk [vmem:[#allocation2 + $0x18] sm:$0xff] %vm344, %v211
  %357 = vst.msk [vmem:[#allocation2 + $0x20] sm:$0xff] %vm344, %v212
  %358 = vst.msk [vmem:[#allocation2 + $0x28] sm:$0xff] %vm344, %v213
  %359 = vst.msk [vmem:[#allocation2 + $0x30] sm:$0xff] %vm344, %v214
  %360 = vst.msk [vmem:[#allocation2 + $0x38] sm:$0xff] %vm344, %v215
  // Predicated region
  $region18: #{text_generation_forward.4} parent=0 // pred_check
    %p361 = pneg %p15
  $region19: #{text_generation_forward.4} parent=0 // pred_check_branch
    %363 = sbr.rel (%p361) target = $region21
  $region20: #{text_generation_forward.4} parent=0 // pred_region
    %v364 = vld [vmem:[#allocation2] sm:$0xff]
    %v365 = vld [vmem:[#allocation2 + $0x8] sm:$0xff]
    %v366 = vld [vmem:[#allocation2 + $0x10] sm:$0xff]
    %v367 = vld [vmem:[#allocation2 + $0x18] sm:$0xff]
    %v368 = vld [vmem:[#allocation2 + $0x20] sm:$0xff]
    %v369 = vld [vmem:[#allocation2 + $0x28] sm:$0xff]
    %v370 = vld [vmem:[#allocation2 + $0x30] sm:$0xff]
    %v371 = vld [vmem:[#allocation2 + $0x38] sm:$0xff]
    %v372 = vld [vmem:[#allocation3] sm:$0xff]
    %v373 = vld [vmem:[#allocation3 + $0x8] sm:$0xff]
    %v374 = vld [vmem:[#allocation3 + $0x10] sm:$0xff]
    %v375 = vld [vmem:[#allocation3 + $0x18] sm:$0xff]
    %v376 = vld [vmem:[#allocation3 + $0x20] sm:$0xff]
    %v377 = vld [vmem:[#allocation3 + $0x28] sm:$0xff]
    %v378 = vld [vmem:[#allocation3 + $0x30] sm:$0xff]
    %v379 = vld [vmem:[#allocation3 + $0x38] sm:$0xff]
    %v380 = vlog2.pop %v372
    %v381 = vmul.f32 %v380, 0.6931472
    %v382 = vlog2.pop %v373
    %v383 = vmul.f32 %v382, 0.6931472
    %v384 = vlog2.pop %v374
    %v385 = vmul.f32 %v384, 0.6931472
    %v386 = vlog2.pop %v375
    %v387 = vmul.f32 %v386, 0.6931472
    %v388 = vlog2.pop %v376
    %v389 = vmul.f32 %v388, 0.6931472
    %v390 = vlog2.pop %v377
    %v391 = vmul.f32 %v390, 0.6931472
    %v392 = vlog2.pop %v378
    %v393 = vmul.f32 %v392, 0.6931472
    %v394 = vlog2.pop %v379
    %v395 = vmul.f32 %v394, 0.6931472
    %v396 = vadd.f32 %v364, %v381
    %v397 = vadd.f32 %v365, %v383
    %v398 = vadd.f32 %v366, %v385
    %v399 = vadd.f32 %v367, %v387
    %v400 = vadd.f32 %v368, %v389
    %v401 = vadd.f32 %v369, %v391
    %v402 = vadd.f32 %v370, %v393
    %v403 = vadd.f32 %v371, %v395
    %404 = vst.msk [vmem:[%s3] sm:$0xff] %vm344, %v396
    %405 = vst.msk [vmem:[%s3 + $0x8] sm:$0xff] %vm344, %v397
    %406 = vst.msk [vmem:[%s3 + $0x10] sm:$0xff] %vm344, %v398
    %407 = vst.msk [vmem:[%s3 + $0x18] sm:$0xff] %vm344, %v399
    %408 = vst.msk [vmem:[%s3 + $0x20] sm:$0xff] %vm344, %v400
    %409 = vst.msk [vmem:[%s3 + $0x28] sm:$0xff] %vm344, %v401
    %410 = vst.msk [vmem:[%s3 + $0x30] sm:$0xff] %vm344, %v402
    %411 = vst.msk [vmem:[%s3 + $0x38] sm:$0xff] %vm344, %v403
  $region21: #{text_generation_forward.4} parent=0 // pred_fallthru
    _
  // Predicated region
  $region22: #{text_generation_forward.4} parent=0 // pred_check
    _
  $region23: #{text_generation_forward.4} parent=0 // pred_check_branch
    %413 = sbr.rel (0) target = $region25
  $region24: #{text_generation_forward.4} parent=0 // pred_region
    _
  $region25: #{text_generation_forward.4} parent=0 // pred_fallthru
    _
  // Predicated region
  $region26: #{text_generation_forward.4} parent=0 // pred_check
    _
  $region27: #{text_generation_forward.4} parent=0 // pred_check_branch
    %415 = sbr.rel (0) target = $region29
  $region28: #{text_generation_forward.4} parent=0 // pred_region
    _
  $region29: #{text_generation_forward.4} parent=0 // pred_fallthru
    _

// kernel: text_generation_forward.3
$region0: #{text_generation_forward.3}
  #allocation0 [shape = 'u32[]', space=smem, size = 0x4, offset = 0x4, fixed_abs, tag = 'smem constant byte address 0x4 - core index']
  #allocation1 [shape = 'u32[144,128]{1,0:T(1,128)}', space=vmem, size = 0x12000, scoped, tag = 'internal scratch']
  #allocation2 [shape = 'f32[8,128]{1,0:T(8,128)}', space=vmem, size = 0x1000, scoped, tag = 'scratch operand']
  #allocation3 [shape = 'f32[8,128]{1,0:T(8,128)}', space=vmem, size = 0x1000, scoped, tag = 'scratch operand']
  #allocation4 [shape = 'f32[8,128]{1,0:T(8,128)}', space=vmem, size = 0x1000, scoped, tag = 'scratch operand']
  #allocation5 [shape = 'f32[8,128]{1,0:T(8,128)}', space=vmem, size = 0x1000, scoped, tag = 'scratch operand']
  #allocation6 [shape = 'f32[64,128]{1,0:T(8,128)}', space=vmem, size = 0x8000, scoped, tag = 'scratch operand']
  %s0 = inlined_call_operand.vmem [shape: f32[64,128], index: 0, kind: input, shape index: {}]
  %s1 = inlined_call_operand.vmem [shape: bf16[128,512], index: 1, kind: input, shape index: {}]
  %s2 = inlined_call_operand.vmem [shape: bf16[128,512], index: 2, kind: input, shape index: {}]
  %s3 = inlined_call_operand.vmem [shape: f32[1,512], index: 3, kind: input, shape index: {}]
  %s4 = inlined_call_operand.vmem [shape: bf16[128,512], index: 4, kind: input, shape index: {}]
  %s5 = inlined_call_operand.hbm [shape: bf16[128,512], index: 5, kind: input, shape index: {}]
  %s6 = inlined_call_operand.vmem [shape: f32[1,512], index: 6, kind: input, shape index: {}]
  %s7 = inlined_call_operand.vmem [shape: f32[2,8,128], index: 7, kind: input, shape index: {}, may-alias: {7,8}]
  %s8 = inlined_call_operand.vmem [shape: f32[2,8,128], index: 8, kind: input, shape index: {}, may-alias: {7,8}]
  %s9 = inlined_call_operand.vmem [shape: f32[64,128], index: 9, kind: output, shape index: {0}]
  %s10 = inlined_call_operand.vmem [shape: f32[2,8,128], index: 10, kind: output, shape index: {1}]
  %s11 = inlined_call_operand.vmem [shape: f32[2,8,128], index: 11, kind: output, shape index: {2}]
  %12 = xla_tuple %s9, %s10, %s11
  %s13 = sld [smem:[#allocation0]]
  $region74: #{text_generation_forward.3} parent=0
    _
  %s15 = ssub.s32 1, %s13
  %s16 = scalar_select 0, %s15, %s13
  $region1: #{text_generation_forward.3} parent=0
    #allocation7 [shape = 'u8[131072]{0}', space=vmem, size = 0x20000, scoped, tag = 'input window, operand 5, single buffered']
    #allocation8 [shape = 's32[1]{0}', space=sflag, size = 0x4, scoped, tag = 'scoped memory for text_generation_forward.3']
    %17 = vsyncpa [#allocation8], 0
    // Predicated region
    $region2: #{text_generation_forward.3} parent=1 // pred_check
      _
    $region3: #{text_generation_forward.3} parent=1 // pred_check_branch
      %19 = sbr.rel (0) target = $region5
    $region4: #{text_generation_forward.3} parent=1 // pred_region
      _
    $region5: #{text_generation_forward.3} parent=1 // pred_fallthru
      _
    // Predicated region
    $region6: #{text_generation_forward.3} parent=1 // pred_check
      _
    $region7: #{text_generation_forward.3} parent=1 // pred_check_branch
      %21 = sbr.rel (0) target = $region9
    $region8: #{text_generation_forward.3} parent=1 // pred_region
      _
    $region9: #{text_generation_forward.3} parent=1 // pred_fallthru
      _
    // Predicated region
    $region10: #{text_generation_forward.3} parent=1 // pred_check
      _
    $region11: #{text_generation_forward.3} parent=1 // pred_check_branch
      %23 = sbr.rel (0) target = $region13
    $region12: #{text_generation_forward.3} parent=1 // pred_region
      _
    $region13: #{text_generation_forward.3} parent=1 // pred_fallthru
      _
    // Predicated region
    $region14: #{text_generation_forward.3} parent=1 // pred_check
      _
    $region15: #{text_generation_forward.3} parent=1 // pred_check_branch
      %25 = sbr.rel (0) target = $region17
    $region16: #{text_generation_forward.3} parent=1 // pred_region
      _
    $region17: #{text_generation_forward.3} parent=1 // pred_fallthru
      _
    // Predicated region
    $region18: #{text_generation_forward.3} parent=1 // pred_check
      _
    $region19: #{text_generation_forward.3} parent=1 // pred_check_branch
      %27 = sbr.rel (0) target = $region21
    $region20: #{text_generation_forward.3} parent=1 // pred_region
      _
    $region21: #{text_generation_forward.3} parent=1 // pred_fallthru
      _
    // Predicated region
    $region22: #{text_generation_forward.3} parent=1 // pred_check
      _
    $region23: #{text_generation_forward.3} parent=1 // pred_check_branch
      %29 = sbr.rel (0) target = $region25
    $region24: #{text_generation_forward.3} parent=1 // pred_region
      %s31 = ssub.s32 4096, 4096
      %32 = vsyncadd [#allocation8], %s31
      %s33 = sshll.u32 [#allocation7], 4
      %s34 = int_to_ptr.vmem [resolvable:$true] %s33
      %39 = dma.hbm_to_vmem [thread:$0]  %s5, 4096, %s34, [#allocation8], 256, 256, 16
    $region25: #{text_generation_forward.3} parent=1 // pred_fallthru
      _
    // Predicated region
    $region26: #{text_generation_forward.3} parent=1 // pred_check
      _
    $region27: #{text_generation_forward.3} parent=1 // pred_check_branch
      %41 = sbr.rel (0) target = $region29
    $region28: #{text_generation_forward.3} parent=1 // pred_region
      _
    $region29: #{text_generation_forward.3} parent=1 // pred_fallthru
      _
    // Predicated region
    $region30: #{text_generation_forward.3} parent=1 // pred_check
      _
    $region31: #{text_generation_forward.3} parent=1 // pred_check_branch
      %43 = sbr.rel (0) target = $region33
    $region32: #{text_generation_forward.3} parent=1 // pred_region
      _
    $region33: #{text_generation_forward.3} parent=1 // pred_fallthru
      _
    // Predicated region
    $region34: #{text_generation_forward.3} parent=1 // pred_check
      _
    $region35: #{text_generation_forward.3} parent=1 // pred_check_branch
      %45 = sbr.rel (0) target = $region37
    $region36: #{text_generation_forward.3} parent=1 // pred_region
      _
    $region37: #{text_generation_forward.3} parent=1 // pred_fallthru
      _
    // Predicated region
    $region38: #{text_generation_forward.3} parent=1 // pred_check
      _
    $region39: #{text_generation_forward.3} parent=1 // pred_check_branch
      %47 = sbr.rel (0) target = $region41
    $region40: #{text_generation_forward.3} parent=1 // pred_region
      %48 = dma.done [#allocation8], 4096
    $region41: #{text_generation_forward.3} parent=1 // pred_fallthru
      _
    %p50 = scmp.eq.s32.totalorder 0, 0
    // Predicated region
    $region42: #{text_generation_forward.3} parent=1 // pred_check
      %p51 = pneg %p50
    $region43: #{text_generation_forward.3} parent=1 // pred_check_branch
      %53 = sbr.rel (%p51) target = $region45
    $region44: #{text_generation_forward.3} parent=1 // pred_region
      %v54 = vld [vmem:[%s7] sm:$0xff]
      %55 = vst [vmem:[#allocation2] sm:$0xff] %v54
      %v56 = vld [vmem:[%s8] sm:$0xff]
      %57 = vst [vmem:[#allocation3] sm:$0xff] %v56
      %s58 = scalar_lea.vmem %s7, 8
      %v59 = vld [vmem:[%s58] sm:$0xff]
      %60 = vst [vmem:[#allocation4] sm:$0xff] %v59
      %s61 = scalar_lea.vmem %s8, 8
      %v62 = vld [vmem:[%s61] sm:$0xff]
      %63 = vst [vmem:[#allocation5] sm:$0xff] %v62
    $region45: #{text_generation_forward.3} parent=1 // pred_fallthru
      _
    %v64 = vld [vmem:[%s0] sm:$0xff]
    %v65 = vld [vmem:[%s0 + $0x8] sm:$0xff]
    %v66 = vld [vmem:[%s0 + $0x10] sm:$0xff]
    %v67 = vld [vmem:[%s0 + $0x18] sm:$0xff]
    %v68 = vld [vmem:[%s0 + $0x20] sm:$0xff]
    %v69 = vld [vmem:[%s0 + $0x28] sm:$0xff]
    %v70 = vld [vmem:[%s0 + $0x30] sm:$0xff]
    %v71 = vld [vmem:[%s0 + $0x38] sm:$0xff]
    %v72 = vpack.c.bf16 %v65, %v64
    %v73 = vpack.c.bf16 %v67, %v66
    %v74 = vpack.c.bf16 %v69, %v68
    %v75 = vpack.c.bf16 %v71, %v70
    %v76 = vld [vmem:[%s1] sm:$0xff]
    %v77 = vld [vmem:[%s1 + $0x8] sm:$0xff]
    %v78 = vld [vmem:[%s1 + $0x10] sm:$0xff]
    %v79 = vld [vmem:[%s1 + $0x18] sm:$0xff]
    %v80 = vld [vmem:[%s1 + $0x20] sm:$0xff]
    %v81 = vld [vmem:[%s1 + $0x28] sm:$0xff]
    %v82 = vld [vmem:[%s1 + $0x30] sm:$0xff]
    %v83 = vld [vmem:[%s1 + $0x38] sm:$0xff]
    %v84 = vld [vmem:[%s1 + $0x40] sm:$0xff]
    %v85 = vld [vmem:[%s1 + $0x48] sm:$0xff]
    %v86 = vld [vmem:[%s1 + $0x50] sm:$0xff]
    %v87 = vld [vmem:[%s1 + $0x58] sm:$0xff]
    %v88 = vld [vmem:[%s1 + $0x60] sm:$0xff]
    %v89 = vld [vmem:[%s1 + $0x68] sm:$0xff]
    %v90 = vld [vmem:[%s1 + $0x70] sm:$0xff]
    %v91 = vld [vmem:[%s1 + $0x78] sm:$0xff]
    %v92 = vld [vmem:[%s1 + $0x80] sm:$0xff]
    %v93 = vld [vmem:[%s1 + $0x88] sm:$0xff]
    %v94 = vld [vmem:[%s1 + $0x90] sm:$0xff]
    %v95 = vld [vmem:[%s1 + $0x98] sm:$0xff]
    %v96 = vld [vmem:[%s1 + $0xa0] sm:$0xff]
    %v97 = vld [vmem:[%s1 + $0xa8] sm:$0xff]
    %v98 = vld [vmem:[%s1 + $0xb0] sm:$0xff]
    %v99 = vld [vmem:[%s1 + $0xb8] sm:$0xff]
    %v100 = vld [vmem:[%s1 + $0xc0] sm:$0xff]
    %v101 = vld [vmem:[%s1 + $0xc8] sm:$0xff]
    %v102 = vld [vmem:[%s1 + $0xd0] sm:$0xff]
    %v103 = vld [vmem:[%s1 + $0xd8] sm:$0xff]
    %v104 = vld [vmem:[%s1 + $0xe0] sm:$0xff]
    %v105 = vld [vmem:[%s1 + $0xe8] sm:$0xff]
    %v106 = vld [vmem:[%s1 + $0xf0] sm:$0xff]
    %v107 = vld [vmem:[%s1 + $0xf8] sm:$0xff]
    %v108 = vld [vmem:[%s3] sm:$0xf]
    %v110 = vlaneseq
    %v111 = vshrl.u32 %v110, 7
    %v112 = vsub.s32 0, %v111
    %v113 = vrot.slane %v108, %v112
    %v114 = vlaneseq
    %v115 = vshrl.u32 %v114, 7
    %v116 = vsub.s32 1, %v115
    %v117 = vrot.slane %v108, %v116
    %v118 = vlaneseq
    %v119 = vshrl.u32 %v118, 7
    %v120 = vsub.s32 2, %v119
    %v121 = vrot.slane %v108, %v120
    %v122 = vlaneseq
    %v123 = vshrl.u32 %v122, 7
    %v124 = vsub.s32 3, %v123
    %v125 = vrot.slane %v108, %v124
    %v162 = vunpack.c.l.b16 %v76
    %v163 = vunpack.c.h.b16 %v76
    %v164 = vunpack.c.l.b16 %v77
    %v165 = vunpack.c.h.b16 %v77
    %v166 = vunpack.c.l.b16 %v78
    %v167 = vunpack.c.h.b16 %v78
    %v168 = vunpack.c.l.b16 %v79
    %v169 = vunpack.c.h.b16 %v79
    %v170 = vunpack.c.l.b16 %v80
    %v171 = vunpack.c.h.b16 %v80
    %v172 = vunpack.c.l.b16 %v81
    %v173 = vunpack.c.h.b16 %v81
    %v174 = vunpack.c.l.b16 %v82
    %v175 = vunpack.c.h.b16 %v82
    %v176 = vunpack.c.l.b16 %v83
    %v177 = vunpack.c.h.b16 %v83
    %v178 = vunpack.c.l.b16 %v84
    %v179 = vunpack.c.h.b16 %v84
    %v180 = vunpack.c.l.b16 %v85
    %v181 = vunpack.c.h.b16 %v85
    %v182 = vunpack.c.l.b16 %v86
    %v183 = vunpack.c.h.b16 %v86
    %v184 = vunpack.c.l.b16 %v87
    %v185 = vunpack.c.h.b16 %v87
    %v186 = vunpack.c.l.b16 %v88
    %v187 = vunpack.c.h.b16 %v88
    %v188 = vunpack.c.l.b16 %v89
    %v189 = vunpack.c.h.b16 %v89
    %v190 = vunpack.c.l.b16 %v90
    %v191 = vunpack.c.h.b16 %v90
    %v192 = vunpack.c.l.b16 %v91
    %v193 = vunpack.c.h.b16 %v91
    %v194 = vunpack.c.l.b16 %v92
    %v195 = vunpack.c.h.b16 %v92
    %v196 = vunpack.c.l.b16 %v93
    %v197 = vunpack.c.h.b16 %v93
    %v198 = vunpack.c.l.b16 %v94
    %v199 = vunpack.c.h.b16 %v94
    %v200 = vunpack.c.l.b16 %v95
    %v201 = vunpack.c.h.b16 %v95
    %v202 = vunpack.c.l.b16 %v96
    %v203 = vunpack.c.h.b16 %v96
    %v204 = vunpack.c.l.b16 %v97
    %v205 = vunpack.c.h.b16 %v97
    %v206 = vunpack.c.l.b16 %v98
    %v207 = vunpack.c.h.b16 %v98
    %v208 = vunpack.c.l.b16 %v99
    %v209 = vunpack.c.h.b16 %v99
    %v210 = vunpack.c.l.b16 %v100
    %v211 = vunpack.c.h.b16 %v100
    %v212 = vunpack.c.l.b16 %v101
    %v213 = vunpack.c.h.b16 %v101
    %v214 = vunpack.c.l.b16 %v102
    %v215 = vunpack.c.h.b16 %v102
    %v216 = vunpack.c.l.b16 %v103
    %v217 = vunpack.c.h.b16 %v103
    %v218 = vunpack.c.l.b16 %v104
    %v219 = vunpack.c.h.b16 %v104
    %v220 = vunpack.c.l.b16 %v105
    %v221 = vunpack.c.h.b16 %v105
    %v222 = vunpack.c.l.b16 %v106
    %v223 = vunpack.c.h.b16 %v106
    %v224 = vunpack.c.l.b16 %v107
    %v225 = vunpack.c.h.b16 %v107
    %v226 = vpack.c.b16 %v166, %v162
    %v227 = vpack.c.b16 %v167, %v163
    %v228 = vpack.c.b16 %v168, %v164
    %v229 = vpack.c.b16 %v169, %v165
    %v230 = vpack.c.b16 %v174, %v170
    %v231 = vpack.c.b16 %v175, %v171
    %v232 = vpack.c.b16 %v176, %v172
    %v233 = vpack.c.b16 %v177, %v173
    %v234 = vpack.c.b16 %v182, %v178
    %v235 = vpack.c.b16 %v183, %v179
    %v236 = vpack.c.b16 %v184, %v180
    %v237 = vpack.c.b16 %v185, %v181
    %v238 = vpack.c.b16 %v190, %v186
    %v239 = vpack.c.b16 %v191, %v187
    %v240 = vpack.c.b16 %v192, %v188
    %v241 = vpack.c.b16 %v193, %v189
    %v242 = vpack.c.b16 %v198, %v194
    %v243 = vpack.c.b16 %v199, %v195
    %v244 = vpack.c.b16 %v200, %v196
    %v245 = vpack.c.b16 %v201, %v197
    %v246 = vpack.c.b16 %v206, %v202
    %v247 = vpack.c.b16 %v207, %v203
    %v248 = vpack.c.b16 %v208, %v204
    %v249 = vpack.c.b16 %v209, %v205
    %v250 = vpack.c.b16 %v214, %v210
    %v251 = vpack.c.b16 %v215, %v211
    %v252 = vpack.c.b16 %v216, %v212
    %v253 = vpack.c.b16 %v217, %v213
    %v254 = vpack.c.b16 %v222, %v218
    %v255 = vpack.c.b16 %v223, %v219
    %v256 = vpack.c.b16 %v224, %v220
    %v257 = vpack.c.b16 %v225, %v221
    %290 = vmatprep.subr.bf16.mxu0 %v227
    %291 = vmatpush1.bf16.msra.mxu0 %v226
    %292 = vmatprep.subr.bf16.mxu0 %v231
    %293 = vmatpush1.bf16.msra.mxu0 %v230
    %294 = vmatprep.subr.bf16.mxu0 %v235
    %295 = vmatpush1.bf16.msra.mxu0 %v234
    %296 = vmatprep.subr.bf16.mxu0 %v239
    %297 = vmatpush1.bf16.msra.mxu0 %v238
    %298 = vmatprep.subr.bf16.mxu0 %v243
    %299 = vmatpush1.bf16.msra.mxu0 %v242
    %300 = vmatprep.subr.bf16.mxu0 %v247
    %301 = vmatpush1.bf16.msra.mxu0 %v246
    %302 = vmatprep.subr.bf16.mxu0 %v251
    %303 = vmatpush1.bf16.msra.mxu0 %v250
    %304 = vmatprep.subr.bf16.mxu0 %v255
    %305 = vmatpush1.bf16.msra.mxu0 %v254
    %306 = vmatprep.subr.bf16.mxu0 0
    %307 = vmatpush1.bf16.msra.mxu0 0
    %308 = vmatprep.subr.bf16.mxu0 0
    %309 = vmatpush1.bf16.msra.mxu0 0
    %310 = vmatprep.subr.bf16.mxu0 0
    %311 = vmatpush1.bf16.msra.mxu0 0
    %312 = vmatprep.subr.bf16.mxu0 0
    %313 = vmatpush1.bf16.msra.mxu0 0
    %314 = vmatprep.subr.bf16.mxu0 0
    %315 = vmatpush1.bf16.msra.mxu0 0
    %316 = vmatprep.subr.bf16.mxu0 0
    %317 = vmatpush1.bf16.msra.mxu0 0
    %318 = vmatprep.subr.bf16.mxu0 0
    %319 = vmatpush1.bf16.msra.mxu0 0
    %320 = vmatprep.subr.bf16.mxu0 0
    %321 = vmatpush1.bf16.msra.mxu0 0
    %322 = vmatprep.mubr.bf16.mxu0 0
    %323 = vmatmul.mubr.bf16.gmra.mrb[0].mxu0 %v72
    %v324 = vpop.f32.mrb[0].mxu0
    %v325 = vadd.f32 %v113, %v324
    %v326 = vpop.f32.mrb[0].mxu0
    %v327 = vadd.f32 %v117, %v326
    %v328 = vpop.f32.mrb[0].mxu0
    %v329 = vadd.f32 %v113, %v328
    %v330 = vpop.f32.mrb[0].mxu0
    %v331 = vadd.f32 %v117, %v330
    %332 = vmatprep.mubr.bf16.mxu0 0
    %333 = vmatmul.mubr.bf16.gmra.mrb[0].mxu0 %v73
    %v334 = vpop.f32.mrb[0].mxu0
    %v335 = vadd.f32 %v113, %v334
    %v336 = vpop.f32.mrb[0].mxu0
    %v337 = vadd.f32 %v117, %v336
    %v338 = vpop.f32.mrb[0].mxu0
    %v339 = vadd.f32 %v113, %v338
    %v340 = vpop.f32.mrb[0].mxu0
    %v341 = vadd.f32 %v117, %v340
    %342 = vmatprep.mubr.bf16.mxu0 0
    %343 = vmatmul.mubr.bf16.gmra.mrb[0].mxu0 %v74
    %v344 = vpop.f32.mrb[0].mxu0
    %v345 = vadd.f32 %v113, %v344
    %v346 = vpop.f32.mrb[0].mxu0
    %v347 = vadd.f32 %v117, %v346
    %v348 = vpop.f32.mrb[0].mxu0
    %v349 = vadd.f32 %v113, %v348
    %v350 = vpop.f32.mrb[0].mxu0
    %v351 = vadd.f32 %v117, %v350
    %352 = vmatprep.mubr.bf16.mxu0 0
    %353 = vmatmul.mubr.bf16.gmra.mrb[0].mxu0 %v75
    %v354 = vpop.f32.mrb[0].mxu0
    %v355 = vadd.f32 %v113, %v354
    %v356 = vpop.f32.mrb[0].mxu0
    %v357 = vadd.f32 %v117, %v356
    %v358 = vpop.f32.mrb[0].mxu0
    %v359 = vadd.f32 %v113, %v358
    %v360 = vpop.f32.mrb[0].mxu0
    %v361 = vadd.f32 %v117, %v360
    %362 = vdwg.mxu0
    %363 = vmatprep.subr.bf16.mxu0 %v229
    %364 = vmatpush1.bf16.msra.mxu0 %v228
    %365 = vmatprep.subr.bf16.mxu0 %v233
    %366 = vmatpush1.bf16.msra.mxu0 %v232
    %367 = vmatprep.subr.bf16.mxu0 %v237
    %368 = vmatpush1.bf16.msra.mxu0 %v236
    %369 = vmatprep.subr.bf16.mxu0 %v241
    %370 = vmatpush1.bf16.msra.mxu0 %v240
    %371 = vmatprep.subr.bf16.mxu0 %v245
    %372 = vmatpush1.bf16.msra.mxu0 %v244
    %373 = vmatprep.subr.bf16.mxu0 %v249
    %374 = vmatpush1.bf16.msra.mxu0 %v248
    %375 = vmatprep.subr.bf16.mxu0 %v253
    %376 = vmatpush1.bf16.msra.mxu0 %v252
    %377 = vmatprep.subr.bf16.mxu0 %v257
    %378 = vmatpush1.bf16.msra.mxu0 %v256
    %379 = vmatprep.subr.bf16.mxu0 0
    %380 = vmatpush1.bf16.msra.mxu0 0
    %381 = vmatprep.subr.bf16.mxu0 0
    %382 = vmatpush1.bf16.msra.mxu0 0
    %383 = vmatprep.subr.bf16.mxu0 0
    %384 = vmatpush1.bf16.msra.mxu0 0
    %385 = vmatprep.subr.bf16.mxu0 0
    %386 = vmatpush1.bf16.msra.mxu0 0
    %387 = vmatprep.subr.bf16.mxu0 0
    %388 = vmatpush1.bf16.msra.mxu0 0
    %389 = vmatprep.subr.bf16.mxu0 0
    %390 = vmatpush1.bf16.msra.mxu0 0
    %391 = vmatprep.subr.bf16.mxu0 0
    %392 = vmatpush1.bf16.msra.mxu0 0
    %393 = vmatprep.subr.bf16.mxu0 0
    %394 = vmatpush1.bf16.msra.mxu0 0
    %395 = vmatprep.mubr.bf16.mxu0 0
    %396 = vmatmul.mubr.bf16.gmra.mrb[0].mxu0 %v72
    %v397 = vpop.f32.mrb[0].mxu0
    %v398 = vadd.f32 %v121, %v397
    %v399 = vpop.f32.mrb[0].mxu0
    %v400 = vadd.f32 %v125, %v399
    %v401 = vpop.f32.mrb[0].mxu0
    %v402 = vadd.f32 %v121, %v401
    %v403 = vpop.f32.mrb[0].mxu0
    %v404 = vadd.f32 %v125, %v403
    %405 = vmatprep.mubr.bf16.mxu0 0
    %406 = vmatmul.mubr.bf16.gmra.mrb[0].mxu0 %v73
    %v407 = vpop.f32.mrb[0].mxu0
    %v408 = vadd.f32 %v121, %v407
    %v409 = vpop.f32.mrb[0].mxu0
    %v410 = vadd.f32 %v125, %v409
    %v411 = vpop.f32.mrb[0].mxu0
    %v412 = vadd.f32 %v121, %v411
    %v413 = vpop.f32.mrb[0].mxu0
    %v414 = vadd.f32 %v125, %v413
    %415 = vmatprep.mubr.bf16.mxu0 0
    %416 = vmatmul.mubr.bf16.gmra.mrb[0].mxu0 %v74
    %v417 = vpop.f32.mrb[0].mxu0
    %v418 = vadd.f32 %v121, %v417
    %v419 = vpop.f32.mrb[0].mxu0
    %v420 = vadd.f32 %v125, %v419
    %v421 = vpop.f32.mrb[0].mxu0
    %v422 = vadd.f32 %v121, %v421
    %v423 = vpop.f32.mrb[0].mxu0
    %v424 = vadd.f32 %v125, %v423
    %425 = vmatprep.mubr.bf16.mxu0 0
    %426 = vmatmul.mubr.bf16.gmra.mrb[0].mxu0 %v75
    %v427 = vpop.f32.mrb[0].mxu0
    %v428 = vadd.f32 %v121, %v427
    %v429 = vpop.f32.mrb[0].mxu0
    %v430 = vadd.f32 %v125, %v429
    %v431 = vpop.f32.mrb[0].mxu0
    %v432 = vadd.f32 %v121, %v431
    %v433 = vpop.f32.mrb[0].mxu0
    %v434 = vadd.f32 %v125, %v433
    %435 = vdwg.mxu0
    %v436 = vld [vmem:[#allocation2] sm:$0xff]
    %v437 = vld [vmem:[#allocation3] sm:$0xff]
    %v438 = vld [vmem:[%s2] sm:$0xff]
    %v439 = vld [vmem:[%s2 + $0x8] sm:$0xff]
    %v440 = vld [vmem:[%s2 + $0x10] sm:$0xff]
    %v441 = vld [vmem:[%s2 + $0x18] sm:$0xff]
    %v442 = vld [vmem:[%s2 + $0x20] sm:$0xff]
    %v443 = vld [vmem:[%s2 + $0x28] sm:$0xff]
    %v444 = vld [vmem:[%s2 + $0x30] sm:$0xff]
    %v445 = vld [vmem:[%s2 + $0x38] sm:$0xff]
    %v446 = vld [vmem:[%s2 + $0x40] sm:$0xff]
    %v447 = vld [vmem:[%s2 + $0x48] sm:$0xff]
    %v448 = vld [vmem:[%s2 + $0x50] sm:$0xff]
    %v449 = vld [vmem:[%s2 + $0x58] sm:$0xff]
    %v450 = vld [vmem:[%s2 + $0x60] sm:$0xff]
    %v451 = vld [vmem:[%s2 + $0x68] sm:$0xff]
    %v452 = vld [vmem:[%s2 + $0x70] sm:$0xff]
    %v453 = vld [vmem:[%s2 + $0x78] sm:$0xff]
    %v454 = vld [vmem:[%s2 + $0x80] sm:$0xff]
    %v455 = vld [vmem:[%s2 + $0x88] sm:$0xff]
    %v456 = vld [vmem:[%s2 + $0x90] sm:$0xff]
    %v457 = vld [vmem:[%s2 + $0x98] sm:$0xff]
    %v458 = vld [vmem:[%s2 + $0xa0] sm:$0xff]
    %v459 = vld [vmem:[%s2 + $0xa8] sm:$0xff]
    %v460 = vld [vmem:[%s2 + $0xb0] sm:$0xff]
    %v461 = vld [vmem:[%s2 + $0xb8] sm:$0xff]
    %v462 = vld [vmem:[%s2 + $0xc0] sm:$0xff]
    %v463 = vld [vmem:[%s2 + $0xc8] sm:$0xff]
    %v464 = vld [vmem:[%s2 + $0xd0] sm:$0xff]
    %v465 = vld [vmem:[%s2 + $0xd8] sm:$0xff]
    %v466 = vld [vmem:[%s2 + $0xe0] sm:$0xff]
    %v467 = vld [vmem:[%s2 + $0xe8] sm:$0xff]
    %v468 = vld [vmem:[%s2 + $0xf0] sm:$0xff]
    %v469 = vld [vmem:[%s2 + $0xf8] sm:$0xff]
    %v470 = vpack.c.bf16 %v436, %v436
    %v503 = vunpack.c.l.b16 %v438
    %v504 = vunpack.c.h.b16 %v438
    %v505 = vunpack.c.l.b16 %v439
    %v506 = vunpack.c.h.b16 %v439
    %v507 = vunpack.c.l.b16 %v440
    %v508 = vunpack.c.h.b16 %v440
    %v509 = vunpack.c.l.b16 %v441
    %v510 = vunpack.c.h.b16 %v441
    %v511 = vunpack.c.l.b16 %v442
    %v512 = vunpack.c.h.b16 %v442
    %v513 = vunpack.c.l.b16 %v443
    %v514 = vunpack.c.h.b16 %v443
    %v515 = vunpack.c.l.b16 %v444
    %v516 = vunpack.c.h.b16 %v444
    %v517 = vunpack.c.l.b16 %v445
    %v518 = vunpack.c.h.b16 %v445
    %v519 = vunpack.c.l.b16 %v446
    %v520 = vunpack.c.h.b16 %v446
    %v521 = vunpack.c.l.b16 %v447
    %v522 = vunpack.c.h.b16 %v447
    %v523 = vunpack.c.l.b16 %v448
    %v524 = vunpack.c.h.b16 %v448
    %v525 = vunpack.c.l.b16 %v449
    %v526 = vunpack.c.h.b16 %v449
    %v527 = vunpack.c.l.b16 %v450
    %v528 = vunpack.c.h.b16 %v450
    %v529 = vunpack.c.l.b16 %v451
    %v530 = vunpack.c.h.b16 %v451
    %v531 = vunpack.c.l.b16 %v452
    %v532 = vunpack.c.h.b16 %v452
    %v533 = vunpack.c.l.b16 %v453
    %v534 = vunpack.c.h.b16 %v453
    %v535 = vunpack.c.l.b16 %v454
    %v536 = vunpack.c.h.b16 %v454
    %v537 = vunpack.c.l.b16 %v455
    %v538 = vunpack.c.h.b16 %v455
    %v539 = vunpack.c.l.b16 %v456
    %v540 = vunpack.c.h.b16 %v456
    %v541 = vunpack.c.l.b16 %v457
    %v542 = vunpack.c.h.b16 %v457
    %v543 = vunpack.c.l.b16 %v458
    %v544 = vunpack.c.h.b16 %v458
    %v545 = vunpack.c.l.b16 %v459
    %v546 = vunpack.c.h.b16 %v459
    %v547 = vunpack.c.l.b16 %v460
    %v548 = vunpack.c.h.b16 %v460
    %v549 = vunpack.c.l.b16 %v461
    %v550 = vunpack.c.h.b16 %v461
    %v551 = vunpack.c.l.b16 %v462
    %v552 = vunpack.c.h.b16 %v462
    %v553 = vunpack.c.l.b16 %v463
    %v554 = vunpack.c.h.b16 %v463
    %v555 = vunpack.c.l.b16 %v464
    %v556 = vunpack.c.h.b16 %v464
    %v557 = vunpack.c.l.b16 %v465
    %v558 = vunpack.c.h.b16 %v465
    %v559 = vunpack.c.l.b16 %v466
    %v560 = vunpack.c.h.b16 %v466
    %v561 = vunpack.c.l.b16 %v467
    %v562 = vunpack.c.h.b16 %v467
    %v563 = vunpack.c.l.b16 %v468
    %v564 = vunpack.c.h.b16 %v468
    %v565 = vunpack.c.l.b16 %v469
    %v566 = vunpack.c.h.b16 %v469
    %v567 = vpack.c.b16 %v507, %v503
    %v568 = vpack.c.b16 %v508, %v504
    %v569 = vpack.c.b16 %v509, %v505
    %v570 = vpack.c.b16 %v510, %v506
    %v571 = vpack.c.b16 %v515, %v511
    %v572 = vpack.c.b16 %v516, %v512
    %v573 = vpack.c.b16 %v517, %v513
    %v574 = vpack.c.b16 %v518, %v514
    %v575 = vpack.c.b16 %v523, %v519
    %v576 = vpack.c.b16 %v524, %v520
    %v577 = vpack.c.b16 %v525, %v521
    %v578 = vpack.c.b16 %v526, %v522
    %v579 = vpack.c.b16 %v531, %v527
    %v580 = vpack.c.b16 %v532, %v528
    %v581 = vpack.c.b16 %v533, %v529
    %v582 = vpack.c.b16 %v534, %v530
    %v583 = vpack.c.b16 %v539, %v535
    %v584 = vpack.c.b16 %v540, %v536
    %v585 = vpack.c.b16 %v541, %v537
    %v586 = vpack.c.b16 %v542, %v538
    %v587 = vpack.c.b16 %v547, %v543
    %v588 = vpack.c.b16 %v548, %v544
    %v589 = vpack.c.b16 %v549, %v545
    %v590 = vpack.c.b16 %v550, %v546
    %v591 = vpack.c.b16 %v555, %v551
    %v592 = vpack.c.b16 %v556, %v552
    %v593 = vpack.c.b16 %v557, %v553
    %v594 = vpack.c.b16 %v558, %v554
    %v595 = vpack.c.b16 %v563, %v559
    %v596 = vpack.c.b16 %v564, %v560
    %v597 = vpack.c.b16 %v565, %v561
    %v598 = vpack.c.b16 %v566, %v562
    %631 = vmatprep.subr.bf16.mxu0 %v568
    %632 = vmatpush1.bf16.msra.mxu0 %v567
    %633 = vmatprep.subr.bf16.mxu0 %v572
    %634 = vmatpush1.bf16.msra.mxu0 %v571
    %635 = vmatprep.subr.bf16.mxu0 %v576
    %636 = vmatpush1.bf16.msra.mxu0 %v575
    %637 = vmatprep.subr.bf16.mxu0 %v580
    %638 = vmatpush1.bf16.msra.mxu0 %v579
    %639 = vmatprep.subr.bf16.mxu0 %v584
    %640 = vmatpush1.bf16.msra.mxu0 %v583
    %641 = vmatprep.subr.bf16.mxu0 %v588
    %642 = vmatpush1.bf16.msra.mxu0 %v587
    %643 = vmatprep.subr.bf16.mxu0 %v592
    %644 = vmatpush1.bf16.msra.mxu0 %v591
    %645 = vmatprep.subr.bf16.mxu0 %v596
    %646 = vmatpush1.bf16.msra.mxu0 %v595
    %647 = vmatprep.subr.bf16.mxu0 0
    %648 = vmatpush1.bf16.msra.mxu0 0
    %649 = vmatprep.subr.bf16.mxu0 0
    %650 = vmatpush1.bf16.msra.mxu0 0
    %651 = vmatprep.subr.bf16.mxu0 0
    %652 = vmatpush1.bf16.msra.mxu0 0
    %653 = vmatprep.subr.bf16.mxu0 0
    %654 = vmatpush1.bf16.msra.mxu0 0
    %655 = vmatprep.subr.bf16.mxu0 0
    %656 = vmatpush1.bf16.msra.mxu0 0
    %657 = vmatprep.subr.bf16.mxu0 0
    %658 = vmatpush1.bf16.msra.mxu0 0
    %659 = vmatprep.subr.bf16.mxu0 0
    %660 = vmatpush1.bf16.msra.mxu0 0
    %661 = vmatprep.subr.bf16.mxu0 0
    %662 = vmatpush1.bf16.msra.mxu0 0
    %663 = vmatprep.mubr.bf16.mxu0 0
    %664 = vmatmul.mubr.bf16.gmra.mrb[0].mxu0 %v470
    %v665 = vpop.f32.mrb[0].mxu0
    %v666 = vadd.f32 0.0, %v665
    %v667 = vpop.f32.mrb[0].mxu0
    %v668 = vadd.f32 0.0, %v667
    %v669 = vpop.f32.mrb[0].mxu0
    %v670 = vpop.f32.mrb[0].mxu0
    %671 = vdwg.mxu0
    %672 = vmatprep.subr.bf16.mxu0 %v570
    %673 = vmatpush1.bf16.msra.mxu0 %v569
    %674 = vmatprep.subr.bf16.mxu0 %v574
    %675 = vmatpush1.bf16.msra.mxu0 %v573
    %676 = vmatprep.subr.bf16.mxu0 %v578
    %677 = vmatpush1.bf16.msra.mxu0 %v577
    %678 = vmatprep.subr.bf16.mxu0 %v582
    %679 = vmatpush1.bf16.msra.mxu0 %v581
    %680 = vmatprep.subr.bf16.mxu0 %v586
    %681 = vmatpush1.bf16.msra.mxu0 %v585
    %682 = vmatprep.subr.bf16.mxu0 %v590
    %683 = vmatpush1.bf16.msra.mxu0 %v589
    %684 = vmatprep.subr.bf16.mxu0 %v594
    %685 = vmatpush1.bf16.msra.mxu0 %v593
    %686 = vmatprep.subr.bf16.mxu0 %v598
    %687 = vmatpush1.bf16.msra.mxu0 %v597
    %688 = vmatprep.subr.bf16.mxu0 0
    %689 = vmatpush1.bf16.msra.mxu0 0
    %690 = vmatprep.subr.bf16.mxu0 0
    %691 = vmatpush1.bf16.msra.mxu0 0
    %692 = vmatprep.subr.bf16.mxu0 0
    %693 = vmatpush1.bf16.msra.mxu0 0
    %694 = vmatprep.subr.bf16.mxu0 0
    %695 = vmatpush1.bf16.msra.mxu0 0
    %696 = vmatprep.subr.bf16.mxu0 0
    %697 = vmatpush1.bf16.msra.mxu0 0
    %698 = vmatprep.subr.bf16.mxu0 0
    %699 = vmatpush1.bf16.msra.mxu0 0
    %700 = vmatprep.subr.bf16.mxu0 0
    %701 = vmatpush1.bf16.msra.mxu0 0
    %702 = vmatprep.subr.bf16.mxu0 0
    %703 = vmatpush1.bf16.msra.mxu0 0
    %704 = vmatprep.mubr.bf16.mxu0 0
    %705 = vmatmul.mubr.bf16.gmra.mrb[0].mxu0 %v470
    %v706 = vpop.f32.mrb[0].mxu0
    %v707 = vadd.f32 0.0, %v706
    %v708 = vpop.f32.mrb[0].mxu0
    %v709 = vadd.f32 0.0, %v708
    %v710 = vpop.f32.mrb[0].mxu0
    %v711 = vpop.f32.mrb[0].mxu0
    %712 = vdwg.mxu0
    %v713 = vadd.f32 %v325, %v666
    %v714 = vadd.f32 %v327, %v668
    %v715 = vadd.f32 %v398, %v707
    %v716 = vadd.f32 %v400, %v709
    %v717 = vxor.u32 %v713, 2147483648
    %v718 = vxor.u32 %v714, 2147483648
    %v719 = vxor.u32 %v715, 2147483648
    %v720 = vmul.f32 %v717, 1.442695
    %v721 = vpow.pop %v720
    %v722 = vmul.f32 %v718, 1.442695
    %v723 = vpow.pop %v722
    %v724 = vmul.f32 %v719, 1.442695
    %v725 = vpow.pop %v724
    %v726 = vadd.f32 %v721, 1.0
    %v727 = vadd.f32 %v723, 1.0
    %v728 = vadd.f32 %v725, 1.0
    %v729 = vrcp.pop %v726
    %v730 = vmul.f32 1.0, %v729
    %v731 = vrcp.pop %v727
    %v732 = vmul.f32 1.0, %v731
    %v733 = vrcp.pop %v728
    %v734 = vmul.f32 1.0, %v733
    %v735 = vtanh.pop %v716
    %v736 = vmul.f32 %v732, %v437
    %v737 = vmul.f32 %v730, %v735
    %v738 = vadd.f32 %v736, %v737
    %v739 = vtanh.pop %v738
    %v740 = vmul.f32 %v734, %v739
    %741 = vst [vmem:[#allocation6] sm:$0xff] %v740
    %v742 = vpack.c.bf16 %v740, %v740
    %743 = vmatprep.subr.bf16.mxu0 %v568
    %744 = vmatpush1.bf16.msra.mxu0 %v567
    %745 = vmatprep.subr.bf16.mxu0 %v572
    %746 = vmatpush1.bf16.msra.mxu0 %v571
    %747 = vmatprep.subr.bf16.mxu0 %v576
    %748 = vmatpush1.bf16.msra.mxu0 %v575
    %749 = vmatprep.subr.bf16.mxu0 %v580
    %750 = vmatpush1.bf16.msra.mxu0 %v579
    %751 = vmatprep.subr.bf16.mxu0 %v584
    %752 = vmatpush1.bf16.msra.mxu0 %v583
    %753 = vmatprep.subr.bf16.mxu0 %v588
    %754 = vmatpush1.bf16.msra.mxu0 %v587
    %755 = vmatprep.subr.bf16.mxu0 %v592
    %756 = vmatpush1.bf16.msra.mxu0 %v591
    %757 = vmatprep.subr.bf16.mxu0 %v596
    %758 = vmatpush1.bf16.msra.mxu0 %v595
    %759 = vmatprep.subr.bf16.mxu0 0
    %760 = vmatpush1.bf16.msra.mxu0 0
    %761 = vmatprep.subr.bf16.mxu0 0
    %762 = vmatpush1.bf16.msra.mxu0 0
    %763 = vmatprep.subr.bf16.mxu0 0
    %764 = vmatpush1.bf16.msra.mxu0 0
    %765 = vmatprep.subr.bf16.mxu0 0
    %766 = vmatpush1.bf16.msra.mxu0 0
    %767 = vmatprep.subr.bf16.mxu0 0
    %768 = vmatpush1.bf16.msra.mxu0 0
    %769 = vmatprep.subr.bf16.mxu0 0
    %770 = vmatpush1.bf16.msra.mxu0 0
    %771 = vmatprep.subr.bf16.mxu0 0
    %772 = vmatpush1.bf16.msra.mxu0 0
    %773 = vmatprep.subr.bf16.mxu0 0
    %774 = vmatpush1.bf16.msra.mxu0 0
    %775 = vmatprep.mubr.bf16.mxu0 0
    %776 = vmatmul.mubr.bf16.gmra.mrb[0].mxu0 %v742
    %v777 = vpop.f32.mrb[0].mxu0
    %v778 = vadd.f32 0.0, %v777
    %v779 = vpop.f32.mrb[0].mxu0
    %v780 = vadd.f32 0.0, %v779
    %v781 = vpop.f32.mrb[0].mxu0
    %v782 = vpop.f32.mrb[0].mxu0
    %783 = vdwg.mxu0
    %784 = vmatprep.subr.bf16.mxu0 %v570
    %785 = vmatpush1.bf16.msra.mxu0 %v569
    %786 = vmatprep.subr.bf16.mxu0 %v574
    %787 = vmatpush1.bf16.msra.mxu0 %v573
    %788 = vmatprep.subr.bf16.mxu0 %v578
    %789 = vmatpush1.bf16.msra.mxu0 %v577
    %790 = vmatprep.subr.bf16.mxu0 %v582
    %791 = vmatpush1.bf16.msra.mxu0 %v581
    %792 = vmatprep.subr.bf16.mxu0 %v586
    %793 = vmatpush1.bf16.msra.mxu0 %v585
    %794 = vmatprep.subr.bf16.mxu0 %v590
    %795 = vmatpush1.bf16.msra.mxu0 %v589
    %796 = vmatprep.subr.bf16.mxu0 %v594
    %797 = vmatpush1.bf16.msra.mxu0 %v593
    %798 = vmatprep.subr.bf16.mxu0 %v598
    %799 = vmatpush1.bf16.msra.mxu0 %v597
    %800 = vmatprep.subr.bf16.mxu0 0
    %801 = vmatpush1.bf16.msra.mxu0 0
    %802 = vmatprep.subr.bf16.mxu0 0
    %803 = vmatpush1.bf16.msra.mxu0 0
    %804 = vmatprep.subr.bf16.mxu0 0
    %805 = vmatpush1.bf16.msra.mxu0 0
    %806 = vmatprep.subr.bf16.mxu0 0
    %807 = vmatpush1.bf16.msra.mxu0 0
    %808 = vmatprep.subr.bf16.mxu0 0
    %809 = vmatpush1.bf16.msra.mxu0 0
    %810 = vmatprep.subr.bf16.mxu0 0
    %811 = vmatpush1.bf16.msra.mxu0 0
    %812 = vmatprep.subr.bf16.mxu0 0
    %813 = vmatpush1.bf16.msra.mxu0 0
    %814 = vmatprep.subr.bf16.mxu0 0
    %815 = vmatpush1.bf16.msra.mxu0 0
    %816 = vmatprep.mubr.bf16.mxu0 0
    %817 = vmatmul.mubr.bf16.gmra.mrb[0].mxu0 %v742
    %v818 = vpop.f32.mrb[0].mxu0
    %v819 = vadd.f32 0.0, %v818
    %v820 = vpop.f32.mrb[0].mxu0
    %v821 = vadd.f32 0.0, %v820
    %v822 = vpop.f32.mrb[0].mxu0
    %v823 = vpop.f32.mrb[0].mxu0
    %824 = vdwg.mxu0
    %v825 = vadd.f32 %v329, %v778
    %v826 = vadd.f32 %v331, %v780
    %v827 = vadd.f32 %v402, %v819
    %v828 = vadd.f32 %v404, %v821
    %v829 = vxor.u32 %v825, 2147483648
    %v830 = vxor.u32 %v826, 2147483648
    %v831 = vxor.u32 %v827, 2147483648
    %v832 = vmul.f32 %v829, 1.442695
    %v833 = vpow.pop %v832
    %v834 = vmul.f32 %v830, 1.442695
    %v835 = vpow.pop %v834
    %v836 = vmul.f32 %v831, 1.442695
    %v837 = vpow.pop %v836
    %v838 = vadd.f32 %v833, 1.0
    %v839 = vadd.f32 %v835, 1.0
    %v840 = vadd.f32 %v837, 1.0
    %v841 = vrcp.pop %v838
    %v842 = vmul.f32 1.0, %v841
    %v843 = vrcp.pop %v839
    %v844 = vmul.f32 1.0, %v843
    %v845 = vrcp.pop %v840
    %v846 = vmul.f32 1.0, %v845
    %v847 = vtanh.pop %v828
    %v848 = vmul.f32 %v844, %v738
    %v849 = vmul.f32 %v842, %v847
    %v850 = vadd.f32 %v848, %v849
    %v851 = vtanh.pop %v850
    %v852 = vmul.f32 %v846, %v851
    %853 = vst [vmem:[#allocation6 + $0x8] sm:$0xff] %v852
    %v854 = vpack.c.bf16 %v852, %v852
    %855 = vmatprep.subr.bf16.mxu0 %v568
    %856 = vmatpush1.bf16.msra.mxu0 %v567
    %857 = vmatprep.subr.bf16.mxu0 %v572
    %858 = vmatpush1.bf16.msra.mxu0 %v571
    %859 = vmatprep.subr.bf16.mxu0 %v576
    %860 = vmatpush1.bf16.msra.mxu0 %v575
    %861 = vmatprep.subr.bf16.mxu0 %v580
    %862 = vmatpush1.bf16.msra.mxu0 %v579
    %863 = vmatprep.subr.bf16.mxu0 %v584
    %864 = vmatpush1.bf16.msra.mxu0 %v583
    %865 = vmatprep.subr.bf16.mxu0 %v588
    %866 = vmatpush1.bf16.msra.mxu0 %v587
    %867 = vmatprep.subr.bf16.mxu0 %v592
    %868 = vmatpush1.bf16.msra.mxu0 %v591
    %869 = vmatprep.subr.bf16.mxu0 %v596
    %870 = vmatpush1.bf16.msra.mxu0 %v595
    %871 = vmatprep.subr.bf16.mxu0 0
    %872 = vmatpush1.bf16.msra.mxu0 0
    %873 = vmatprep.subr.bf16.mxu0 0
    %874 = vmatpush1.bf16.msra.mxu0 0
    %875 = vmatprep.subr.bf16.mxu0 0
    %876 = vmatpush1.bf16.msra.mxu0 0
    %877 = vmatprep.subr.bf16.mxu0 0
    %878 = vmatpush1.bf16.msra.mxu0 0
    %879 = vmatprep.subr.bf16.mxu0 0
    %880 = vmatpush1.bf16.msra.mxu0 0
    %881 = vmatprep.subr.bf16.mxu0 0
    %882 = vmatpush1.bf16.msra.mxu0 0
    %883 = vmatprep.subr.bf16.mxu0 0
    %884 = vmatpush1.bf16.msra.mxu0 0
    %885 = vmatprep.subr.bf16.mxu0 0
    %886 = vmatpush1.bf16.msra.mxu0 0
    %887 = vmatprep.mubr.bf16.mxu0 0
    %888 = vmatmul.mubr.bf16.gmra.mrb[0].mxu0 %v854
    %v889 = vpop.f32.mrb[0].mxu0
    %v890 = vadd.f32 0.0, %v889
    %v891 = vpop.f32.mrb[0].mxu0
    %v892 = vadd.f32 0.0, %v891
    %v893 = vpop.f32.mrb[0].mxu0
    %v894 = vpop.f32.mrb[0].mxu0
    %895 = vdwg.mxu0
    %896 = vmatprep.subr.bf16.mxu0 %v570
    %897 = vmatpush1.bf16.msra.mxu0 %v569
    %898 = vmatprep.subr.bf16.mxu0 %v574
    %899 = vmatpush1.bf16.msra.mxu0 %v573
    %900 = vmatprep.subr.bf16.mxu0 %v578
    %901 = vmatpush1.bf16.msra.mxu0 %v577
    %902 = vmatprep.subr.bf16.mxu0 %v582
    %903 = vmatpush1.bf16.msra.mxu0 %v581
    %904 = vmatprep.subr.bf16.mxu0 %v586
    %905 = vmatpush1.bf16.msra.mxu0 %v585
    %906 = vmatprep.subr.bf16.mxu0 %v590
    %907 = vmatpush1.bf16.msra.mxu0 %v589
    %908 = vmatprep.subr.bf16.mxu0 %v594
    %909 = vmatpush1.bf16.msra.mxu0 %v593
    %910 = vmatprep.subr.bf16.mxu0 %v598
    %911 = vmatpush1.bf16.msra.mxu0 %v597
    %912 = vmatprep.subr.bf16.mxu0 0
    %913 = vmatpush1.bf16.msra.mxu0 0
    %914 = vmatprep.subr.bf16.mxu0 0
    %915 = vmatpush1.bf16.msra.mxu0 0
    %916 = vmatprep.subr.bf16.mxu0 0
    %917 = vmatpush1.bf16.msra.mxu0 0
    %918 = vmatprep.subr.bf16.mxu0 0
    %919 = vmatpush1.bf16.msra.mxu0 0
    %920 = vmatprep.subr.bf16.mxu0 0
    %921 = vmatpush1.bf16.msra.mxu0 0
    %922 = vmatprep.subr.bf16.mxu0 0
    %923 = vmatpush1.bf16.msra.mxu0 0
    %924 = vmatprep.subr.bf16.mxu0 0
    %925 = vmatpush1.bf16.msra.mxu0 0
    %926 = vmatprep.subr.bf16.mxu0 0
    %927 = vmatpush1.bf16.msra.mxu0 0
    %928 = vmatprep.mubr.bf16.mxu0 0
    %929 = vmatmul.mubr.bf16.gmra.mrb[0].mxu0 %v854
    %v930 = vpop.f32.mrb[0].mxu0
    %v931 = vadd.f32 0.0, %v930
    %v932 = vpop.f32.mrb[0].mxu0
    %v933 = vadd.f32 0.0, %v932
    %v934 = vpop.f32.mrb[0].mxu0
    %v935 = vpop.f32.mrb[0].mxu0
    %936 = vdwg.mxu0
    %v937 = vadd.f32 %v335, %v890
    %v938 = vadd.f32 %v337, %v892
    %v939 = vadd.f32 %v408, %v931
    %v940 = vadd.f32 %v410, %v933
    %v941 = vxor.u32 %v937, 2147483648
    %v942 = vxor.u32 %v938, 2147483648
    %v943 = vxor.u32 %v939, 2147483648
    %v944 = vmul.f32 %v941, 1.442695
    %v945 = vpow.pop %v944
    %v946 = vmul.f32 %v942, 1.442695
    %v947 = vpow.pop %v946
    %v948 = vmul.f32 %v943, 1.442695
    %v949 = vpow.pop %v948
    %v950 = vadd.f32 %v945, 1.0
    %v951 = vadd.f32 %v947, 1.0
    %v952 = vadd.f32 %v949, 1.0
    %v953 = vrcp.pop %v950
    %v954 = vmul.f32 1.0, %v953
    %v955 = vrcp.pop %v951
    %v956 = vmul.f32 1.0, %v955
    %v957 = vrcp.pop %v952
    %v958 = vmul.f32 1.0, %v957
    %v959 = vtanh.pop %v940
    %v960 = vmul.f32 %v956, %v850
    %v961 = vmul.f32 %v954, %v959
    %v962 = vadd.f32 %v960, %v961
    %v963 = vtanh.pop %v962
    %v964 = vmul.f32 %v958, %v963
    %965 = vst [vmem:[#allocation6 + $0x10] sm:$0xff] %v964
    %v966 = vpack.c.bf16 %v964, %v964
    %967 = vmatprep.subr.bf16.mxu0 %v568
    %968 = vmatpush1.bf16.msra.mxu0 %v567
    %969 = vmatprep.subr.bf16.mxu0 %v572
    %970 = vmatpush1.bf16.msra.mxu0 %v571
    %971 = vmatprep.subr.bf16.mxu0 %v576
    %972 = vmatpush1.bf16.msra.mxu0 %v575
    %973 = vmatprep.subr.bf16.mxu0 %v580
    %974 = vmatpush1.bf16.msra.mxu0 %v579
    %975 = vmatprep.subr.bf16.mxu0 %v584
    %976 = vmatpush1.bf16.msra.mxu0 %v583
    %977 = vmatprep.subr.bf16.mxu0 %v588
    %978 = vmatpush1.bf16.msra.mxu0 %v587
    %979 = vmatprep.subr.bf16.mxu0 %v592
    %980 = vmatpush1.bf16.msra.mxu0 %v591
    %981 = vmatprep.subr.bf16.mxu0 %v596
    %982 = vmatpush1.bf16.msra.mxu0 %v595
    %983 = vmatprep.subr.bf16.mxu0 0
    %984 = vmatpush1.bf16.msra.mxu0 0
    %985 = vmatprep.subr.bf16.mxu0 0
    %986 = vmatpush1.bf16.msra.mxu0 0
    %987 = vmatprep.subr.bf16.mxu0 0
    %988 = vmatpush1.bf16.msra.mxu0 0
    %989 = vmatprep.subr.bf16.mxu0 0
    %990 = vmatpush1.bf16.msra.mxu0 0
    %991 = vmatprep.subr.bf16.mxu0 0
    %992 = vmatpush1.bf16.msra.mxu0 0
    %993 = vmatprep.subr.bf16.mxu0 0
    %994 = vmatpush1.bf16.msra.mxu0 0
    %995 = vmatprep.subr.bf16.mxu0 0
    %996 = vmatpush1.bf16.msra.mxu0 0
    %997 = vmatprep.subr.bf16.mxu0 0
    %998 = vmatpush1.bf16.msra.mxu0 0
    %999 = vmatprep.mubr.bf16.mxu0 0
    %1000 = vmatmul.mubr.bf16.gmra.mrb[0].mxu0 %v966
    %v1001 = vpop.f32.mrb[0].mxu0
    %v1002 = vadd.f32 0.0, %v1001
    %v1003 = vpop.f32.mrb[0].mxu0
    %v1004 = vadd.f32 0.0, %v1003
    %v1005 = vpop.f32.mrb[0].mxu0
    %v1006 = vpop.f32.mrb[0].mxu0
    %1007 = vdwg.mxu0
    %1008 = vmatprep.subr.bf16.mxu0 %v570
    %1009 = vmatpush1.bf16.msra.mxu0 %v569
    %1010 = vmatprep.subr.bf16.mxu0 %v574
    %1011 = vmatpush1.bf16.msra.mxu0 %v573
    %1012 = vmatprep.subr.bf16.mxu0 %v578
    %1013 = vmatpush1.bf16.msra.mxu0 %v577
    %1014 = vmatprep.subr.bf16.mxu0 %v582
    %1015 = vmatpush1.bf16.msra.mxu0 %v581
    %1016 = vmatprep.subr.bf16.mxu0 %v586
    %1017 = vmatpush1.bf16.msra.mxu0 %v585
    %1018 = vmatprep.subr.bf16.mxu0 %v590
    %1019 = vmatpush1.bf16.msra.mxu0 %v589
    %1020 = vmatprep.subr.bf16.mxu0 %v594
    %1021 = vmatpush1.bf16.msra.mxu0 %v593
    %1022 = vmatprep.subr.bf16.mxu0 %v598
    %1023 = vmatpush1.bf16.msra.mxu0 %v597
    %1024 = vmatprep.subr.bf16.mxu0 0
    %1025 = vmatpush1.bf16.msra.mxu0 0
    %1026 = vmatprep.subr.bf16.mxu0 0
    %1027 = vmatpush1.bf16.msra.mxu0 0
    %1028 = vmatprep.subr.bf16.mxu0 0
    %1029 = vmatpush1.bf16.msra.mxu0 0
    %1030 = vmatprep.subr.bf16.mxu0 0
    %1031 = vmatpush1.bf16.msra.mxu0 0
    %1032 = vmatprep.subr.bf16.mxu0 0
    %1033 = vmatpush1.bf16.msra.mxu0 0
    %1034 = vmatprep.subr.bf16.mxu0 0
    %1035 = vmatpush1.bf16.msra.mxu0 0
    %1036 = vmatprep.subr.bf16.mxu0 0
    %1037 = vmatpush1.bf16.msra.mxu0 0
    %1038 = vmatprep.subr.bf16.mxu0 0
    %1039 = vmatpush1.bf16.msra.mxu0 0
    %1040 = vmatprep.mubr.bf16.mxu0 0
    %1041 = vmatmul.mubr.bf16.gmra.mrb[0].mxu0 %v966
    %v1042 = vpop.f32.mrb[0].mxu0
    %v1043 = vadd.f32 0.0, %v1042
    %v1044 = vpop.f32.mrb[0].mxu0
    %v1045 = vadd.f32 0.0, %v1044
    %v1046 = vpop.f32.mrb[0].mxu0
    %v1047 = vpop.f32.mrb[0].mxu0
    %1048 = vdwg.mxu0
    %v1049 = vadd.f32 %v339, %v1002
    %v1050 = vadd.f32 %v341, %v1004
    %v1051 = vadd.f32 %v412, %v1043
    %v1052 = vadd.f32 %v414, %v1045
    %v1053 = vxor.u32 %v1049, 2147483648
    %v1054 = vxor.u32 %v1050, 2147483648
    %v1055 = vxor.u32 %v1051, 2147483648
    %v1056 = vmul.f32 %v1053, 1.442695
    %v1057 = vpow.pop %v1056
    %v1058 = vmul.f32 %v1054, 1.442695
    %v1059 = vpow.pop %v1058
    %v1060 = vmul.f32 %v1055, 1.442695
    %v1061 = vpow.pop %v1060
    %v1062 = vadd.f32 %v1057, 1.0
    %v1063 = vadd.f32 %v1059, 1.0
    %v1064 = vadd.f32 %v1061, 1.0
    %v1065 = vrcp.pop %v1062
    %v1066 = vmul.f32 1.0, %v1065
    %v1067 = vrcp.pop %v1063
    %v1068 = vmul.f32 1.0, %v1067
    %v1069 = vrcp.pop %v1064
    %v1070 = vmul.f32 1.0, %v1069
    %v1071 = vtanh.pop %v1052
    %v1072 = vmul.f32 %v1068, %v962
    %v1073 = vmul.f32 %v1066, %v1071
    %v1074 = vadd.f32 %v1072, %v1073
    %v1075 = vtanh.pop %v1074
    %v1076 = vmul.f32 %v1070, %v1075
    %1077 = vst [vmem:[#allocation6 + $0x18] sm:$0xff] %v1076
    %v1078 = vpack.c.bf16 %v1076, %v1076
    %1079 = vmatprep.subr.bf16.mxu0 %v568
    %1080 = vmatpush1.bf16.msra.mxu0 %v567
    %1081 = vmatprep.subr.bf16.mxu0 %v572
    %1082 = vmatpush1.bf16.msra.mxu0 %v571
    %1083 = vmatprep.subr.bf16.mxu0 %v576
    %1084 = vmatpush1.bf16.msra.mxu0 %v575
    %1085 = vmatprep.subr.bf16.mxu0 %v580
    %1086 = vmatpush1.bf16.msra.mxu0 %v579
    %1087 = vmatprep.subr.bf16.mxu0 %v584
    %1088 = vmatpush1.bf16.msra.mxu0 %v583
    %1089 = vmatprep.subr.bf16.mxu0 %v588
    %1090 = vmatpush1.bf16.msra.mxu0 %v587
    %1091 = vmatprep.subr.bf16.mxu0 %v592
    %1092 = vmatpush1.bf16.msra.mxu0 %v591
    %1093 = vmatprep.subr.bf16.mxu0 %v596
    %1094 = vmatpush1.bf16.msra.mxu0 %v595
    %1095 = vmatprep.subr.bf16.mxu0 0
    %1096 = vmatpush1.bf16.msra.mxu0 0
    %1097 = vmatprep.subr.bf16.mxu0 0
    %1098 = vmatpush1.bf16.msra.mxu0 0
    %1099 = vmatprep.subr.bf16.mxu0 0
    %1100 = vmatpush1.bf16.msra.mxu0 0
    %1101 = vmatprep.subr.bf16.mxu0 0
    %1102 = vmatpush1.bf16.msra.mxu0 0
    %1103 = vmatprep.subr.bf16.mxu0 0
    %1104 = vmatpush1.bf16.msra.mxu0 0
    %1105 = vmatprep.subr.bf16.mxu0 0
    %1106 = vmatpush1.bf16.msra.mxu0 0
    %1107 = vmatprep.subr.bf16.mxu0 0
    %1108 = vmatpush1.bf16.msra.mxu0 0
    %1109 = vmatprep.subr.bf16.mxu0 0
    %1110 = vmatpush1.bf16.msra.mxu0 0
    %1111 = vmatprep.mubr.bf16.mxu0 0
    %1112 = vmatmul.mubr.bf16.gmra.mrb[0].mxu0 %v1078
    %v1113 = vpop.f32.mrb[0].mxu0
    %v1114 = vadd.f32 0.0, %v1113
    %v1115 = vpop.f32.mrb[0].mxu0
    %v1116 = vadd.f32 0.0, %v1115
    %v1117 = vpop.f32.mrb[0].mxu0
    %v1118 = vpop.f32.mrb[0].mxu0
    %1119 = vdwg.mxu0
    %1120 = vmatprep.subr.bf16.mxu0 %v570
    %1121 = vmatpush1.bf16.msra.mxu0 %v569
    %1122 = vmatprep.subr.bf16.mxu0 %v574
    %1123 = vmatpush1.bf16.msra.mxu0 %v573
    %1124 = vmatprep.subr.bf16.mxu0 %v578
    %1125 = vmatpush1.bf16.msra.mxu0 %v577
    %1126 = vmatprep.subr.bf16.mxu0 %v582
    %1127 = vmatpush1.bf16.msra.mxu0 %v581
    %1128 = vmatprep.subr.bf16.mxu0 %v586
    %1129 = vmatpush1.bf16.msra.mxu0 %v585
    %1130 = vmatprep.subr.bf16.mxu0 %v590
    %1131 = vmatpush1.bf16.msra.mxu0 %v589
    %1132 = vmatprep.subr.bf16.mxu0 %v594
    %1133 = vmatpush1.bf16.msra.mxu0 %v593
    %1134 = vmatprep.subr.bf16.mxu0 %v598
    %1135 = vmatpush1.bf16.msra.mxu0 %v597
    %1136 = vmatprep.subr.bf16.mxu0 0
    %1137 = vmatpush1.bf16.msra.mxu0 0
    %1138 = vmatprep.subr.bf16.mxu0 0
    %1139 = vmatpush1.bf16.msra.mxu0 0
    %1140 = vmatprep.subr.bf16.mxu0 0
    %1141 = vmatpush1.bf16.msra.mxu0 0
    %1142 = vmatprep.subr.bf16.mxu0 0
    %1143 = vmatpush1.bf16.msra.mxu0 0
    %1144 = vmatprep.subr.bf16.mxu0 0
    %1145 = vmatpush1.bf16.msra.mxu0 0
    %1146 = vmatprep.subr.bf16.mxu0 0
    %1147 = vmatpush1.bf16.msra.mxu0 0
    %1148 = vmatprep.subr.bf16.mxu0 0
    %1149 = vmatpush1.bf16.msra.mxu0 0
    %1150 = vmatprep.subr.bf16.mxu0 0
    %1151 = vmatpush1.bf16.msra.mxu0 0
    %1152 = vmatprep.mubr.bf16.mxu0 0
    %1153 = vmatmul.mubr.bf16.gmra.mrb[0].mxu0 %v1078
    %v1154 = vpop.f32.mrb[0].mxu0
    %v1155 = vadd.f32 0.0, %v1154
    %v1156 = vpop.f32.mrb[0].mxu0
    %v1157 = vadd.f32 0.0, %v1156
    %v1158 = vpop.f32.mrb[0].mxu0
    %v1159 = vpop.f32.mrb[0].mxu0
    %1160 = vdwg.mxu0
    %v1161 = vadd.f32 %v345, %v1114
    %v1162 = vadd.f32 %v347, %v1116
    %v1163 = vadd.f32 %v418, %v1155
    %v1164 = vadd.f32 %v420, %v1157
    %v1165 = vxor.u32 %v1161, 2147483648
    %v1166 = vxor.u32 %v1162, 2147483648
    %v1167 = vxor.u32 %v1163, 2147483648
    %v1168 = vmul.f32 %v1165, 1.442695
    %v1169 = vpow.pop %v1168
    %v1170 = vmul.f32 %v1166, 1.442695
    %v1171 = vpow.pop %v1170
    %v1172 = vmul.f32 %v1167, 1.442695
    %v1173 = vpow.pop %v1172
    %v1174 = vadd.f32 %v1169, 1.0
    %v1175 = vadd.f32 %v1171, 1.0
    %v1176 = vadd.f32 %v1173, 1.0
    %v1177 = vrcp.pop %v1174
    %v1178 = vmul.f32 1.0, %v1177
    %v1179 = vrcp.pop %v1175
    %v1180 = vmul.f32 1.0, %v1179
    %v1181 = vrcp.pop %v1176
    %v1182 = vmul.f32 1.0, %v1181
    %v1183 = vtanh.pop %v1164
    %v1184 = vmul.f32 %v1180, %v1074
    %v1185 = vmul.f32 %v1178, %v1183
    %v1186 = vadd.f32 %v1184, %v1185
    %v1187 = vtanh.pop %v1186
    %v1188 = vmul.f32 %v1182, %v1187
    %1189 = vst [vmem:[#allocation6 + $0x20] sm:$0xff] %v1188
    %v1190 = vpack.c.bf16 %v1188, %v1188
    %1191 = vmatprep.subr.bf16.mxu0 %v568
    %1192 = vmatpush1.bf16.msra.mxu0 %v567
    %1193 = vmatprep.subr.bf16.mxu0 %v572
    %1194 = vmatpush1.bf16.msra.mxu0 %v571
    %1195 = vmatprep.subr.bf16.mxu0 %v576
    %1196 = vmatpush1.bf16.msra.mxu0 %v575
    %1197 = vmatprep.subr.bf16.mxu0 %v580
    %1198 = vmatpush1.bf16.msra.mxu0 %v579
    %1199 = vmatprep.subr.bf16.mxu0 %v584
    %1200 = vmatpush1.bf16.msra.mxu0 %v583
    %1201 = vmatprep.subr.bf16.mxu0 %v588
    %1202 = vmatpush1.bf16.msra.mxu0 %v587
    %1203 = vmatprep.subr.bf16.mxu0 %v592
    %1204 = vmatpush1.bf16.msra.mxu0 %v591
    %1205 = vmatprep.subr.bf16.mxu0 %v596
    %1206 = vmatpush1.bf16.msra.mxu0 %v595
    %1207 = vmatprep.subr.bf16.mxu0 0
    %1208 = vmatpush1.bf16.msra.mxu0 0
    %1209 = vmatprep.subr.bf16.mxu0 0
    %1210 = vmatpush1.bf16.msra.mxu0 0
    %1211 = vmatprep.subr.bf16.mxu0 0
    %1212 = vmatpush1.bf16.msra.mxu0 0
    %1213 = vmatprep.subr.bf16.mxu0 0
    %1214 = vmatpush1.bf16.msra.mxu0 0
    %1215 = vmatprep.subr.bf16.mxu0 0
    %1216 = vmatpush1.bf16.msra.mxu0 0
    %1217 = vmatprep.subr.bf16.mxu0 0
    %1218 = vmatpush1.bf16.msra.mxu0 0
    %1219 = vmatprep.subr.bf16.mxu0 0
    %1220 = vmatpush1.bf16.msra.mxu0 0
    %1221 = vmatprep.subr.bf16.mxu0 0
    %1222 = vmatpush1.bf16.msra.mxu0 0
    %1223 = vmatprep.mubr.bf16.mxu0 0
    %1224 = vmatmul.mubr.bf16.gmra.mrb[0].mxu0 %v1190
    %v1225 = vpop.f32.mrb[0].mxu0
    %v1226 = vadd.f32 0.0, %v1225
    %v1227 = vpop.f32.mrb[0].mxu0
    %v1228 = vadd.f32 0.0, %v1227
    %v1229 = vpop.f32.mrb[0].mxu0
    %v1230 = vpop.f32.mrb[0].mxu0
    %1231 = vdwg.mxu0
    %1232 = vmatprep.subr.bf16.mxu0 %v570
    %1233 = vmatpush1.bf16.msra.mxu0 %v569
    %1234 = vmatprep.subr.bf16.mxu0 %v574
    %1235 = vmatpush1.bf16.msra.mxu0 %v573
    %1236 = vmatprep.subr.bf16.mxu0 %v578
    %1237 = vmatpush1.bf16.msra.mxu0 %v577
    %1238 = vmatprep.subr.bf16.mxu0 %v582
    %1239 = vmatpush1.bf16.msra.mxu0 %v581
    %1240 = vmatprep.subr.bf16.mxu0 %v586
    %1241 = vmatpush1.bf16.msra.mxu0 %v585
    %1242 = vmatprep.subr.bf16.mxu0 %v590
    %1243 = vmatpush1.bf16.msra.mxu0 %v589
    %1244 = vmatprep.subr.bf16.mxu0 %v594
    %1245 = vmatpush1.bf16.msra.mxu0 %v593
    %1246 = vmatprep.subr.bf16.mxu0 %v598
    %1247 = vmatpush1.bf16.msra.mxu0 %v597
    %1248 = vmatprep.subr.bf16.mxu0 0
    %1249 = vmatpush1.bf16.msra.mxu0 0
    %1250 = vmatprep.subr.bf16.mxu0 0
    %1251 = vmatpush1.bf16.msra.mxu0 0
    %1252 = vmatprep.subr.bf16.mxu0 0
    %1253 = vmatpush1.bf16.msra.mxu0 0
    %1254 = vmatprep.subr.bf16.mxu0 0
    %1255 = vmatpush1.bf16.msra.mxu0 0
    %1256 = vmatprep.subr.bf16.mxu0 0
    %1257 = vmatpush1.bf16.msra.mxu0 0
    %1258 = vmatprep.subr.bf16.mxu0 0
    %1259 = vmatpush1.bf16.msra.mxu0 0
    %1260 = vmatprep.subr.bf16.mxu0 0
    %1261 = vmatpush1.bf16.msra.mxu0 0
    %1262 = vmatprep.subr.bf16.mxu0 0
    %1263 = vmatpush1.bf16.msra.mxu0 0
    %1264 = vmatprep.mubr.bf16.mxu0 0
    %1265 = vmatmul.mubr.bf16.gmra.mrb[0].mxu0 %v1190
    %v1266 = vpop.f32.mrb[0].mxu0
    %v1267 = vadd.f32 0.0, %v1266
    %v1268 = vpop.f32.mrb[0].mxu0
    %v1269 = vadd.f32 0.0, %v1268
    %v1270 = vpop.f32.mrb[0].mxu0
    %v1271 = vpop.f32.mrb[0].mxu0
    %1272 = vdwg.mxu0
    %v1273 = vadd.f32 %v349, %v1226
    %v1274 = vadd.f32 %v351, %v1228
    %v1275 = vadd.f32 %v422, %v1267
    %v1276 = vadd.f32 %v424, %v1269
    %v1277 = vxor.u32 %v1273, 2147483648
    %v1278 = vxor.u32 %v1274, 2147483648
    %v1279 = vxor.u32 %v1275, 2147483648
    %v1280 = vmul.f32 %v1277, 1.442695
    %v1281 = vpow.pop %v1280
    %v1282 = vmul.f32 %v1278, 1.442695
    %v1283 = vpow.pop %v1282
    %v1284 = vmul.f32 %v1279, 1.442695
    %v1285 = vpow.pop %v1284
    %v1286 = vadd.f32 %v1281, 1.0
    %v1287 = vadd.f32 %v1283, 1.0
    %v1288 = vadd.f32 %v1285, 1.0
    %v1289 = vrcp.pop %v1286
    %v1290 = vmul.f32 1.0, %v1289
    %v1291 = vrcp.pop %v1287
    %v1292 = vmul.f32 1.0, %v1291
    %v1293 = vrcp.pop %v1288
    %v1294 = vmul.f32 1.0, %v1293
    %v1295 = vtanh.pop %v1276
    %v1296 = vmul.f32 %v1292, %v1186
    %v1297 = vmul.f32 %v1290, %v1295
    %v1298 = vadd.f32 %v1296, %v1297
    %v1299 = vtanh.pop %v1298
    %v1300 = vmul.f32 %v1294, %v1299
    %1301 = vst [vmem:[#allocation6 + $0x28] sm:$0xff] %v1300
    %v1302 = vpack.c.bf16 %v1300, %v1300
    %1303 = vmatprep.subr.bf16.mxu0 %v568
    %1304 = vmatpush1.bf16.msra.mxu0 %v567
    %1305 = vmatprep.subr.bf16.mxu0 %v572
    %1306 = vmatpush1.bf16.msra.mxu0 %v571
    %1307 = vmatprep.subr.bf16.mxu0 %v576
    %1308 = vmatpush1.bf16.msra.mxu0 %v575
    %1309 = vmatprep.subr.bf16.mxu0 %v580
    %1310 = vmatpush1.bf16.msra.mxu0 %v579
    %1311 = vmatprep.subr.bf16.mxu0 %v584
    %1312 = vmatpush1.bf16.msra.mxu0 %v583
    %1313 = vmatprep.subr.bf16.mxu0 %v588
    %1314 = vmatpush1.bf16.msra.mxu0 %v587
    %1315 = vmatprep.subr.bf16.mxu0 %v592
    %1316 = vmatpush1.bf16.msra.mxu0 %v591
    %1317 = vmatprep.subr.bf16.mxu0 %v596
    %1318 = vmatpush1.bf16.msra.mxu0 %v595
    %1319 = vmatprep.subr.bf16.mxu0 0
    %1320 = vmatpush1.bf16.msra.mxu0 0
    %1321 = vmatprep.subr.bf16.mxu0 0
    %1322 = vmatpush1.bf16.msra.mxu0 0
    %1323 = vmatprep.subr.bf16.mxu0 0
    %1324 = vmatpush1.bf16.msra.mxu0 0
    %1325 = vmatprep.subr.bf16.mxu0 0
    %1326 = vmatpush1.bf16.msra.mxu0 0
    %1327 = vmatprep.subr.bf16.mxu0 0
    %1328 = vmatpush1.bf16.msra.mxu0 0
    %1329 = vmatprep.subr.bf16.mxu0 0
    %1330 = vmatpush1.bf16.msra.mxu0 0
    %1331 = vmatprep.subr.bf16.mxu0 0
    %1332 = vmatpush1.bf16.msra.mxu0 0
    %1333 = vmatprep.subr.bf16.mxu0 0
    %1334 = vmatpush1.bf16.msra.mxu0 0
    %1335 = vmatprep.mubr.bf16.mxu0 0
    %1336 = vmatmul.mubr.bf16.gmra.mrb[0].mxu0 %v1302
    %v1337 = vpop.f32.mrb[0].mxu0
    %v1338 = vadd.f32 0.0, %v1337
    %v1339 = vpop.f32.mrb[0].mxu0
    %v1340 = vadd.f32 0.0, %v1339
    %v1341 = vpop.f32.mrb[0].mxu0
    %v1342 = vpop.f32.mrb[0].mxu0
    %1343 = vdwg.mxu0
    %1344 = vmatprep.subr.bf16.mxu0 %v570
    %1345 = vmatpush1.bf16.msra.mxu0 %v569
    %1346 = vmatprep.subr.bf16.mxu0 %v574
    %1347 = vmatpush1.bf16.msra.mxu0 %v573
    %1348 = vmatprep.subr.bf16.mxu0 %v578
    %1349 = vmatpush1.bf16.msra.mxu0 %v577
    %1350 = vmatprep.subr.bf16.mxu0 %v582
    %1351 = vmatpush1.bf16.msra.mxu0 %v581
    %1352 = vmatprep.subr.bf16.mxu0 %v586
    %1353 = vmatpush1.bf16.msra.mxu0 %v585
    %1354 = vmatprep.subr.bf16.mxu0 %v590
    %1355 = vmatpush1.bf16.msra.mxu0 %v589
    %1356 = vmatprep.subr.bf16.mxu0 %v594
    %1357 = vmatpush1.bf16.msra.mxu0 %v593
    %1358 = vmatprep.subr.bf16.mxu0 %v598
    %1359 = vmatpush1.bf16.msra.mxu0 %v597
    %1360 = vmatprep.subr.bf16.mxu0 0
    %1361 = vmatpush1.bf16.msra.mxu0 0
    %1362 = vmatprep.subr.bf16.mxu0 0
    %1363 = vmatpush1.bf16.msra.mxu0 0
    %1364 = vmatprep.subr.bf16.mxu0 0
    %1365 = vmatpush1.bf16.msra.mxu0 0
    %1366 = vmatprep.subr.bf16.mxu0 0
    %1367 = vmatpush1.bf16.msra.mxu0 0
    %1368 = vmatprep.subr.bf16.mxu0 0
    %1369 = vmatpush1.bf16.msra.mxu0 0
    %1370 = vmatprep.subr.bf16.mxu0 0
    %1371 = vmatpush1.bf16.msra.mxu0 0
    %1372 = vmatprep.subr.bf16.mxu0 0
    %1373 = vmatpush1.bf16.msra.mxu0 0
    %1374 = vmatprep.subr.bf16.mxu0 0
    %1375 = vmatpush1.bf16.msra.mxu0 0
    %1376 = vmatprep.mubr.bf16.mxu0 0
    %1377 = vmatmul.mubr.bf16.gmra.mrb[0].mxu0 %v1302
    %v1378 = vpop.f32.mrb[0].mxu0
    %v1379 = vadd.f32 0.0, %v1378
    %v1380 = vpop.f32.mrb[0].mxu0
    %v1381 = vadd.f32 0.0, %v1380
    %v1382 = vpop.f32.mrb[0].mxu0
    %v1383 = vpop.f32.mrb[0].mxu0
    %1384 = vdwg.mxu0
    %v1385 = vadd.f32 %v355, %v1338
    %v1386 = vadd.f32 %v357, %v1340
    %v1387 = vadd.f32 %v428, %v1379
    %v1388 = vadd.f32 %v430, %v1381
    %v1389 = vxor.u32 %v1385, 2147483648
    %v1390 = vxor.u32 %v1386, 2147483648
    %v1391 = vxor.u32 %v1387, 2147483648
    %v1392 = vmul.f32 %v1389, 1.442695
    %v1393 = vpow.pop %v1392
    %v1394 = vmul.f32 %v1390, 1.442695
    %v1395 = vpow.pop %v1394
    %v1396 = vmul.f32 %v1391, 1.442695
    %v1397 = vpow.pop %v1396
    %v1398 = vadd.f32 %v1393, 1.0
    %v1399 = vadd.f32 %v1395, 1.0
    %v1400 = vadd.f32 %v1397, 1.0
    %v1401 = vrcp.pop %v1398
    %v1402 = vmul.f32 1.0, %v1401
    %v1403 = vrcp.pop %v1399
    %v1404 = vmul.f32 1.0, %v1403
    %v1405 = vrcp.pop %v1400
    %v1406 = vmul.f32 1.0, %v1405
    %v1407 = vtanh.pop %v1388
    %v1408 = vmul.f32 %v1404, %v1298
    %v1409 = vmul.f32 %v1402, %v1407
    %v1410 = vadd.f32 %v1408, %v1409
    %v1411 = vtanh.pop %v1410
    %v1412 = vmul.f32 %v1406, %v1411
    %1413 = vst [vmem:[#allocation6 + $0x30] sm:$0xff] %v1412
    %v1414 = vpack.c.bf16 %v1412, %v1412
    %1415 = vmatprep.subr.bf16.mxu0 %v568
    %1416 = vmatpush1.bf16.msra.mxu0 %v567
    %1417 = vmatprep.subr.bf16.mxu0 %v572
    %1418 = vmatpush1.bf16.msra.mxu0 %v571
    %1419 = vmatprep.subr.bf16.mxu0 %v576
    %1420 = vmatpush1.bf16.msra.mxu0 %v575
    %1421 = vmatprep.subr.bf16.mxu0 %v580
    %1422 = vmatpush1.bf16.msra.mxu0 %v579
    %1423 = vmatprep.subr.bf16.mxu0 %v584
    %1424 = vmatpush1.bf16.msra.mxu0 %v583
    %1425 = vmatprep.subr.bf16.mxu0 %v588
    %1426 = vmatpush1.bf16.msra.mxu0 %v587
    %1427 = vmatprep.subr.bf16.mxu0 %v592
    %1428 = vmatpush1.bf16.msra.mxu0 %v591
    %1429 = vmatprep.subr.bf16.mxu0 %v596
    %1430 = vmatpush1.bf16.msra.mxu0 %v595
    %1431 = vmatprep.subr.bf16.mxu0 0
    %1432 = vmatpush1.bf16.msra.mxu0 0
    %1433 = vmatprep.subr.bf16.mxu0 0
    %1434 = vmatpush1.bf16.msra.mxu0 0
    %1435 = vmatprep.subr.bf16.mxu0 0
    %1436 = vmatpush1.bf16.msra.mxu0 0
    %1437 = vmatprep.subr.bf16.mxu0 0
    %1438 = vmatpush1.bf16.msra.mxu0 0
    %1439 = vmatprep.subr.bf16.mxu0 0
    %1440 = vmatpush1.bf16.msra.mxu0 0
    %1441 = vmatprep.subr.bf16.mxu0 0
    %1442 = vmatpush1.bf16.msra.mxu0 0
    %1443 = vmatprep.subr.bf16.mxu0 0
    %1444 = vmatpush1.bf16.msra.mxu0 0
    %1445 = vmatprep.subr.bf16.mxu0 0
    %1446 = vmatpush1.bf16.msra.mxu0 0
    %1447 = vmatprep.mubr.bf16.mxu0 0
    %1448 = vmatmul.mubr.bf16.gmra.mrb[0].mxu0 %v1414
    %v1449 = vpop.f32.mrb[0].mxu0
    %v1450 = vadd.f32 0.0, %v1449
    %v1451 = vpop.f32.mrb[0].mxu0
    %v1452 = vadd.f32 0.0, %v1451
    %v1453 = vpop.f32.mrb[0].mxu0
    %v1454 = vpop.f32.mrb[0].mxu0
    %1455 = vdwg.mxu0
    %1456 = vmatprep.subr.bf16.mxu0 %v570
    %1457 = vmatpush1.bf16.msra.mxu0 %v569
    %1458 = vmatprep.subr.bf16.mxu0 %v574
    %1459 = vmatpush1.bf16.msra.mxu0 %v573
    %1460 = vmatprep.subr.bf16.mxu0 %v578
    %1461 = vmatpush1.bf16.msra.mxu0 %v577
    %1462 = vmatprep.subr.bf16.mxu0 %v582
    %1463 = vmatpush1.bf16.msra.mxu0 %v581
    %1464 = vmatprep.subr.bf16.mxu0 %v586
    %1465 = vmatpush1.bf16.msra.mxu0 %v585
    %1466 = vmatprep.subr.bf16.mxu0 %v590
    %1467 = vmatpush1.bf16.msra.mxu0 %v589
    %1468 = vmatprep.subr.bf16.mxu0 %v594
    %1469 = vmatpush1.bf16.msra.mxu0 %v593
    %1470 = vmatprep.subr.bf16.mxu0 %v598
    %1471 = vmatpush1.bf16.msra.mxu0 %v597
    %1472 = vmatprep.subr.bf16.mxu0 0
    %1473 = vmatpush1.bf16.msra.mxu0 0
    %1474 = vmatprep.subr.bf16.mxu0 0
    %1475 = vmatpush1.bf16.msra.mxu0 0
    %1476 = vmatprep.subr.bf16.mxu0 0
    %1477 = vmatpush1.bf16.msra.mxu0 0
    %1478 = vmatprep.subr.bf16.mxu0 0
    %1479 = vmatpush1.bf16.msra.mxu0 0
    %1480 = vmatprep.subr.bf16.mxu0 0
    %1481 = vmatpush1.bf16.msra.mxu0 0
    %1482 = vmatprep.subr.bf16.mxu0 0
    %1483 = vmatpush1.bf16.msra.mxu0 0
    %1484 = vmatprep.subr.bf16.mxu0 0
    %1485 = vmatpush1.bf16.msra.mxu0 0
    %1486 = vmatprep.subr.bf16.mxu0 0
    %1487 = vmatpush1.bf16.msra.mxu0 0
    %1488 = vmatprep.mubr.bf16.mxu0 0
    %1489 = vmatmul.mubr.bf16.gmra.mrb[0].mxu0 %v1414
    %v1490 = vpop.f32.mrb[0].mxu0
    %v1491 = vadd.f32 0.0, %v1490
    %v1492 = vpop.f32.mrb[0].mxu0
    %v1493 = vadd.f32 0.0, %v1492
    %v1494 = vpop.f32.mrb[0].mxu0
    %v1495 = vpop.f32.mrb[0].mxu0
    %1496 = vdwg.mxu0
    %v1497 = vadd.f32 %v359, %v1450
    %v1498 = vadd.f32 %v361, %v1452
    %v1499 = vadd.f32 %v432, %v1491
    %v1500 = vadd.f32 %v434, %v1493
    %v1501 = vxor.u32 %v1497, 2147483648
    %v1502 = vxor.u32 %v1498, 2147483648
    %v1503 = vxor.u32 %v1499, 2147483648
    %v1504 = vmul.f32 %v1501, 1.442695
    %v1505 = vpow.pop %v1504
    %v1506 = vmul.f32 %v1502, 1.442695
    %v1507 = vpow.pop %v1506
    %v1508 = vmul.f32 %v1503, 1.442695
    %v1509 = vpow.pop %v1508
    %v1510 = vadd.f32 %v1505, 1.0
    %v1511 = vadd.f32 %v1507, 1.0
    %v1512 = vadd.f32 %v1509, 1.0
    %v1513 = vrcp.pop %v1510
    %v1514 = vmul.f32 1.0, %v1513
    %v1515 = vrcp.pop %v1511
    %v1516 = vmul.f32 1.0, %v1515
    %v1517 = vrcp.pop %v1512
    %v1518 = vmul.f32 1.0, %v1517
    %v1519 = vtanh.pop %v1500
    %v1520 = vmul.f32 %v1516, %v1410
    %v1521 = vmul.f32 %v1514, %v1519
    %v1522 = vadd.f32 %v1520, %v1521
    %v1523 = vtanh.pop %v1522
    %v1524 = vmul.f32 %v1518, %v1523
    %1525 = vst [vmem:[#allocation6 + $0x38] sm:$0xff] %v1524
    %1526 = vst [vmem:[#allocation2] sm:$0xff] %v1524
    %1527 = vst [vmem:[#allocation3] sm:$0xff] %v1522
    %v1528 = vld [vmem:[#allocation6] sm:$0xff]
    %v1529 = vld [vmem:[#allocation6 + $0x8] sm:$0xff]
    %v1530 = vld [vmem:[#allocation6 + $0x10] sm:$0xff]
    %v1531 = vld [vmem:[#allocation6 + $0x18] sm:$0xff]
    %v1532 = vld [vmem:[#allocation6 + $0x20] sm:$0xff]
    %v1533 = vld [vmem:[#allocation6 + $0x28] sm:$0xff]
    %v1534 = vld [vmem:[#allocation6 + $0x30] sm:$0xff]
    %v1535 = vld [vmem:[#allocation6 + $0x38] sm:$0xff]
    %v1536 = vpack.c.bf16 %v1529, %v1528
    %v1537 = vpack.c.bf16 %v1531, %v1530
    %v1538 = vpack.c.bf16 %v1533, %v1532
    %v1539 = vpack.c.bf16 %v1535, %v1534
    %v1540 = vld [vmem:[%s4] sm:$0xff]
    %v1541 = vld [vmem:[%s4 + $0x8] sm:$0xff]
    %v1542 = vld [vmem:[%s4 + $0x10] sm:$0xff]
    %v1543 = vld [vmem:[%s4 + $0x18] sm:$0xff]
    %v1544 = vld [vmem:[%s4 + $0x20] sm:$0xff]
    %v1545 = vld [vmem:[%s4 + $0x28] sm:$0xff]
    %v1546 = vld [vmem:[%s4 + $0x30] sm:$0xff]
    %v1547 = vld [vmem:[%s4 + $0x38] sm:$0xff]
    %v1548 = vld [vmem:[%s4 + $0x40] sm:$0xff]
    %v1549 = vld [vmem:[%s4 + $0x48] sm:$0xff]
    %v1550 = vld [vmem:[%s4 + $0x50] sm:$0xff]
    %v1551 = vld [vmem:[%s4 + $0x58] sm:$0xff]
    %v1552 = vld [vmem:[%s4 + $0x60] sm:$0xff]
    %v1553 = vld [vmem:[%s4 + $0x68] sm:$0xff]
    %v1554 = vld [vmem:[%s4 + $0x70] sm:$0xff]
    %v1555 = vld [vmem:[%s4 + $0x78] sm:$0xff]
    %v1556 = vld [vmem:[%s4 + $0x80] sm:$0xff]
    %v1557 = vld [vmem:[%s4 + $0x88] sm:$0xff]
    %v1558 = vld [vmem:[%s4 + $0x90] sm:$0xff]
    %v1559 = vld [vmem:[%s4 + $0x98] sm:$0xff]
    %v1560 = vld [vmem:[%s4 + $0xa0] sm:$0xff]
    %v1561 = vld [vmem:[%s4 + $0xa8] sm:$0xff]
    %v1562 = vld [vmem:[%s4 + $0xb0] sm:$0xff]
    %v1563 = vld [vmem:[%s4 + $0xb8] sm:$0xff]
    %v1564 = vld [vmem:[%s4 + $0xc0] sm:$0xff]
    %v1565 = vld [vmem:[%s4 + $0xc8] sm:$0xff]
    %v1566 = vld [vmem:[%s4 + $0xd0] sm:$0xff]
    %v1567 = vld [vmem:[%s4 + $0xd8] sm:$0xff]
    %v1568 = vld [vmem:[%s4 + $0xe0] sm:$0xff]
    %v1569 = vld [vmem:[%s4 + $0xe8] sm:$0xff]
    %v1570 = vld [vmem:[%s4 + $0xf0] sm:$0xff]
    %v1571 = vld [vmem:[%s4 + $0xf8] sm:$0xff]
    %v1572 = vld [vmem:[%s6] sm:$0xf]
    %v1574 = vlaneseq
    %v1575 = vshrl.u32 %v1574, 7
    %v1576 = vsub.s32 0, %v1575
    %v1577 = vrot.slane %v1572, %v1576
    %v1578 = vlaneseq
    %v1579 = vshrl.u32 %v1578, 7
    %v1580 = vsub.s32 1, %v1579
    %v1581 = vrot.slane %v1572, %v1580
    %v1582 = vlaneseq
    %v1583 = vshrl.u32 %v1582, 7
    %v1584 = vsub.s32 2, %v1583
    %v1585 = vrot.slane %v1572, %v1584
    %v1586 = vlaneseq
    %v1587 = vshrl.u32 %v1586, 7
    %v1588 = vsub.s32 3, %v1587
    %v1589 = vrot.slane %v1572, %v1588
    %v1626 = vunpack.c.l.b16 %v1540
    %v1627 = vunpack.c.h.b16 %v1540
    %v1628 = vunpack.c.l.b16 %v1541
    %v1629 = vunpack.c.h.b16 %v1541
    %v1630 = vunpack.c.l.b16 %v1542
    %v1631 = vunpack.c.h.b16 %v1542
    %v1632 = vunpack.c.l.b16 %v1543
    %v1633 = vunpack.c.h.b16 %v1543
    %v1634 = vunpack.c.l.b16 %v1544
    %v1635 = vunpack.c.h.b16 %v1544
    %v1636 = vunpack.c.l.b16 %v1545
    %v1637 = vunpack.c.h.b16 %v1545
    %v1638 = vunpack.c.l.b16 %v1546
    %v1639 = vunpack.c.h.b16 %v1546
    %v1640 = vunpack.c.l.b16 %v1547
    %v1641 = vunpack.c.h.b16 %v1547
    %v1642 = vunpack.c.l.b16 %v1548
    %v1643 = vunpack.c.h.b16 %v1548
    %v1644 = vunpack.c.l.b16 %v1549
    %v1645 = vunpack.c.h.b16 %v1549
    %v1646 = vunpack.c.l.b16 %v1550
    %v1647 = vunpack.c.h.b16 %v1550
    %v1648 = vunpack.c.l.b16 %v1551
    %v1649 = vunpack.c.h.b16 %v1551
    %v1650 = vunpack.c.l.b16 %v1552
    %v1651 = vunpack.c.h.b16 %v1552
    %v1652 = vunpack.c.l.b16 %v1553
    %v1653 = vunpack.c.h.b16 %v1553
    %v1654 = vunpack.c.l.b16 %v1554
    %v1655 = vunpack.c.h.b16 %v1554
    %v1656 = vunpack.c.l.b16 %v1555
    %v1657 = vunpack.c.h.b16 %v1555
    %v1658 = vunpack.c.l.b16 %v1556
    %v1659 = vunpack.c.h.b16 %v1556
    %v1660 = vunpack.c.l.b16 %v1557
    %v1661 = vunpack.c.h.b16 %v1557
    %v1662 = vunpack.c.l.b16 %v1558
    %v1663 = vunpack.c.h.b16 %v1558
    %v1664 = vunpack.c.l.b16 %v1559
    %v1665 = vunpack.c.h.b16 %v1559
    %v1666 = vunpack.c.l.b16 %v1560
    %v1667 = vunpack.c.h.b16 %v1560
    %v1668 = vunpack.c.l.b16 %v1561
    %v1669 = vunpack.c.h.b16 %v1561
    %v1670 = vunpack.c.l.b16 %v1562
    %v1671 = vunpack.c.h.b16 %v1562
    %v1672 = vunpack.c.l.b16 %v1563
    %v1673 = vunpack.c.h.b16 %v1563
    %v1674 = vunpack.c.l.b16 %v1564
    %v1675 = vunpack.c.h.b16 %v1564
    %v1676 = vunpack.c.l.b16 %v1565
    %v1677 = vunpack.c.h.b16 %v1565
    %v1678 = vunpack.c.l.b16 %v1566
    %v1679 = vunpack.c.h.b16 %v1566
    %v1680 = vunpack.c.l.b16 %v1567
    %v1681 = vunpack.c.h.b16 %v1567
    %v1682 = vunpack.c.l.b16 %v1568
    %v1683 = vunpack.c.h.b16 %v1568
    %v1684 = vunpack.c.l.b16 %v1569
    %v1685 = vunpack.c.h.b16 %v1569
    %v1686 = vunpack.c.l.b16 %v1570
    %v1687 = vunpack.c.h.b16 %v1570
    %v1688 = vunpack.c.l.b16 %v1571
    %v1689 = vunpack.c.h.b16 %v1571
    %v1690 = vpack.c.b16 %v1630, %v1626
    %v1691 = vpack.c.b16 %v1631, %v1627
    %v1692 = vpack.c.b16 %v1632, %v1628
    %v1693 = vpack.c.b16 %v1633, %v1629
    %v1694 = vpack.c.b16 %v1638, %v1634
    %v1695 = vpack.c.b16 %v1639, %v1635
    %v1696 = vpack.c.b16 %v1640, %v1636
    %v1697 = vpack.c.b16 %v1641, %v1637
    %v1698 = vpack.c.b16 %v1646, %v1642
    %v1699 = vpack.c.b16 %v1647, %v1643
    %v1700 = vpack.c.b16 %v1648, %v1644
    %v1701 = vpack.c.b16 %v1649, %v1645
    %v1702 = vpack.c.b16 %v1654, %v1650
    %v1703 = vpack.c.b16 %v1655, %v1651
    %v1704 = vpack.c.b16 %v1656, %v1652
    %v1705 = vpack.c.b16 %v1657, %v1653
    %v1706 = vpack.c.b16 %v1662, %v1658
    %v1707 = vpack.c.b16 %v1663, %v1659
    %v1708 = vpack.c.b16 %v1664, %v1660
    %v1709 = vpack.c.b16 %v1665, %v1661
    %v1710 = vpack.c.b16 %v1670, %v1666
    %v1711 = vpack.c.b16 %v1671, %v1667
    %v1712 = vpack.c.b16 %v1672, %v1668
    %v1713 = vpack.c.b16 %v1673, %v1669
    %v1714 = vpack.c.b16 %v1678, %v1674
    %v1715 = vpack.c.b16 %v1679, %v1675
    %v1716 = vpack.c.b16 %v1680, %v1676
    %v1717 = vpack.c.b16 %v1681, %v1677
    %v1718 = vpack.c.b16 %v1686, %v1682
    %v1719 = vpack.c.b16 %v1687, %v1683
    %v1720 = vpack.c.b16 %v1688, %v1684
    %v1721 = vpack.c.b16 %v1689, %v1685
    %1754 = vmatprep.subr.bf16.mxu0 %v1691
    %1755 = vmatpush1.bf16.msra.mxu0 %v1690
    %1756 = vmatprep.subr.bf16.mxu0 %v1695
    %1757 = vmatpush1.bf16.msra.mxu0 %v1694
    %1758 = vmatprep.subr.bf16.mxu0 %v1699
    %1759 = vmatpush1.bf16.msra.mxu0 %v1698
    %1760 = vmatprep.subr.bf16.mxu0 %v1703
    %1761 = vmatpush1.bf16.msra.mxu0 %v1702
    %1762 = vmatprep.subr.bf16.mxu0 %v1707
    %1763 = vmatpush1.bf16.msra.mxu0 %v1706
    %1764 = vmatprep.subr.bf16.mxu0 %v1711
    %1765 = vmatpush1.bf16.msra.mxu0 %v1710
    %1766 = vmatprep.subr.bf16.mxu0 %v1715
    %1767 = vmatpush1.bf16.msra.mxu0 %v1714
    %1768 = vmatprep.subr.bf16.mxu0 %v1719
    %1769 = vmatpush1.bf16.msra.mxu0 %v1718
    %1770 = vmatprep.subr.bf16.mxu0 0
    %1771 = vmatpush1.bf16.msra.mxu0 0
    %1772 = vmatprep.subr.bf16.mxu0 0
    %1773 = vmatpush1.bf16.msra.mxu0 0
    %1774 = vmatprep.subr.bf16.mxu0 0
    %1775 = vmatpush1.bf16.msra.mxu0 0
    %1776 = vmatprep.subr.bf16.mxu0 0
    %1777 = vmatpush1.bf16.msra.mxu0 0
    %1778 = vmatprep.subr.bf16.mxu0 0
    %1779 = vmatpush1.bf16.msra.mxu0 0
    %1780 = vmatprep.subr.bf16.mxu0 0
    %1781 = vmatpush1.bf16.msra.mxu0 0
    %1782 = vmatprep.subr.bf16.mxu0 0
    %1783 = vmatpush1.bf16.msra.mxu0 0
    %1784 = vmatprep.subr.bf16.mxu0 0
    %1785 = vmatpush1.bf16.msra.mxu0 0
    %1786 = vmatprep.mubr.bf16.mxu0 0
    %1787 = vmatmul.mubr.bf16.gmra.mrb[0].mxu0 %v1536
    %v1788 = vpop.f32.mrb[0].mxu0
    %v1789 = vadd.f32 %v1577, %v1788
    %v1790 = vpop.f32.mrb[0].mxu0
    %v1791 = vadd.f32 %v1581, %v1790
    %v1792 = vpop.f32.mrb[0].mxu0
    %v1793 = vadd.f32 %v1577, %v1792
    %v1794 = vpop.f32.mrb[0].mxu0
    %v1795 = vadd.f32 %v1581, %v1794
    %1796 = vmatprep.mubr.bf16.mxu0 0
    %1797 = vmatmul.mubr.bf16.gmra.mrb[0].mxu0 %v1537
    %v1798 = vpop.f32.mrb[0].mxu0
    %v1799 = vadd.f32 %v1577, %v1798
    %v1800 = vpop.f32.mrb[0].mxu0
    %v1801 = vadd.f32 %v1581, %v1800
    %v1802 = vpop.f32.mrb[0].mxu0
    %v1803 = vadd.f32 %v1577, %v1802
    %v1804 = vpop.f32.mrb[0].mxu0
    %v1805 = vadd.f32 %v1581, %v1804
    %1806 = vmatprep.mubr.bf16.mxu0 0
    %1807 = vmatmul.mubr.bf16.gmra.mrb[0].mxu0 %v1538
    %v1808 = vpop.f32.mrb[0].mxu0
    %v1809 = vadd.f32 %v1577, %v1808
    %v1810 = vpop.f32.mrb[0].mxu0
    %v1811 = vadd.f32 %v1581, %v1810
    %v1812 = vpop.f32.mrb[0].mxu0
    %v1813 = vadd.f32 %v1577, %v1812
    %v1814 = vpop.f32.mrb[0].mxu0
    %v1815 = vadd.f32 %v1581, %v1814
    %1816 = vmatprep.mubr.bf16.mxu0 0
    %1817 = vmatmul.mubr.bf16.gmra.mrb[0].mxu0 %v1539
    %v1818 = vpop.f32.mrb[0].mxu0
    %v1819 = vadd.f32 %v1577, %v1818
    %v1820 = vpop.f32.mrb[0].mxu0
    %v1821 = vadd.f32 %v1581, %v1820
    %v1822 = vpop.f32.mrb[0].mxu0
    %v1823 = vadd.f32 %v1577, %v1822
    %v1824 = vpop.f32.mrb[0].mxu0
    %v1825 = vadd.f32 %v1581, %v1824
    %1826 = vdwg.mxu0
    %1827 = vmatprep.subr.bf16.mxu0 %v1693
    %1828 = vmatpush1.bf16.msra.mxu0 %v1692
    %1829 = vmatprep.subr.bf16.mxu0 %v1697
    %1830 = vmatpush1.bf16.msra.mxu0 %v1696
    %1831 = vmatprep.subr.bf16.mxu0 %v1701
    %1832 = vmatpush1.bf16.msra.mxu0 %v1700
    %1833 = vmatprep.subr.bf16.mxu0 %v1705
    %1834 = vmatpush1.bf16.msra.mxu0 %v1704
    %1835 = vmatprep.subr.bf16.mxu0 %v1709
    %1836 = vmatpush1.bf16.msra.mxu0 %v1708
    %1837 = vmatprep.subr.bf16.mxu0 %v1713
    %1838 = vmatpush1.bf16.msra.mxu0 %v1712
    %1839 = vmatprep.subr.bf16.mxu0 %v1717
    %1840 = vmatpush1.bf16.msra.mxu0 %v1716
    %1841 = vmatprep.subr.bf16.mxu0 %v1721
    %1842 = vmatpush1.bf16.msra.mxu0 %v1720
    %1843 = vmatprep.subr.bf16.mxu0 0
    %1844 = vmatpush1.bf16.msra.mxu0 0
    %1845 = vmatprep.subr.bf16.mxu0 0
    %1846 = vmatpush1.bf16.msra.mxu0 0
    %1847 = vmatprep.subr.bf16.mxu0 0
    %1848 = vmatpush1.bf16.msra.mxu0 0
    %1849 = vmatprep.subr.bf16.mxu0 0
    %1850 = vmatpush1.bf16.msra.mxu0 0
    %1851 = vmatprep.subr.bf16.mxu0 0
    %1852 = vmatpush1.bf16.msra.mxu0 0
    %1853 = vmatprep.subr.bf16.mxu0 0
    %1854 = vmatpush1.bf16.msra.mxu0 0
    %1855 = vmatprep.subr.bf16.mxu0 0
    %1856 = vmatpush1.bf16.msra.mxu0 0
    %1857 = vmatprep.subr.bf16.mxu0 0
    %1858 = vmatpush1.bf16.msra.mxu0 0
    %1859 = vmatprep.mubr.bf16.mxu0 0
    %1860 = vmatmul.mubr.bf16.gmra.mrb[0].mxu0 %v1536
    %v1861 = vpop.f32.mrb[0].mxu0
    %v1862 = vadd.f32 %v1585, %v1861
    %v1863 = vpop.f32.mrb[0].mxu0
    %v1864 = vadd.f32 %v1589, %v1863
    %v1865 = vpop.f32.mrb[0].mxu0
    %v1866 = vadd.f32 %v1585, %v1865
    %v1867 = vpop.f32.mrb[0].mxu0
    %v1868 = vadd.f32 %v1589, %v1867
    %1869 = vmatprep.mubr.bf16.mxu0 0
    %1870 = vmatmul.mubr.bf16.gmra.mrb[0].mxu0 %v1537
    %v1871 = vpop.f32.mrb[0].mxu0
    %v1872 = vadd.f32 %v1585, %v1871
    %v1873 = vpop.f32.mrb[0].mxu0
    %v1874 = vadd.f32 %v1589, %v1873
    %v1875 = vpop.f32.mrb[0].mxu0
    %v1876 = vadd.f32 %v1585, %v1875
    %v1877 = vpop.f32.mrb[0].mxu0
    %v1878 = vadd.f32 %v1589, %v1877
    %1879 = vmatprep.mubr.bf16.mxu0 0
    %1880 = vmatmul.mubr.bf16.gmra.mrb[0].mxu0 %v1538
    %v1881 = vpop.f32.mrb[0].mxu0
    %v1882 = vadd.f32 %v1585, %v1881
    %v1883 = vpop.f32.mrb[0].mxu0
    %v1884 = vadd.f32 %v1589, %v1883
    %v1885 = vpop.f32.mrb[0].mxu0
    %v1886 = vadd.f32 %v1585, %v1885
    %v1887 = vpop.f32.mrb[0].mxu0
    %v1888 = vadd.f32 %v1589, %v1887
    %1889 = vmatprep.mubr.bf16.mxu0 0
    %1890 = vmatmul.mubr.bf16.gmra.mrb[0].mxu0 %v1539
    %v1891 = vpop.f32.mrb[0].mxu0
    %v1892 = vadd.f32 %v1585, %v1891
    %v1893 = vpop.f32.mrb[0].mxu0
    %v1894 = vadd.f32 %v1589, %v1893
    %v1895 = vpop.f32.mrb[0].mxu0
    %v1896 = vadd.f32 %v1585, %v1895
    %v1897 = vpop.f32.mrb[0].mxu0
    %v1898 = vadd.f32 %v1589, %v1897
    %1899 = vdwg.mxu0
    %v1900 = vld [vmem:[#allocation4] sm:$0xff]
    %v1901 = vld [vmem:[#allocation5] sm:$0xff]
    %v1902 = vld [vmem:[#allocation7] sm:$0xff]
    %v1903 = vld [vmem:[#allocation7 + $0x8] sm:$0xff]
    %v1904 = vld [vmem:[#allocation7 + $0x10] sm:$0xff]
    %v1905 = vld [vmem:[#allocation7 + $0x18] sm:$0xff]
    %v1906 = vld [vmem:[#allocation7 + $0x20] sm:$0xff]
    %v1907 = vld [vmem:[#allocation7 + $0x28] sm:$0xff]
    %v1908 = vld [vmem:[#allocation7 + $0x30] sm:$0xff]
    %v1909 = vld [vmem:[#allocation7 + $0x38] sm:$0xff]
    %v1910 = vld [vmem:[#allocation7 + $0x40] sm:$0xff]
    %v1911 = vld [vmem:[#allocation7 + $0x48] sm:$0xff]
    %v1912 = vld [vmem:[#allocation7 + $0x50] sm:$0xff]
    %v1913 = vld [vmem:[#allocation7 + $0x58] sm:$0xff]
    %v1914 = vld [vmem:[#allocation7 + $0x60] sm:$0xff]
    %v1915 = vld [vmem:[#allocation7 + $0x68] sm:$0xff]
    %v1916 = vld [vmem:[#allocation7 + $0x70] sm:$0xff]
    %v1917 = vld [vmem:[#allocation7 + $0x78] sm:$0xff]
    %v1918 = vld [vmem:[#allocation7 + $0x80] sm:$0xff]
    %v1919 = vld [vmem:[#allocation7 + $0x88] sm:$0xff]
    %v1920 = vld [vmem:[#allocation7 + $0x90] sm:$0xff]
    %v1921 = vld [vmem:[#allocation7 + $0x98] sm:$0xff]
    %v1922 = vld [vmem:[#allocation7 + $0xa0] sm:$0xff]
    %v1923 = vld [vmem:[#allocation7 + $0xa8] sm:$0xff]
    %v1924 = vld [vmem:[#allocation7 + $0xb0] sm:$0xff]
    %v1925 = vld [vmem:[#allocation7 + $0xb8] sm:$0xff]
    %v1926 = vld [vmem:[#allocation7 + $0xc0] sm:$0xff]
    %v1927 = vld [vmem:[#allocation7 + $0xc8] sm:$0xff]
    %v1928 = vld [vmem:[#allocation7 + $0xd0] sm:$0xff]
    %v1929 = vld [vmem:[#allocation7 + $0xd8] sm:$0xff]
    %v1930 = vld [vmem:[#allocation7 + $0xe0] sm:$0xff]
    %v1931 = vld [vmem:[#allocation7 + $0xe8] sm:$0xff]
    %v1932 = vld [vmem:[#allocation7 + $0xf0] sm:$0xff]
    %v1933 = vld [vmem:[#allocation7 + $0xf8] sm:$0xff]
    %v1934 = vpack.c.bf16 %v1900, %v1900
    %v1967 = vunpack.c.l.b16 %v1902
    %v1968 = vunpack.c.h.b16 %v1902
    %v1969 = vunpack.c.l.b16 %v1903
    %v1970 = vunpack.c.h.b16 %v1903
    %v1971 = vunpack.c.l.b16 %v1904
    %v1972 = vunpack.c.h.b16 %v1904
    %v1973 = vunpack.c.l.b16 %v1905
    %v1974 = vunpack.c.h.b16 %v1905
    %v1975 = vunpack.c.l.b16 %v1906
    %v1976 = vunpack.c.h.b16 %v1906
    %v1977 = vunpack.c.l.b16 %v1907
    %v1978 = vunpack.c.h.b16 %v1907
    %v1979 = vunpack.c.l.b16 %v1908
    %v1980 = vunpack.c.h.b16 %v1908
    %v1981 = vunpack.c.l.b16 %v1909
    %v1982 = vunpack.c.h.b16 %v1909
    %v1983 = vunpack.c.l.b16 %v1910
    %v1984 = vunpack.c.h.b16 %v1910
    %v1985 = vunpack.c.l.b16 %v1911
    %v1986 = vunpack.c.h.b16 %v1911
    %v1987 = vunpack.c.l.b16 %v1912
    %v1988 = vunpack.c.h.b16 %v1912
    %v1989 = vunpack.c.l.b16 %v1913
    %v1990 = vunpack.c.h.b16 %v1913
    %v1991 = vunpack.c.l.b16 %v1914
    %v1992 = vunpack.c.h.b16 %v1914
    %v1993 = vunpack.c.l.b16 %v1915
    %v1994 = vunpack.c.h.b16 %v1915
    %v1995 = vunpack.c.l.b16 %v1916
    %v1996 = vunpack.c.h.b16 %v1916
    %v1997 = vunpack.c.l.b16 %v1917
    %v1998 = vunpack.c.h.b16 %v1917
    %v1999 = vunpack.c.l.b16 %v1918
    %v2000 = vunpack.c.h.b16 %v1918
    %v2001 = vunpack.c.l.b16 %v1919
    %v2002 = vunpack.c.h.b16 %v1919
    %v2003 = vunpack.c.l.b16 %v1920
    %v2004 = vunpack.c.h.b16 %v1920
    %v2005 = vunpack.c.l.b16 %v1921
    %v2006 = vunpack.c.h.b16 %v1921
    %v2007 = vunpack.c.l.b16 %v1922
    %v2008 = vunpack.c.h.b16 %v1922
    %v2009 = vunpack.c.l.b16 %v1923
    %v2010 = vunpack.c.h.b16 %v1923
    %v2011 = vunpack.c.l.b16 %v1924
    %v2012 = vunpack.c.h.b16 %v1924
    %v2013 = vunpack.c.l.b16 %v1925
    %v2014 = vunpack.c.h.b16 %v1925
    %v2015 = vunpack.c.l.b16 %v1926
    %v2016 = vunpack.c.h.b16 %v1926
    %v2017 = vunpack.c.l.b16 %v1927
    %v2018 = vunpack.c.h.b16 %v1927
    %v2019 = vunpack.c.l.b16 %v1928
    %v2020 = vunpack.c.h.b16 %v1928
    %v2021 = vunpack.c.l.b16 %v1929
    %v2022 = vunpack.c.h.b16 %v1929
    %v2023 = vunpack.c.l.b16 %v1930
    %v2024 = vunpack.c.h.b16 %v1930
    %v2025 = vunpack.c.l.b16 %v1931
    %v2026 = vunpack.c.h.b16 %v1931
    %v2027 = vunpack.c.l.b16 %v1932
    %v2028 = vunpack.c.h.b16 %v1932
    %v2029 = vunpack.c.l.b16 %v1933
    %v2030 = vunpack.c.h.b16 %v1933
    %v2031 = vpack.c.b16 %v1971, %v1967
    %v2032 = vpack.c.b16 %v1972, %v1968
    %v2033 = vpack.c.b16 %v1973, %v1969
    %v2034 = vpack.c.b16 %v1974, %v1970
    %v2035 = vpack.c.b16 %v1979, %v1975
    %v2036 = vpack.c.b16 %v1980, %v1976
    %v2037 = vpack.c.b16 %v1981, %v1977
    %v2038 = vpack.c.b16 %v1982, %v1978
    %v2039 = vpack.c.b16 %v1987, %v1983
    %v2040 = vpack.c.b16 %v1988, %v1984
    %v2041 = vpack.c.b16 %v1989, %v1985
    %v2042 = vpack.c.b16 %v1990, %v1986
    %v2043 = vpack.c.b16 %v1995, %v1991
    %v2044 = vpack.c.b16 %v1996, %v1992
    %v2045 = vpack.c.b16 %v1997, %v1993
    %v2046 = vpack.c.b16 %v1998, %v1994
    %v2047 = vpack.c.b16 %v2003, %v1999
    %v2048 = vpack.c.b16 %v2004, %v2000
    %v2049 = vpack.c.b16 %v2005, %v2001
    %v2050 = vpack.c.b16 %v2006, %v2002
    %v2051 = vpack.c.b16 %v2011, %v2007
    %v2052 = vpack.c.b16 %v2012, %v2008
    %v2053 = vpack.c.b16 %v2013, %v2009
    %v2054 = vpack.c.b16 %v2014, %v2010
    %v2055 = vpack.c.b16 %v2019, %v2015
    %v2056 = vpack.c.b16 %v2020, %v2016
    %v2057 = vpack.c.b16 %v2021, %v2017
    %v2058 = vpack.c.b16 %v2022, %v2018
    %v2059 = vpack.c.b16 %v2027, %v2023
    %v2060 = vpack.c.b16 %v2028, %v2024
    %v2061 = vpack.c.b16 %v2029, %v2025
    %v2062 = vpack.c.b16 %v2030, %v2026
    %2095 = vmatprep.subr.bf16.mxu0 %v2032
    %2096 = vmatpush1.bf16.msra.mxu0 %v2031
    %2097 = vmatprep.subr.bf16.mxu0 %v2036
    %2098 = vmatpush1.bf16.msra.mxu0 %v2035
    %2099 = vmatprep.subr.bf16.mxu0 %v2040
    %2100 = vmatpush1.bf16.msra.mxu0 %v2039
    %2101 = vmatprep.subr.bf16.mxu0 %v2044
    %2102 = vmatpush1.bf16.msra.mxu0 %v2043
    %2103 = vmatprep.subr.bf16.mxu0 %v2048
    %2104 = vmatpush1.bf16.msra.mxu0 %v2047
    %2105 = vmatprep.subr.bf16.mxu0 %v2052
    %2106 = vmatpush1.bf16.msra.mxu0 %v2051
    %2107 = vmatprep.subr.bf16.mxu0 %v2056
    %2108 = vmatpush1.bf16.msra.mxu0 %v2055
    %2109 = vmatprep.subr.bf16.mxu0 %v2060
    %2110 = vmatpush1.bf16.msra.mxu0 %v2059
    %2111 = vmatprep.subr.bf16.mxu0 0
    %2112 = vmatpush1.bf16.msra.mxu0 0
    %2113 = vmatprep.subr.bf16.mxu0 0
    %2114 = vmatpush1.bf16.msra.mxu0 0
    %2115 = vmatprep.subr.bf16.mxu0 0
    %2116 = vmatpush1.bf16.msra.mxu0 0
    %2117 = vmatprep.subr.bf16.mxu0 0
    %2118 = vmatpush1.bf16.msra.mxu0 0
    %2119 = vmatprep.subr.bf16.mxu0 0
    %2120 = vmatpush1.bf16.msra.mxu0 0
    %2121 = vmatprep.subr.bf16.mxu0 0
    %2122 = vmatpush1.bf16.msra.mxu0 0
    %2123 = vmatprep.subr.bf16.mxu0 0
    %2124 = vmatpush1.bf16.msra.mxu0 0
    %2125 = vmatprep.subr.bf16.mxu0 0
    %2126 = vmatpush1.bf16.msra.mxu0 0
    %2127 = vmatprep.mubr.bf16.mxu0 0
    %2128 = vmatmul.mubr.bf16.gmra.mrb[0].mxu0 %v1934
    %v2129 = vpop.f32.mrb[0].mxu0
    %v2130 = vadd.f32 0.0, %v2129
    %v2131 = vpop.f32.mrb[0].mxu0
    %v2132 = vadd.f32 0.0, %v2131
    %v2133 = vpop.f32.mrb[0].mxu0
    %v2134 = vpop.f32.mrb[0].mxu0
    %2135 = vdwg.mxu0
    %2136 = vmatprep.subr.bf16.mxu0 %v2034
    %2137 = vmatpush1.bf16.msra.mxu0 %v2033
    %2138 = vmatprep.subr.bf16.mxu0 %v2038
    %2139 = vmatpush1.bf16.msra.mxu0 %v2037
    %2140 = vmatprep.subr.bf16.mxu0 %v2042
    %2141 = vmatpush1.bf16.msra.mxu0 %v2041
    %2142 = vmatprep.subr.bf16.mxu0 %v2046
    %2143 = vmatpush1.bf16.msra.mxu0 %v2045
    %2144 = vmatprep.subr.bf16.mxu0 %v2050
    %2145 = vmatpush1.bf16.msra.mxu0 %v2049
    %2146 = vmatprep.subr.bf16.mxu0 %v2054
    %2147 = vmatpush1.bf16.msra.mxu0 %v2053
    %2148 = vmatprep.subr.bf16.mxu0 %v2058
    %2149 = vmatpush1.bf16.msra.mxu0 %v2057
    %2150 = vmatprep.subr.bf16.mxu0 %v2062
    %2151 = vmatpush1.bf16.msra.mxu0 %v2061
    %2152 = vmatprep.subr.bf16.mxu0 0
    %2153 = vmatpush1.bf16.msra.mxu0 0
    %2154 = vmatprep.subr.bf16.mxu0 0
    %2155 = vmatpush1.bf16.msra.mxu0 0
    %2156 = vmatprep.subr.bf16.mxu0 0
    %2157 = vmatpush1.bf16.msra.mxu0 0
    %2158 = vmatprep.subr.bf16.mxu0 0
    %2159 = vmatpush1.bf16.msra.mxu0 0
    %2160 = vmatprep.subr.bf16.mxu0 0
    %2161 = vmatpush1.bf16.msra.mxu0 0
    %2162 = vmatprep.subr.bf16.mxu0 0
    %2163 = vmatpush1.bf16.msra.mxu0 0
    %2164 = vmatprep.subr.bf16.mxu0 0
    %2165 = vmatpush1.bf16.msra.mxu0 0
    %2166 = vmatprep.subr.bf16.mxu0 0
    %2167 = vmatpush1.bf16.msra.mxu0 0
    %2168 = vmatprep.mubr.bf16.mxu0 0
    %2169 = vmatmul.mubr.bf16.gmra.mrb[0].mxu0 %v1934
    %v2170 = vpop.f32.mrb[0].mxu0
    %v2171 = vadd.f32 0.0, %v2170
    %v2172 = vpop.f32.mrb[0].mxu0
    %v2173 = vadd.f32 0.0, %v2172
    %v2174 = vpop.f32.mrb[0].mxu0
    %v2175 = vpop.f32.mrb[0].mxu0
    %2176 = vdwg.mxu0
    %v2177 = vadd.f32 %v1789, %v2130
    %v2178 = vadd.f32 %v1791, %v2132
    %v2179 = vadd.f32 %v1862, %v2171
    %v2180 = vadd.f32 %v1864, %v2173
    %v2181 = vxor.u32 %v2177, 2147483648
    %v2182 = vxor.u32 %v2178, 2147483648
    %v2183 = vxor.u32 %v2179, 2147483648
    %v2184 = vmul.f32 %v2181, 1.442695
    %v2185 = vpow.pop %v2184
    %v2186 = vmul.f32 %v2182, 1.442695
    %v2187 = vpow.pop %v2186
    %v2188 = vmul.f32 %v2183, 1.442695
    %v2189 = vpow.pop %v2188
    %v2190 = vadd.f32 %v2185, 1.0
    %v2191 = vadd.f32 %v2187, 1.0
    %v2192 = vadd.f32 %v2189, 1.0
    %v2193 = vrcp.pop %v2190
    %v2194 = vmul.f32 1.0, %v2193
    %v2195 = vrcp.pop %v2191
    %v2196 = vmul.f32 1.0, %v2195
    %v2197 = vrcp.pop %v2192
    %v2198 = vmul.f32 1.0, %v2197
    %v2199 = vtanh.pop %v2180
    %v2200 = vmul.f32 %v2196, %v1901
    %v2201 = vmul.f32 %v2194, %v2199
    %v2202 = vadd.f32 %v2200, %v2201
    %v2203 = vtanh.pop %v2202
    %v2204 = vmul.f32 %v2198, %v2203
    %2205 = vst [vmem:[%s9] sm:$0xff] %v2204
    %v2206 = vpack.c.bf16 %v2204, %v2204
    %2207 = vmatprep.subr.bf16.mxu0 %v2032
    %2208 = vmatpush1.bf16.msra.mxu0 %v2031
    %2209 = vmatprep.subr.bf16.mxu0 %v2036
    %2210 = vmatpush1.bf16.msra.mxu0 %v2035
    %2211 = vmatprep.subr.bf16.mxu0 %v2040
    %2212 = vmatpush1.bf16.msra.mxu0 %v2039
    %2213 = vmatprep.subr.bf16.mxu0 %v2044
    %2214 = vmatpush1.bf16.msra.mxu0 %v2043
    %2215 = vmatprep.subr.bf16.mxu0 %v2048
    %2216 = vmatpush1.bf16.msra.mxu0 %v2047
    %2217 = vmatprep.subr.bf16.mxu0 %v2052
    %2218 = vmatpush1.bf16.msra.mxu0 %v2051
    %2219 = vmatprep.subr.bf16.mxu0 %v2056
    %2220 = vmatpush1.bf16.msra.mxu0 %v2055
    %2221 = vmatprep.subr.bf16.mxu0 %v2060
    %2222 = vmatpush1.bf16.msra.mxu0 %v2059
    %2223 = vmatprep.subr.bf16.mxu0 0
    %2224 = vmatpush1.bf16.msra.mxu0 0
    %2225 = vmatprep.subr.bf16.mxu0 0
    %2226 = vmatpush1.bf16.msra.mxu0 0
    %2227 = vmatprep.subr.bf16.mxu0 0
    %2228 = vmatpush1.bf16.msra.mxu0 0
    %2229 = vmatprep.subr.bf16.mxu0 0
    %2230 = vmatpush1.bf16.msra.mxu0 0
    %2231 = vmatprep.subr.bf16.mxu0 0
    %2232 = vmatpush1.bf16.msra.mxu0 0
    %2233 = vmatprep.subr.bf16.mxu0 0
    %2234 = vmatpush1.bf16.msra.mxu0 0
    %2235 = vmatprep.subr.bf16.mxu0 0
    %2236 = vmatpush1.bf16.msra.mxu0 0
    %2237 = vmatprep.subr.bf16.mxu0 0
    %2238 = vmatpush1.bf16.msra.mxu0 0
    %2239 = vmatprep.mubr.bf16.mxu0 0
    %2240 = vmatmul.mubr.bf16.gmra.mrb[0].mxu0 %v2206
    %v2241 = vpop.f32.mrb[0].mxu0
    %v2242 = vadd.f32 0.0, %v2241
    %v2243 = vpop.f32.mrb[0].mxu0
    %v2244 = vadd.f32 0.0, %v2243
    %v2245 = vpop.f32.mrb[0].mxu0
    %v2246 = vpop.f32.mrb[0].mxu0
    %2247 = vdwg.mxu0
    %2248 = vmatprep.subr.bf16.mxu0 %v2034
    %2249 = vmatpush1.bf16.msra.mxu0 %v2033
    %2250 = vmatprep.subr.bf16.mxu0 %v2038
    %2251 = vmatpush1.bf16.msra.mxu0 %v2037
    %2252 = vmatprep.subr.bf16.mxu0 %v2042
    %2253 = vmatpush1.bf16.msra.mxu0 %v2041
    %2254 = vmatprep.subr.bf16.mxu0 %v2046
    %2255 = vmatpush1.bf16.msra.mxu0 %v2045
    %2256 = vmatprep.subr.bf16.mxu0 %v2050
    %2257 = vmatpush1.bf16.msra.mxu0 %v2049
    %2258 = vmatprep.subr.bf16.mxu0 %v2054
    %2259 = vmatpush1.bf16.msra.mxu0 %v2053
    %2260 = vmatprep.subr.bf16.mxu0 %v2058
    %2261 = vmatpush1.bf16.msra.mxu0 %v2057
    %2262 = vmatprep.subr.bf16.mxu0 %v2062
    %2263 = vmatpush1.bf16.msra.mxu0 %v2061
    %2264 = vmatprep.subr.bf16.mxu0 0
    %2265 = vmatpush1.bf16.msra.mxu0 0
    %2266 = vmatprep.subr.bf16.mxu0 0
    %2267 = vmatpush1.bf16.msra.mxu0 0
    %2268 = vmatprep.subr.bf16.mxu0 0
    %2269 = vmatpush1.bf16.msra.mxu0 0
    %2270 = vmatprep.subr.bf16.mxu0 0
    %2271 = vmatpush1.bf16.msra.mxu0 0
    %2272 = vmatprep.subr.bf16.mxu0 0
    %2273 = vmatpush1.bf16.msra.mxu0 0
    %2274 = vmatprep.subr.bf16.mxu0 0
    %2275 = vmatpush1.bf16.msra.mxu0 0
    %2276 = vmatprep.subr.bf16.mxu0 0
    %2277 = vmatpush1.bf16.msra.mxu0 0
    %2278 = vmatprep.subr.bf16.mxu0 0
    %2279 = vmatpush1.bf16.msra.mxu0 0
    %2280 = vmatprep.mubr.bf16.mxu0 0
    %2281 = vmatmul.mubr.bf16.gmra.mrb[0].mxu0 %v2206
    %v2282 = vpop.f32.mrb[0].mxu0
    %v2283 = vadd.f32 0.0, %v2282
    %v2284 = vpop.f32.mrb[0].mxu0
    %v2285 = vadd.f32 0.0, %v2284
    %v2286 = vpop.f32.mrb[0].mxu0
    %v2287 = vpop.f32.mrb[0].mxu0
    %2288 = vdwg.mxu0
    %v2289 = vadd.f32 %v1793, %v2242
    %v2290 = vadd.f32 %v1795, %v2244
    %v2291 = vadd.f32 %v1866, %v2283
    %v2292 = vadd.f32 %v1868, %v2285
    %v2293 = vxor.u32 %v2289, 2147483648
    %v2294 = vxor.u32 %v2290, 2147483648
    %v2295 = vxor.u32 %v2291, 2147483648
    %v2296 = vmul.f32 %v2293, 1.442695
    %v2297 = vpow.pop %v2296
    %v2298 = vmul.f32 %v2294, 1.442695
    %v2299 = vpow.pop %v2298
    %v2300 = vmul.f32 %v2295, 1.442695
    %v2301 = vpow.pop %v2300
    %v2302 = vadd.f32 %v2297, 1.0
    %v2303 = vadd.f32 %v2299, 1.0
    %v2304 = vadd.f32 %v2301, 1.0
    %v2305 = vrcp.pop %v2302
    %v2306 = vmul.f32 1.0, %v2305
    %v2307 = vrcp.pop %v2303
    %v2308 = vmul.f32 1.0, %v2307
    %v2309 = vrcp.pop %v2304
    %v2310 = vmul.f32 1.0, %v2309
    %v2311 = vtanh.pop %v2292
    %v2312 = vmul.f32 %v2308, %v2202
    %v2313 = vmul.f32 %v2306, %v2311
    %v2314 = vadd.f32 %v2312, %v2313
    %v2315 = vtanh.pop %v2314
    %v2316 = vmul.f32 %v2310, %v2315
    %2317 = vst [vmem:[%s9 + $0x8] sm:$0xff] %v2316
    %v2318 = vpack.c.bf16 %v2316, %v2316
    %2319 = vmatprep.subr.bf16.mxu0 %v2032
    %2320 = vmatpush1.bf16.msra.mxu0 %v2031
    %2321 = vmatprep.subr.bf16.mxu0 %v2036
    %2322 = vmatpush1.bf16.msra.mxu0 %v2035
    %2323 = vmatprep.subr.bf16.mxu0 %v2040
    %2324 = vmatpush1.bf16.msra.mxu0 %v2039
    %2325 = vmatprep.subr.bf16.mxu0 %v2044
    %2326 = vmatpush1.bf16.msra.mxu0 %v2043
    %2327 = vmatprep.subr.bf16.mxu0 %v2048
    %2328 = vmatpush1.bf16.msra.mxu0 %v2047
    %2329 = vmatprep.subr.bf16.mxu0 %v2052
    %2330 = vmatpush1.bf16.msra.mxu0 %v2051
    %2331 = vmatprep.subr.bf16.mxu0 %v2056
    %2332 = vmatpush1.bf16.msra.mxu0 %v2055
    %2333 = vmatprep.subr.bf16.mxu0 %v2060
    %2334 = vmatpush1.bf16.msra.mxu0 %v2059
    %2335 = vmatprep.subr.bf16.mxu0 0
    %2336 = vmatpush1.bf16.msra.mxu0 0
    %2337 = vmatprep.subr.bf16.mxu0 0
    %2338 = vmatpush1.bf16.msra.mxu0 0
    %2339 = vmatprep.subr.bf16.mxu0 0
    %2340 = vmatpush1.bf16.msra.mxu0 0
    %2341 = vmatprep.subr.bf16.mxu0 0
    %2342 = vmatpush1.bf16.msra.mxu0 0
    %2343 = vmatprep.subr.bf16.mxu0 0
    %2344 = vmatpush1.bf16.msra.mxu0 0
    %2345 = vmatprep.subr.bf16.mxu0 0
    %2346 = vmatpush1.bf16.msra.mxu0 0
    %2347 = vmatprep.subr.bf16.mxu0 0
    %2348 = vmatpush1.bf16.msra.mxu0 0
    %2349 = vmatprep.subr.bf16.mxu0 0
    %2350 = vmatpush1.bf16.msra.mxu0 0
    %2351 = vmatprep.mubr.bf16.mxu0 0
    %2352 = vmatmul.mubr.bf16.gmra.mrb[0].mxu0 %v2318
    %v2353 = vpop.f32.mrb[0].mxu0
    %v2354 = vadd.f32 0.0, %v2353
    %v2355 = vpop.f32.mrb[0].mxu0
    %v2356 = vadd.f32 0.0, %v2355
    %v2357 = vpop.f32.mrb[0].mxu0
    %v2358 = vpop.f32.mrb[0].mxu0
    %2359 = vdwg.mxu0
    %2360 = vmatprep.subr.bf16.mxu0 %v2034
    %2361 = vmatpush1.bf16.msra.mxu0 %v2033
    %2362 = vmatprep.subr.bf16.mxu0 %v2038
    %2363 = vmatpush1.bf16.msra.mxu0 %v2037
    %2364 = vmatprep.subr.bf16.mxu0 %v2042
    %2365 = vmatpush1.bf16.msra.mxu0 %v2041
    %2366 = vmatprep.subr.bf16.mxu0 %v2046
    %2367 = vmatpush1.bf16.msra.mxu0 %v2045
    %2368 = vmatprep.subr.bf16.mxu0 %v2050
    %2369 = vmatpush1.bf16.msra.mxu0 %v2049
    %2370 = vmatprep.subr.bf16.mxu0 %v2054
    %2371 = vmatpush1.bf16.msra.mxu0 %v2053
    %2372 = vmatprep.subr.bf16.mxu0 %v2058
    %2373 = vmatpush1.bf16.msra.mxu0 %v2057
    %2374 = vmatprep.subr.bf16.mxu0 %v2062
    %2375 = vmatpush1.bf16.msra.mxu0 %v2061
    %2376 = vmatprep.subr.bf16.mxu0 0
    %2377 = vmatpush1.bf16.msra.mxu0 0
    %2378 = vmatprep.subr.bf16.mxu0 0
    %2379 = vmatpush1.bf16.msra.mxu0 0
    %2380 = vmatprep.subr.bf16.mxu0 0
    %2381 = vmatpush1.bf16.msra.mxu0 0
    %2382 = vmatprep.subr.bf16.mxu0 0
    %2383 = vmatpush1.bf16.msra.mxu0 0
    %2384 = vmatprep.subr.bf16.mxu0 0
    %2385 = vmatpush1.bf16.msra.mxu0 0
    %2386 = vmatprep.subr.bf16.mxu0 0
    %2387 = vmatpush1.bf16.msra.mxu0 0
    %2388 = vmatprep.subr.bf16.mxu0 0
    %2389 = vmatpush1.bf16.msra.mxu0 0
    %2390 = vmatprep.subr.bf16.mxu0 0
    %2391 = vmatpush1.bf16.msra.mxu0 0
    %2392 = vmatprep.mubr.bf16.mxu0 0
    %2393 = vmatmul.mubr.bf16.gmra.mrb[0].mxu0 %v2318
    %v2394 = vpop.f32.mrb[0].mxu0
    %v2395 = vadd.f32 0.0, %v2394
    %v2396 = vpop.f32.mrb[0].mxu0
    %v2397 = vadd.f32 0.0, %v2396
    %v2398 = vpop.f32.mrb[0].mxu0
    %v2399 = vpop.f32.mrb[0].mxu0
    %2400 = vdwg.mxu0
    %v2401 = vadd.f32 %v1799, %v2354
    %v2402 = vadd.f32 %v1801, %v2356
    %v2403 = vadd.f32 %v1872, %v2395
    %v2404 = vadd.f32 %v1874, %v2397
    %v2405 = vxor.u32 %v2401, 2147483648
    %v2406 = vxor.u32 %v2402, 2147483648
    %v2407 = vxor.u32 %v2403, 2147483648
    %v2408 = vmul.f32 %v2405, 1.442695
    %v2409 = vpow.pop %v2408
    %v2410 = vmul.f32 %v2406, 1.442695
    %v2411 = vpow.pop %v2410
    %v2412 = vmul.f32 %v2407, 1.442695
    %v2413 = vpow.pop %v2412
    %v2414 = vadd.f32 %v2409, 1.0
    %v2415 = vadd.f32 %v2411, 1.0
    %v2416 = vadd.f32 %v2413, 1.0
    %v2417 = vrcp.pop %v2414
    %v2418 = vmul.f32 1.0, %v2417
    %v2419 = vrcp.pop %v2415
    %v2420 = vmul.f32 1.0, %v2419
    %v2421 = vrcp.pop %v2416
    %v2422 = vmul.f32 1.0, %v2421
    %v2423 = vtanh.pop %v2404
    %v2424 = vmul.f32 %v2420, %v2314
    %v2425 = vmul.f32 %v2418, %v2423
    %v2426 = vadd.f32 %v2424, %v2425
    %v2427 = vtanh.pop %v2426
    %v2428 = vmul.f32 %v2422, %v2427
    %2429 = vst [vmem:[%s9 + $0x10] sm:$0xff] %v2428
    %v2430 = vpack.c.bf16 %v2428, %v2428
    %2431 = vmatprep.subr.bf16.mxu0 %v2032
    %2432 = vmatpush1.bf16.msra.mxu0 %v2031
    %2433 = vmatprep.subr.bf16.mxu0 %v2036
    %2434 = vmatpush1.bf16.msra.mxu0 %v2035
    %2435 = vmatprep.subr.bf16.mxu0 %v2040
    %2436 = vmatpush1.bf16.msra.mxu0 %v2039
    %2437 = vmatprep.subr.bf16.mxu0 %v2044
    %2438 = vmatpush1.bf16.msra.mxu0 %v2043
    %2439 = vmatprep.subr.bf16.mxu0 %v2048
    %2440 = vmatpush1.bf16.msra.mxu0 %v2047
    %2441 = vmatprep.subr.bf16.mxu0 %v2052
    %2442 = vmatpush1.bf16.msra.mxu0 %v2051
    %2443 = vmatprep.subr.bf16.mxu0 %v2056
    %2444 = vmatpush1.bf16.msra.mxu0 %v2055
    %2445 = vmatprep.subr.bf16.mxu0 %v2060
    %2446 = vmatpush1.bf16.msra.mxu0 %v2059
    %2447 = vmatprep.subr.bf16.mxu0 0
    %2448 = vmatpush1.bf16.msra.mxu0 0
    %2449 = vmatprep.subr.bf16.mxu0 0
    %2450 = vmatpush1.bf16.msra.mxu0 0
    %2451 = vmatprep.subr.bf16.mxu0 0
    %2452 = vmatpush1.bf16.msra.mxu0 0
    %2453 = vmatprep.subr.bf16.mxu0 0
    %2454 = vmatpush1.bf16.msra.mxu0 0
    %2455 = vmatprep.subr.bf16.mxu0 0
    %2456 = vmatpush1.bf16.msra.mxu0 0
    %2457 = vmatprep.subr.bf16.mxu0 0
    %2458 = vmatpush1.bf16.msra.mxu0 0
    %2459 = vmatprep.subr.bf16.mxu0 0
    %2460 = vmatpush1.bf16.msra.mxu0 0
    %2461 = vmatprep.subr.bf16.mxu0 0
    %2462 = vmatpush1.bf16.msra.mxu0 0
    %2463 = vmatprep.mubr.bf16.mxu0 0
    %2464 = vmatmul.mubr.bf16.gmra.mrb[0].mxu0 %v2430
    %v2465 = vpop.f32.mrb[0].mxu0
    %v2466 = vadd.f32 0.0, %v2465
    %v2467 = vpop.f32.mrb[0].mxu0
    %v2468 = vadd.f32 0.0, %v2467
    %v2469 = vpop.f32.mrb[0].mxu0
    %v2470 = vpop.f32.mrb[0].mxu0
    %2471 = vdwg.mxu0
    %2472 = vmatprep.subr.bf16.mxu0 %v2034
    %2473 = vmatpush1.bf16.msra.mxu0 %v2033
    %2474 = vmatprep.subr.bf16.mxu0 %v2038
    %2475 = vmatpush1.bf16.msra.mxu0 %v2037
    %2476 = vmatprep.subr.bf16.mxu0 %v2042
    %2477 = vmatpush1.bf16.msra.mxu0 %v2041
    %2478 = vmatprep.subr.bf16.mxu0 %v2046
    %2479 = vmatpush1.bf16.msra.mxu0 %v2045
    %2480 = vmatprep.subr.bf16.mxu0 %v2050
    %2481 = vmatpush1.bf16.msra.mxu0 %v2049
    %2482 = vmatprep.subr.bf16.mxu0 %v2054
    %2483 = vmatpush1.bf16.msra.mxu0 %v2053
    %2484 = vmatprep.subr.bf16.mxu0 %v2058
    %2485 = vmatpush1.bf16.msra.mxu0 %v2057
    %2486 = vmatprep.subr.bf16.mxu0 %v2062
    %2487 = vmatpush1.bf16.msra.mxu0 %v2061
    %2488 = vmatprep.subr.bf16.mxu0 0
    %2489 = vmatpush1.bf16.msra.mxu0 0
    %2490 = vmatprep.subr.bf16.mxu0 0
    %2491 = vmatpush1.bf16.msra.mxu0 0
    %2492 = vmatprep.subr.bf16.mxu0 0
    %2493 = vmatpush1.bf16.msra.mxu0 0
    %2494 = vmatprep.subr.bf16.mxu0 0
    %2495 = vmatpush1.bf16.msra.mxu0 0
    %2496 = vmatprep.subr.bf16.mxu0 0
    %2497 = vmatpush1.bf16.msra.mxu0 0
    %2498 = vmatprep.subr.bf16.mxu0 0
    %2499 = vmatpush1.bf16.msra.mxu0 0
    %2500 = vmatprep.subr.bf16.mxu0 0
    %2501 = vmatpush1.bf16.msra.mxu0 0
    %2502 = vmatprep.subr.bf16.mxu0 0
    %2503 = vmatpush1.bf16.msra.mxu0 0
    %2504 = vmatprep.mubr.bf16.mxu0 0
    %2505 = vmatmul.mubr.bf16.gmra.mrb[0].mxu0 %v2430
    %v2506 = vpop.f32.mrb[0].mxu0
    %v2507 = vadd.f32 0.0, %v2506
    %v2508 = vpop.f32.mrb[0].mxu0
    %v2509 = vadd.f32 0.0, %v2508
    %v2510 = vpop.f32.mrb[0].mxu0
    %v2511 = vpop.f32.mrb[0].mxu0
    %2512 = vdwg.mxu0
    %v2513 = vadd.f32 %v1803, %v2466
    %v2514 = vadd.f32 %v1805, %v2468
    %v2515 = vadd.f32 %v1876, %v2507
    %v2516 = vadd.f32 %v1878, %v2509
    %v2517 = vxor.u32 %v2513, 2147483648
    %v2518 = vxor.u32 %v2514, 2147483648
    %v2519 = vxor.u32 %v2515, 2147483648
    %v2520 = vmul.f32 %v2517, 1.442695
    %v2521 = vpow.pop %v2520
    %v2522 = vmul.f32 %v2518, 1.442695
    %v2523 = vpow.pop %v2522
    %v2524 = vmul.f32 %v2519, 1.442695
    %v2525 = vpow.pop %v2524
    %v2526 = vadd.f32 %v2521, 1.0
    %v2527 = vadd.f32 %v2523, 1.0
    %v2528 = vadd.f32 %v2525, 1.0
    %v2529 = vrcp.pop %v2526
    %v2530 = vmul.f32 1.0, %v2529
    %v2531 = vrcp.pop %v2527
    %v2532 = vmul.f32 1.0, %v2531
    %v2533 = vrcp.pop %v2528
    %v2534 = vmul.f32 1.0, %v2533
    %v2535 = vtanh.pop %v2516
    %v2536 = vmul.f32 %v2532, %v2426
    %v2537 = vmul.f32 %v2530, %v2535
    %v2538 = vadd.f32 %v2536, %v2537
    %v2539 = vtanh.pop %v2538
    %v2540 = vmul.f32 %v2534, %v2539
    %2541 = vst [vmem:[%s9 + $0x18] sm:$0xff] %v2540
    %v2542 = vpack.c.bf16 %v2540, %v2540
    %2543 = vmatprep.subr.bf16.mxu0 %v2032
    %2544 = vmatpush1.bf16.msra.mxu0 %v2031
    %2545 = vmatprep.subr.bf16.mxu0 %v2036
    %2546 = vmatpush1.bf16.msra.mxu0 %v2035
    %2547 = vmatprep.subr.bf16.mxu0 %v2040
    %2548 = vmatpush1.bf16.msra.mxu0 %v2039
    %2549 = vmatprep.subr.bf16.mxu0 %v2044
    %2550 = vmatpush1.bf16.msra.mxu0 %v2043
    %2551 = vmatprep.subr.bf16.mxu0 %v2048
    %2552 = vmatpush1.bf16.msra.mxu0 %v2047
    %2553 = vmatprep.subr.bf16.mxu0 %v2052
    %2554 = vmatpush1.bf16.msra.mxu0 %v2051
    %2555 = vmatprep.subr.bf16.mxu0 %v2056
    %2556 = vmatpush1.bf16.msra.mxu0 %v2055
    %2557 = vmatprep.subr.bf16.mxu0 %v2060
    %2558 = vmatpush1.bf16.msra.mxu0 %v2059
    %2559 = vmatprep.subr.bf16.mxu0 0
    %2560 = vmatpush1.bf16.msra.mxu0 0
    %2561 = vmatprep.subr.bf16.mxu0 0
    %2562 = vmatpush1.bf16.msra.mxu0 0
    %2563 = vmatprep.subr.bf16.mxu0 0
    %2564 = vmatpush1.bf16.msra.mxu0 0
    %2565 = vmatprep.subr.bf16.mxu0 0
    %2566 = vmatpush1.bf16.msra.mxu0 0
    %2567 = vmatprep.subr.bf16.mxu0 0
    %2568 = vmatpush1.bf16.msra.mxu0 0
    %2569 = vmatprep.subr.bf16.mxu0 0
    %2570 = vmatpush1.bf16.msra.mxu0 0
    %2571 = vmatprep.subr.bf16.mxu0 0
    %2572 = vmatpush1.bf16.msra.mxu0 0
    %2573 = vmatprep.subr.bf16.mxu0 0
    %2574 = vmatpush1.bf16.msra.mxu0 0
    %2575 = vmatprep.mubr.bf16.mxu0 0
    %2576 = vmatmul.mubr.bf16.gmra.mrb[0].mxu0 %v2542
    %v2577 = vpop.f32.mrb[0].mxu0
    %v2578 = vadd.f32 0.0, %v2577
    %v2579 = vpop.f32.mrb[0].mxu0
    %v2580 = vadd.f32 0.0, %v2579
    %v2581 = vpop.f32.mrb[0].mxu0
    %v2582 = vpop.f32.mrb[0].mxu0
    %2583 = vdwg.mxu0
    %2584 = vmatprep.subr.bf16.mxu0 %v2034
    %2585 = vmatpush1.bf16.msra.mxu0 %v2033
    %2586 = vmatprep.subr.bf16.mxu0 %v2038
    %2587 = vmatpush1.bf16.msra.mxu0 %v2037
    %2588 = vmatprep.subr.bf16.mxu0 %v2042
    %2589 = vmatpush1.bf16.msra.mxu0 %v2041
    %2590 = vmatprep.subr.bf16.mxu0 %v2046
    %2591 = vmatpush1.bf16.msra.mxu0 %v2045
    %2592 = vmatprep.subr.bf16.mxu0 %v2050
    %2593 = vmatpush1.bf16.msra.mxu0 %v2049
    %2594 = vmatprep.subr.bf16.mxu0 %v2054
    %2595 = vmatpush1.bf16.msra.mxu0 %v2053
    %2596 = vmatprep.subr.bf16.mxu0 %v2058
    %2597 = vmatpush1.bf16.msra.mxu0 %v2057
    %2598 = vmatprep.subr.bf16.mxu0 %v2062
    %2599 = vmatpush1.bf16.msra.mxu0 %v2061
    %2600 = vmatprep.subr.bf16.mxu0 0
    %2601 = vmatpush1.bf16.msra.mxu0 0
    %2602 = vmatprep.subr.bf16.mxu0 0
    %2603 = vmatpush1.bf16.msra.mxu0 0
    %2604 = vmatprep.subr.bf16.mxu0 0
    %2605 = vmatpush1.bf16.msra.mxu0 0
    %2606 = vmatprep.subr.bf16.mxu0 0
    %2607 = vmatpush1.bf16.msra.mxu0 0
    %2608 = vmatprep.subr.bf16.mxu0 0
    %2609 = vmatpush1.bf16.msra.mxu0 0
    %2610 = vmatprep.subr.bf16.mxu0 0
    %2611 = vmatpush1.bf16.msra.mxu0 0
    %2612 = vmatprep.subr.bf16.mxu0 0
    %2613 = vmatpush1.bf16.msra.mxu0 0
    %2614 = vmatprep.subr.bf16.mxu0 0
    %2615 = vmatpush1.bf16.msra.mxu0 0
    %2616 = vmatprep.mubr.bf16.mxu0 0
    %2617 = vmatmul.mubr.bf16.gmra.mrb[0].mxu0 %v2542
    %v2618 = vpop.f32.mrb[0].mxu0
    %v2619 = vadd.f32 0.0, %v2618
    %v2620 = vpop.f32.mrb[0].mxu0
    %v2621 = vadd.f32 0.0, %v2620
    %v2622 = vpop.f32.mrb[0].mxu0
    %v2623 = vpop.f32.mrb[0].mxu0
    %2624 = vdwg.mxu0
    %v2625 = vadd.f32 %v1809, %v2578
    %v2626 = vadd.f32 %v1811, %v2580
    %v2627 = vadd.f32 %v1882, %v2619
    %v2628 = vadd.f32 %v1884, %v2621
    %v2629 = vxor.u32 %v2625, 2147483648
    %v2630 = vxor.u32 %v2626, 2147483648
    %v2631 = vxor.u32 %v2627, 2147483648
    %v2632 = vmul.f32 %v2629, 1.442695
    %v2633 = vpow.pop %v2632
    %v2634 = vmul.f32 %v2630, 1.442695
    %v2635 = vpow.pop %v2634
    %v2636 = vmul.f32 %v2631, 1.442695
    %v2637 = vpow.pop %v2636
    %v2638 = vadd.f32 %v2633, 1.0
    %v2639 = vadd.f32 %v2635, 1.0
    %v2640 = vadd.f32 %v2637, 1.0
    %v2641 = vrcp.pop %v2638
    %v2642 = vmul.f32 1.0, %v2641
    %v2643 = vrcp.pop %v2639
    %v2644 = vmul.f32 1.0, %v2643
    %v2645 = vrcp.pop %v2640
    %v2646 = vmul.f32 1.0, %v2645
    %v2647 = vtanh.pop %v2628
    %v2648 = vmul.f32 %v2644, %v2538
    %v2649 = vmul.f32 %v2642, %v2647
    %v2650 = vadd.f32 %v2648, %v2649
    %v2651 = vtanh.pop %v2650
    %v2652 = vmul.f32 %v2646, %v2651
    %2653 = vst [vmem:[%s9 + $0x20] sm:$0xff] %v2652
    %v2654 = vpack.c.bf16 %v2652, %v2652
    %2655 = vmatprep.subr.bf16.mxu0 %v2032
    %2656 = vmatpush1.bf16.msra.mxu0 %v2031
    %2657 = vmatprep.subr.bf16.mxu0 %v2036
    %2658 = vmatpush1.bf16.msra.mxu0 %v2035
    %2659 = vmatprep.subr.bf16.mxu0 %v2040
    %2660 = vmatpush1.bf16.msra.mxu0 %v2039
    %2661 = vmatprep.subr.bf16.mxu0 %v2044
    %2662 = vmatpush1.bf16.msra.mxu0 %v2043
    %2663 = vmatprep.subr.bf16.mxu0 %v2048
    %2664 = vmatpush1.bf16.msra.mxu0 %v2047
    %2665 = vmatprep.subr.bf16.mxu0 %v2052
    %2666 = vmatpush1.bf16.msra.mxu0 %v2051
    %2667 = vmatprep.subr.bf16.mxu0 %v2056
    %2668 = vmatpush1.bf16.msra.mxu0 %v2055
    %2669 = vmatprep.subr.bf16.mxu0 %v2060
    %2670 = vmatpush1.bf16.msra.mxu0 %v2059
    %2671 = vmatprep.subr.bf16.mxu0 0
    %2672 = vmatpush1.bf16.msra.mxu0 0
    %2673 = vmatprep.subr.bf16.mxu0 0
    %2674 = vmatpush1.bf16.msra.mxu0 0
    %2675 = vmatprep.subr.bf16.mxu0 0
    %2676 = vmatpush1.bf16.msra.mxu0 0
    %2677 = vmatprep.subr.bf16.mxu0 0
    %2678 = vmatpush1.bf16.msra.mxu0 0
    %2679 = vmatprep.subr.bf16.mxu0 0
    %2680 = vmatpush1.bf16.msra.mxu0 0
    %2681 = vmatprep.subr.bf16.mxu0 0
    %2682 = vmatpush1.bf16.msra.mxu0 0
    %2683 = vmatprep.subr.bf16.mxu0 0
    %2684 = vmatpush1.bf16.msra.mxu0 0
    %2685 = vmatprep.subr.bf16.mxu0 0
    %2686 = vmatpush1.bf16.msra.mxu0 0
    %2687 = vmatprep.mubr.bf16.mxu0 0
    %2688 = vmatmul.mubr.bf16.gmra.mrb[0].mxu0 %v2654
    %v2689 = vpop.f32.mrb[0].mxu0
    %v2690 = vadd.f32 0.0, %v2689
    %v2691 = vpop.f32.mrb[0].mxu0
    %v2692 = vadd.f32 0.0, %v2691
    %v2693 = vpop.f32.mrb[0].mxu0
    %v2694 = vpop.f32.mrb[0].mxu0
    %2695 = vdwg.mxu0
    %2696 = vmatprep.subr.bf16.mxu0 %v2034
    %2697 = vmatpush1.bf16.msra.mxu0 %v2033
    %2698 = vmatprep.subr.bf16.mxu0 %v2038
    %2699 = vmatpush1.bf16.msra.mxu0 %v2037
    %2700 = vmatprep.subr.bf16.mxu0 %v2042
    %2701 = vmatpush1.bf16.msra.mxu0 %v2041
    %2702 = vmatprep.subr.bf16.mxu0 %v2046
    %2703 = vmatpush1.bf16.msra.mxu0 %v2045
    %2704 = vmatprep.subr.bf16.mxu0 %v2050
    %2705 = vmatpush1.bf16.msra.mxu0 %v2049
    %2706 = vmatprep.subr.bf16.mxu0 %v2054
    %2707 = vmatpush1.bf16.msra.mxu0 %v2053
    %2708 = vmatprep.subr.bf16.mxu0 %v2058
    %2709 = vmatpush1.bf16.msra.mxu0 %v2057
    %2710 = vmatprep.subr.bf16.mxu0 %v2062
    %2711 = vmatpush1.bf16.msra.mxu0 %v2061
    %2712 = vmatprep.subr.bf16.mxu0 0
    %2713 = vmatpush1.bf16.msra.mxu0 0
    %2714 = vmatprep.subr.bf16.mxu0 0
    %2715 = vmatpush1.bf16.msra.mxu0 0
    %2716 = vmatprep.subr.bf16.mxu0 0
    %2717 = vmatpush1.bf16.msra.mxu0 0
    %2718 = vmatprep.subr.bf16.mxu0 0
    %2719 = vmatpush1.bf16.msra.mxu0 0
    %2720 = vmatprep.subr.bf16.mxu0 0
    %2721 = vmatpush1.bf16.msra.mxu0 0
    %2722 = vmatprep.subr.bf16.mxu0 0
    %2723 = vmatpush1.bf16.msra.mxu0 0
    %2724 = vmatprep.subr.bf16.mxu0 0
    %2725 = vmatpush1.bf16.msra.mxu0 0
    %2726 = vmatprep.subr.bf16.mxu0 0
    %2727 = vmatpush1.bf16.msra.mxu0 0
    %2728 = vmatprep.mubr.bf16.mxu0 0
    %2729 = vmatmul.mubr.bf16.gmra.mrb[0].mxu0 %v2654
    %v2730 = vpop.f32.mrb[0].mxu0
    %v2731 = vadd.f32 0.0, %v2730
    %v2732 = vpop.f32.mrb[0].mxu0
    %v2733 = vadd.f32 0.0, %v2732
    %v2734 = vpop.f32.mrb[0].mxu0
    %v2735 = vpop.f32.mrb[0].mxu0
    %2736 = vdwg.mxu0
    %v2737 = vadd.f32 %v1813, %v2690
    %v2738 = vadd.f32 %v1815, %v2692
    %v2739 = vadd.f32 %v1886, %v2731
    %v2740 = vadd.f32 %v1888, %v2733
    %v2741 = vxor.u32 %v2737, 2147483648
    %v2742 = vxor.u32 %v2738, 2147483648
    %v2743 = vxor.u32 %v2739, 2147483648
    %v2744 = vmul.f32 %v2741, 1.442695
    %v2745 = vpow.pop %v2744
    %v2746 = vmul.f32 %v2742, 1.442695
    %v2747 = vpow.pop %v2746
    %v2748 = vmul.f32 %v2743, 1.442695
    %v2749 = vpow.pop %v2748
    %v2750 = vadd.f32 %v2745, 1.0
    %v2751 = vadd.f32 %v2747, 1.0
    %v2752 = vadd.f32 %v2749, 1.0
    %v2753 = vrcp.pop %v2750
    %v2754 = vmul.f32 1.0, %v2753
    %v2755 = vrcp.pop %v2751
    %v2756 = vmul.f32 1.0, %v2755
    %v2757 = vrcp.pop %v2752
    %v2758 = vmul.f32 1.0, %v2757
    %v2759 = vtanh.pop %v2740
    %v2760 = vmul.f32 %v2756, %v2650
    %v2761 = vmul.f32 %v2754, %v2759
    %v2762 = vadd.f32 %v2760, %v2761
    %v2763 = vtanh.pop %v2762
    %v2764 = vmul.f32 %v2758, %v2763
    %2765 = vst [vmem:[%s9 + $0x28] sm:$0xff] %v2764
    %v2766 = vpack.c.bf16 %v2764, %v2764
    %2767 = vmatprep.subr.bf16.mxu0 %v2032
    %2768 = vmatpush1.bf16.msra.mxu0 %v2031
    %2769 = vmatprep.subr.bf16.mxu0 %v2036
    %2770 = vmatpush1.bf16.msra.mxu0 %v2035
    %2771 = vmatprep.subr.bf16.mxu0 %v2040
    %2772 = vmatpush1.bf16.msra.mxu0 %v2039
    %2773 = vmatprep.subr.bf16.mxu0 %v2044
    %2774 = vmatpush1.bf16.msra.mxu0 %v2043
    %2775 = vmatprep.subr.bf16.mxu0 %v2048
    %2776 = vmatpush1.bf16.msra.mxu0 %v2047
    %2777 = vmatprep.subr.bf16.mxu0 %v2052
    %2778 = vmatpush1.bf16.msra.mxu0 %v2051
    %2779 = vmatprep.subr.bf16.mxu0 %v2056
    %2780 = vmatpush1.bf16.msra.mxu0 %v2055
    %2781 = vmatprep.subr.bf16.mxu0 %v2060
    %2782 = vmatpush1.bf16.msra.mxu0 %v2059
    %2783 = vmatprep.subr.bf16.mxu0 0
    %2784 = vmatpush1.bf16.msra.mxu0 0
    %2785 = vmatprep.subr.bf16.mxu0 0
    %2786 = vmatpush1.bf16.msra.mxu0 0
    %2787 = vmatprep.subr.bf16.mxu0 0
    %2788 = vmatpush1.bf16.msra.mxu0 0
    %2789 = vmatprep.subr.bf16.mxu0 0
    %2790 = vmatpush1.bf16.msra.mxu0 0
    %2791 = vmatprep.subr.bf16.mxu0 0
    %2792 = vmatpush1.bf16.msra.mxu0 0
    %2793 = vmatprep.subr.bf16.mxu0 0
    %2794 = vmatpush1.bf16.msra.mxu0 0
    %2795 = vmatprep.subr.bf16.mxu0 0
    %2796 = vmatpush1.bf16.msra.mxu0 0
    %2797 = vmatprep.subr.bf16.mxu0 0
    %2798 = vmatpush1.bf16.msra.mxu0 0
    %2799 = vmatprep.mubr.bf16.mxu0 0
    %2800 = vmatmul.mubr.bf16.gmra.mrb[0].mxu0 %v2766
    %v2801 = vpop.f32.mrb[0].mxu0
    %v2802 = vadd.f32 0.0, %v2801
    %v2803 = vpop.f32.mrb[0].mxu0
    %v2804 = vadd.f32 0.0, %v2803
    %v2805 = vpop.f32.mrb[0].mxu0
    %v2806 = vpop.f32.mrb[0].mxu0
    %2807 = vdwg.mxu0
    %2808 = vmatprep.subr.bf16.mxu0 %v2034
    %2809 = vmatpush1.bf16.msra.mxu0 %v2033
    %2810 = vmatprep.subr.bf16.mxu0 %v2038
    %2811 = vmatpush1.bf16.msra.mxu0 %v2037
    %2812 = vmatprep.subr.bf16.mxu0 %v2042
    %2813 = vmatpush1.bf16.msra.mxu0 %v2041
    %2814 = vmatprep.subr.bf16.mxu0 %v2046
    %2815 = vmatpush1.bf16.msra.mxu0 %v2045
    %2816 = vmatprep.subr.bf16.mxu0 %v2050
    %2817 = vmatpush1.bf16.msra.mxu0 %v2049
    %2818 = vmatprep.subr.bf16.mxu0 %v2054
    %2819 = vmatpush1.bf16.msra.mxu0 %v2053
    %2820 = vmatprep.subr.bf16.mxu0 %v2058
    %2821 = vmatpush1.bf16.msra.mxu0 %v2057
    %2822 = vmatprep.subr.bf16.mxu0 %v2062
    %2823 = vmatpush1.bf16.msra.mxu0 %v2061
    %2824 = vmatprep.subr.bf16.mxu0 0
    %2825 = vmatpush1.bf16.msra.mxu0 0
    %2826 = vmatprep.subr.bf16.mxu0 0
    %2827 = vmatpush1.bf16.msra.mxu0 0
    %2828 = vmatprep.subr.bf16.mxu0 0
    %2829 = vmatpush1.bf16.msra.mxu0 0
    %2830 = vmatprep.subr.bf16.mxu0 0
    %2831 = vmatpush1.bf16.msra.mxu0 0
    %2832 = vmatprep.subr.bf16.mxu0 0
    %2833 = vmatpush1.bf16.msra.mxu0 0
    %2834 = vmatprep.subr.bf16.mxu0 0
    %2835 = vmatpush1.bf16.msra.mxu0 0
    %2836 = vmatprep.subr.bf16.mxu0 0
    %2837 = vmatpush1.bf16.msra.mxu0 0
    %2838 = vmatprep.subr.bf16.mxu0 0
    %2839 = vmatpush1.bf16.msra.mxu0 0
    %2840 = vmatprep.mubr.bf16.mxu0 0
    %2841 = vmatmul.mubr.bf16.gmra.mrb[0].mxu0 %v2766
    %v2842 = vpop.f32.mrb[0].mxu0
    %v2843 = vadd.f32 0.0, %v2842
    %v2844 = vpop.f32.mrb[0].mxu0
    %v2845 = vadd.f32 0.0, %v2844
    %v2846 = vpop.f32.mrb[0].mxu0
    %v2847 = vpop.f32.mrb[0].mxu0
    %2848 = vdwg.mxu0
    %v2849 = vadd.f32 %v1819, %v2802
    %v2850 = vadd.f32 %v1821, %v2804
    %v2851 = vadd.f32 %v1892, %v2843
    %v2852 = vadd.f32 %v1894, %v2845
    %v2853 = vxor.u32 %v2849, 2147483648
    %v2854 = vxor.u32 %v2850, 2147483648
    %v2855 = vxor.u32 %v2851, 2147483648
    %v2856 = vmul.f32 %v2853, 1.442695
    %v2857 = vpow.pop %v2856
    %v2858 = vmul.f32 %v2854, 1.442695
    %v2859 = vpow.pop %v2858
    %v2860 = vmul.f32 %v2855, 1.442695
    %v2861 = vpow.pop %v2860
    %v2862 = vadd.f32 %v2857, 1.0
    %v2863 = vadd.f32 %v2859, 1.0
    %v2864 = vadd.f32 %v2861, 1.0
    %v2865 = vrcp.pop %v2862
    %v2866 = vmul.f32 1.0, %v2865
    %v2867 = vrcp.pop %v2863
    %v2868 = vmul.f32 1.0, %v2867
    %v2869 = vrcp.pop %v2864
    %v2870 = vmul.f32 1.0, %v2869
    %v2871 = vtanh.pop %v2852
    %v2872 = vmul.f32 %v2868, %v2762
    %v2873 = vmul.f32 %v2866, %v2871
    %v2874 = vadd.f32 %v2872, %v2873
    %v2875 = vtanh.pop %v2874
    %v2876 = vmul.f32 %v2870, %v2875
    %2877 = vst [vmem:[%s9 + $0x30] sm:$0xff] %v2876
    %v2878 = vpack.c.bf16 %v2876, %v2876
    %2879 = vmatprep.subr.bf16.mxu0 %v2032
    %2880 = vmatpush1.bf16.msra.mxu0 %v2031
    %2881 = vmatprep.subr.bf16.mxu0 %v2036
    %2882 = vmatpush1.bf16.msra.mxu0 %v2035
    %2883 = vmatprep.subr.bf16.mxu0 %v2040
    %2884 = vmatpush1.bf16.msra.mxu0 %v2039
    %2885 = vmatprep.subr.bf16.mxu0 %v2044
    %2886 = vmatpush1.bf16.msra.mxu0 %v2043
    %2887 = vmatprep.subr.bf16.mxu0 %v2048
    %2888 = vmatpush1.bf16.msra.mxu0 %v2047
    %2889 = vmatprep.subr.bf16.mxu0 %v2052
    %2890 = vmatpush1.bf16.msra.mxu0 %v2051
    %2891 = vmatprep.subr.bf16.mxu0 %v2056
    %2892 = vmatpush1.bf16.msra.mxu0 %v2055
    %2893 = vmatprep.subr.bf16.mxu0 %v2060
    %2894 = vmatpush1.bf16.msra.mxu0 %v2059
    %2895 = vmatprep.subr.bf16.mxu0 0
    %2896 = vmatpush1.bf16.msra.mxu0 0
    %2897 = vmatprep.subr.bf16.mxu0 0
    %2898 = vmatpush1.bf16.msra.mxu0 0
    %2899 = vmatprep.subr.bf16.mxu0 0
    %2900 = vmatpush1.bf16.msra.mxu0 0
    %2901 = vmatprep.subr.bf16.mxu0 0
    %2902 = vmatpush1.bf16.msra.mxu0 0
    %2903 = vmatprep.subr.bf16.mxu0 0
    %2904 = vmatpush1.bf16.msra.mxu0 0
    %2905 = vmatprep.subr.bf16.mxu0 0
    %2906 = vmatpush1.bf16.msra.mxu0 0
    %2907 = vmatprep.subr.bf16.mxu0 0
    %2908 = vmatpush1.bf16.msra.mxu0 0
    %2909 = vmatprep.subr.bf16.mxu0 0
    %2910 = vmatpush1.bf16.msra.mxu0 0
    %2911 = vmatprep.mubr.bf16.mxu0 0
    %2912 = vmatmul.mubr.bf16.gmra.mrb[0].mxu0 %v2878
    %v2913 = vpop.f32.mrb[0].mxu0
    %v2914 = vadd.f32 0.0, %v2913
    %v2915 = vpop.f32.mrb[0].mxu0
    %v2916 = vadd.f32 0.0, %v2915
    %v2917 = vpop.f32.mrb[0].mxu0
    %v2918 = vpop.f32.mrb[0].mxu0
    %2919 = vdwg.mxu0
    %2920 = vmatprep.subr.bf16.mxu0 %v2034
    %2921 = vmatpush1.bf16.msra.mxu0 %v2033
    %2922 = vmatprep.subr.bf16.mxu0 %v2038
    %2923 = vmatpush1.bf16.msra.mxu0 %v2037
    %2924 = vmatprep.subr.bf16.mxu0 %v2042
    %2925 = vmatpush1.bf16.msra.mxu0 %v2041
    %2926 = vmatprep.subr.bf16.mxu0 %v2046
    %2927 = vmatpush1.bf16.msra.mxu0 %v2045
    %2928 = vmatprep.subr.bf16.mxu0 %v2050
    %2929 = vmatpush1.bf16.msra.mxu0 %v2049
    %2930 = vmatprep.subr.bf16.mxu0 %v2054
    %2931 = vmatpush1.bf16.msra.mxu0 %v2053
    %2932 = vmatprep.subr.bf16.mxu0 %v2058
    %2933 = vmatpush1.bf16.msra.mxu0 %v2057
    %2934 = vmatprep.subr.bf16.mxu0 %v2062
    %2935 = vmatpush1.bf16.msra.mxu0 %v2061
    %2936 = vmatprep.subr.bf16.mxu0 0
    %2937 = vmatpush1.bf16.msra.mxu0 0
    %2938 = vmatprep.subr.bf16.mxu0 0
    %2939 = vmatpush1.bf16.msra.mxu0 0
    %2940 = vmatprep.subr.bf16.mxu0 0
    %2941 = vmatpush1.bf16.msra.mxu0 0
    %2942 = vmatprep.subr.bf16.mxu0 0
    %2943 = vmatpush1.bf16.msra.mxu0 0
    %2944 = vmatprep.subr.bf16.mxu0 0
    %2945 = vmatpush1.bf16.msra.mxu0 0
    %2946 = vmatprep.subr.bf16.mxu0 0
    %2947 = vmatpush1.bf16.msra.mxu0 0
    %2948 = vmatprep.subr.bf16.mxu0 0
    %2949 = vmatpush1.bf16.msra.mxu0 0
    %2950 = vmatprep.subr.bf16.mxu0 0
    %2951 = vmatpush1.bf16.msra.mxu0 0
    %2952 = vmatprep.mubr.bf16.mxu0 0
    %2953 = vmatmul.mubr.bf16.gmra.mrb[0].mxu0 %v2878
    %v2954 = vpop.f32.mrb[0].mxu0
    %v2955 = vadd.f32 0.0, %v2954
    %v2956 = vpop.f32.mrb[0].mxu0
    %v2957 = vadd.f32 0.0, %v2956
    %v2958 = vpop.f32.mrb[0].mxu0
    %v2959 = vpop.f32.mrb[0].mxu0
    %2960 = vdwg.mxu0
    %v2961 = vadd.f32 %v1823, %v2914
    %v2962 = vadd.f32 %v1825, %v2916
    %v2963 = vadd.f32 %v1896, %v2955
    %v2964 = vadd.f32 %v1898, %v2957
    %v2965 = vxor.u32 %v2961, 2147483648
    %v2966 = vxor.u32 %v2962, 2147483648
    %v2967 = vxor.u32 %v2963, 2147483648
    %v2968 = vmul.f32 %v2965, 1.442695
    %v2969 = vpow.pop %v2968
    %v2970 = vmul.f32 %v2966, 1.442695
    %v2971 = vpow.pop %v2970
    %v2972 = vmul.f32 %v2967, 1.442695
    %v2973 = vpow.pop %v2972
    %v2974 = vadd.f32 %v2969, 1.0
    %v2975 = vadd.f32 %v2971, 1.0
    %v2976 = vadd.f32 %v2973, 1.0
    %v2977 = vrcp.pop %v2974
    %v2978 = vmul.f32 1.0, %v2977
    %v2979 = vrcp.pop %v2975
    %v2980 = vmul.f32 1.0, %v2979
    %v2981 = vrcp.pop %v2976
    %v2982 = vmul.f32 1.0, %v2981
    %v2983 = vtanh.pop %v2964
    %v2984 = vmul.f32 %v2980, %v2874
    %v2985 = vmul.f32 %v2978, %v2983
    %v2986 = vadd.f32 %v2984, %v2985
    %v2987 = vtanh.pop %v2986
    %v2988 = vmul.f32 %v2982, %v2987
    %2989 = vst [vmem:[%s9 + $0x38] sm:$0xff] %v2988
    %2990 = vst [vmem:[#allocation4] sm:$0xff] %v2988
    %2991 = vst [vmem:[#allocation5] sm:$0xff] %v2986
    // Predicated region
    $region46: #{text_generation_forward.3} parent=1 // pred_check
      %p2992 = pneg %p50
    $region47: #{text_generation_forward.3} parent=1 // pred_check_branch
      %2994 = sbr.rel (%p2992) target = $region49
    $region48: #{text_generation_forward.3} parent=1 // pred_region
      %2995 = vst [vmem:[%s10] sm:$0xff] %v1524
      %s2996 = scalar_lea.vmem %s10, 8
      %2997 = vst [vmem:[%s2996] sm:$0xff] %v2988
      %2998 = vst [vmem:[%s11] sm:$0xff] %v1522
      %s2999 = scalar_lea.vmem %s11, 8
      %3000 = vst [vmem:[%s2999] sm:$0xff] %v2986
    $region49: #{text_generation_forward.3} parent=1 // pred_fallthru
      _
    // Predicated region
    $region50: #{text_generation_forward.3} parent=1 // pred_check
      _
    $region51: #{text_generation_forward.3} parent=1 // pred_check_branch
      %3002 = sbr.rel (0) target = $region53
    $region52: #{text_generation_forward.3} parent=1 // pred_region
      _
    $region53: #{text_generation_forward.3} parent=1 // pred_fallthru
      _
    // Predicated region
    $region54: #{text_generation_forward.3} parent=1 // pred_check
      _
    $region55: #{text_generation_forward.3} parent=1 // pred_check_branch
      %3004 = sbr.rel (0) target = $region57
    $region56: #{text_generation_forward.3} parent=1 // pred_region
      _
    $region57: #{text_generation_forward.3} parent=1 // pred_fallthru
      _
    // Predicated region
    $region58: #{text_generation_forward.3} parent=1 // pred_check
      _
    $region59: #{text_generation_forward.3} parent=1 // pred_check_branch
      %3006 = sbr.rel (0) target = $region61
    $region60: #{text_generation_forward.3} parent=1 // pred_region
      _
    $region61: #{text_generation_forward.3} parent=1 // pred_fallthru
      _
    // Predicated region
    $region62: #{text_generation_forward.3} parent=1 // pred_check
      _
    $region63: #{text_generation_forward.3} parent=1 // pred_check_branch
      %3008 = sbr.rel (0) target = $region65
    $region64: #{text_generation_forward.3} parent=1 // pred_region
      _
    $region65: #{text_generation_forward.3} parent=1 // pred_fallthru
      _
    // Predicated region
    $region66: #{text_generation_forward.3} parent=1 // pred_check
      _
    $region67: #{text_generation_forward.3} parent=1 // pred_check_branch
      %3010 = sbr.rel (0) target = $region69
    $region68: #{text_generation_forward.3} parent=1 // pred_region
      _
    $region69: #{text_generation_forward.3} parent=1 // pred_fallthru
      _
    // Predicated region
    $region70: #{text_generation_forward.3} parent=1 // pred_check
      _
    $region71: #{text_generation_forward.3} parent=1 // pred_check_branch
      %3012 = sbr.rel (0) target = $region73
    $region72: #{text_generation_forward.3} parent=1 // pred_region
      _
    $region73: #{text_generation_forward.3} parent=1 // pred_fallthru
      _
    %3013 = vsyncpa [#allocation8], 1

</llo_original>
